<compile_context>
chip_gen: v7x
topology: tpu7x:2x2x1
jax: 0.10.0
libtpu: 0.0.40
codegen_flags: <defaults>
</compile_context>

<pallas_src>
import jax
import jax.numpy as jnp
from jax.experimental import pallas as pl
from jax.experimental.pallas import tpu as pltpu


# Which 3x3 taps (ky or kx in {0,1,2}) collapse onto which 2x2 tap (r in {0,1})
# for a given output phase (a or b in {0,1}).
_TAPS = {(0, 0): (0,), (0, 1): (1, 2), (1, 0): (0, 1), (1, 1): (2,)}


# ----------------------------- Pallas kernels -------------------------------


def _upsample_conv_kernel(xm_ref, xt_ref, xb_ref, w_ref, b_ref, out_ref,
                          xwin_ref, lhs_ref):
    """Row-tile of upsample(2x nearest) + conv3x3(pad=1), padding folded in.

    xm_ref  : (1, T, W, Cin)        main rows [t*T, (t+1)*T) of x (unpadded)
    xt_ref  : (1, 1, W, Cin)        row t*T - 1 (clamped; zero-masked at t==0)
    xb_ref  : (1, 1, W, Cin)        row (t+1)*T (clamped; zero-masked at last)
    w_ref   : (2, 6*Cin, 2*Cout)    per-row-phase folded weights
    b_ref   : (1, 2*Cout)           bias duplicated per column phase (f32)
    out_ref : (1, T, 2, W, 2*Cout)  interleaved output block
    xwin_ref: (T+2, W+2, Cin)       VMEM scratch: zero-padded window
    lhs_ref : (T, W, 9*Cin)         VMEM scratch: 3x3 shifted-window slabs
    """
    T = out_ref.shape[1]
    W = out_ref.shape[3]
    cin = xm_ref.shape[3]
    co2 = w_ref.shape[2]            # 2 * Cout

    t = pl.program_id(1)
    last = pl.num_programs(1) - 1

    # --- assemble the zero-padded (T+2, W+2, Cin) window in VMEM ------------
    top = xt_ref[0]                 # (1, W, Cin)
    bot = xb_ref[0]
    zrow = jnp.zeros_like(top)
    xwin_ref[0:1, 1:W + 1, :] = jnp.where(t == 0, zrow, top)
    xwin_ref[1:T + 1, 1:W + 1, :] = xm_ref[0]
    xwin_ref[T + 1:T + 2, 1:W + 1, :] = jnp.where(t == last, zrow, bot)
    zcol = jnp.zeros((T + 2, 1, cin), xwin_ref.dtype)
    xwin_ref[:, 0:1, :] = zcol
    xwin_ref[:, W + 1:W + 2, :] = zcol

    # --- pack the 9 shifted windows once; row phases share 3 of them --------
    for ryg in range(3):            # row tap (x_pad row offset)
        for rc in range(3):         # column tap (x_pad col offset)
            k = ryg * 3 + rc
            lhs_ref[:, :, k * cin:(k + 1) * cin] = (
                xwin_ref[ryg:ryg + T, rc:rc + W, :])

    bias = b_ref[...]               # (1, 2*Cout) f32, hoisted out of the loop

    # --- one wide MXU matmul per output-row phase (K=6*Cin, N=2*Cout) -------
    for a in range(2):
        lhs = lhs_ref[:, :, a * 3 * cin:(a + 2) * 3 * cin].reshape(
            T * W, 6 * cin)
        y = jnp.dot(lhs, w_ref[a], preferred_element_type=jnp.float32) + bias
        # Full-lane (2*Cout-wide) store of the whole slab for this row phase.
        out_ref[0, :, a, :, :] = y.reshape(T, W, co2).astype(out_ref.dtype)


def _upsample_copy_kernel(x_ref, out_ref):
    """Row-tile of nearest 2x upsample (no conv), written interleaved.

    x_ref  : (1, T, W, C)
    out_ref: (1, T, 2, W, 2*C)
    """
    xb = x_ref[0]                                              # (T, W, C)
    slab = jnp.concatenate([xb, xb], axis=-1).astype(out_ref.dtype)  # (T,W,2C)
    out_ref[0, :, 0, :, :] = slab                              # full-lane vst
    out_ref[0, :, 1, :, :] = slab


# ------------------------------ glue helpers --------------------------------


def _build_effective_weights(w_oihw, dtype):
    """Fold torch (O, I, 3, 3) weights into per-row-phase merged weights.

    Returns (2, 6*Cin, 2*Cout).  K-axis ordering: local row tap ry in {0,1}
    (major), column tap rc in {0,1,2}, then Cin — matching the lane slices the
    kernel takes out of its (T, W, 9*Cin) slab scratch.  N-axis: column phase
    b in {0,1} times Cout.  Entry (ry, rc) contributes W_eff[a, b, ry, rc-b]
    to phase b iff rc-b in {0,1}, else 0.
    """
    w_hwio = jnp.transpose(w_oihw, (2, 3, 1, 0))   # (3, 3, Cin, Cout)
    ci, co = w_hwio.shape[2], w_hwio.shape[3]

    def fold(a, b, ry, rx):
        acc = jnp.zeros((ci, co), w_hwio.dtype)
        for ky in _TAPS[(a, ry)]:
            for kx in _TAPS[(b, rx)]:
                acc = acc + w_hwio[ky, kx]
        return acc

    slabs = []
    for a in range(2):
        k_rows = []
        for ry in range(2):
            for rc in range(3):
                cols = []
                for b in range(2):
                    rx = rc - b
                    if 0 <= rx <= 1:
                        cols.append(fold(a, b, ry, rx))
                    else:
                        cols.append(jnp.zeros((ci, co), w_hwio.dtype))
                k_rows.append(jnp.concatenate(cols, axis=1))   # (Cin, 2*Cout)
        slabs.append(jnp.concatenate(k_rows, axis=0))          # (6Cin, 2Cout)
    return jnp.stack(slabs).astype(dtype)                      # (2, 6Cin, 2Cout)


def _vmem_capacity_bytes():
    """Per-core VMEM capacity (64 MiB on v7x, 128 MiB on v5e/v6e)."""
    try:
        return int(pltpu.get_tpu_info().vmem_capacity_bytes)
    except Exception:
        return 64 * 1024 * 1024    # conservative (v7x-sized) fallback


def _choose_tile_h(N, H, W, cin, cout, itemsize, with_conv, budget_bytes):
    """Largest divisor of H whose per-step VMEM footprint fits the budget.

    Prefers >= 2 total grid steps so both v7x TensorCores get grid work.
    """
    def footprint(T):
        if with_conv:
            in_blk = 2 * (T * W * cin + 2 * W * cin) * itemsize      # 2x buf
            out_blk = 2 * (T * 2 * W * 2 * cout) * itemsize          # 2x buf
            w_b = 2 * (2 * 6 * cin * 2 * cout) * itemsize + 2 * 2 * cout * 4
            scr = ((T + 2) * (W + 2) * cin + T * W * 9 * cin) * itemsize
            f32_tmp = 2 * T * W * 2 * cout * 4
            return in_blk + out_blk + w_b + scr + f32_tmp
        in_blk = 2 * T * W * cin * itemsize
        out_blk = 2 * T * 2 * W * 2 * cin * itemsize
        return in_blk + out_blk

    fitting = [d for d in range(1, H + 1)
               if H % d == 0 and footprint(d) <= budget_bytes]
    if not fitting:
        return 1
    best = max(fitting)
    if N * (H // best) < 2:                        # keep both v7x TCs busy
        multi = [d for d in fitting if N * (H // d) >= 2]
        if multi:
            best = max(multi)
    return best


# ------------------------------ public wrapper -------------------------------


def upsample_pallas(x_nchw, conv_weight=None, conv_bias=None, *, with_conv=True):
    """Equivalent of Upsample(in_channels, with_conv).forward, NCHW in / out."""
    N, C, H, W = x_nchw.shape
    x = jnp.transpose(x_nchw, (0, 2, 3, 1))        # NHWC, keep native dtype
    itemsize = jnp.dtype(x.dtype).itemsize

    vmem_cap = _vmem_capacity_bytes()
    budget = int(0.40 * vmem_cap)                  # tile-chooser budget
    cparams = pltpu.CompilerParams(
        dimension_semantics=("parallel", "parallel"),
        vmem_limit_bytes=int(0.70 * vmem_cap))

    if with_conv:
        cout = conv_weight.shape[0]
        tile_h = _choose_tile_h(N, H, W, C, cout, itemsize, True, budget)
        n_tiles = H // tile_h
        weff = _build_effective_weights(conv_weight, x.dtype)   # (2,6C,2Cout)
        bias2 = jnp.concatenate([conv_bias, conv_bias]).astype(jnp.float32)
        bias2 = bias2.reshape(1, 2 * cout)

        out = pl.pallas_call(
            _upsample_conv_kernel,
            out_shape=jax.ShapeDtypeStruct((N, H, 2, W, 2 * cout), x.dtype),
            grid=(N, n_tiles),
            in_specs=[
                # main rows [t*T, (t+1)*T) of the (unpadded) image
                pl.BlockSpec((1, tile_h, W, C), lambda n, t: (n, t, 0, 0)),
                # top halo row t*T - 1 (clamped; zero-masked in-kernel at t==0)
                pl.BlockSpec(
                    (1, 1, W, C),
                    lambda n, t: (n, jnp.maximum(t * tile_h - 1, 0), 0, 0)),
                # bottom halo row (t+1)*T (clamped; zero-masked on last tile)
                pl.BlockSpec(
                    (1, 1, W, C),
                    lambda n, t: (n, jnp.minimum((t + 1) * tile_h, H - 1), 0, 0)),
                # constant folded weights + bias (index_map constant)
                pl.BlockSpec((2, 6 * C, 2 * cout), lambda n, t: (0, 0, 0)),
                pl.BlockSpec((1, 2 * cout), lambda n, t: (0, 0)),
            ],
            out_specs=pl.BlockSpec((1, tile_h, 2, W, 2 * cout),
                                   lambda n, t: (n, t, 0, 0, 0)),
            scratch_shapes=[
                pltpu.VMEM((tile_h + 2, W + 2, C), x.dtype),
                pltpu.VMEM((tile_h, W, 9 * C), x.dtype),
            ],
            compiler_params=cparams,
        )(x, x, x, weff, bias2)
        c_out = cout
    else:
        tile_h = _choose_tile_h(N, H, W, C, C, itemsize, False, budget)
        n_tiles = H // tile_h
        out = pl.pallas_call(
            _upsample_copy_kernel,
            out_shape=jax.ShapeDtypeStruct((N, H, 2, W, 2 * C), x.dtype),
            grid=(N, n_tiles),
            in_specs=[pl.BlockSpec((1, tile_h, W, C),
                                   lambda n, t: (n, t, 0, 0))],
            out_specs=pl.BlockSpec((1, tile_h, 2, W, 2 * C),
                                   lambda n, t: (n, t, 0, 0, 0)),
            compiler_params=cparams,
        )(x)
        c_out = C

    # (N, H, 2, W, 2*Cout) row-major IS (N, 2H, 2W, Cout): free reshape.
    y_nhwc = out.reshape(N, 2 * H, 2 * W, c_out)
    return jnp.transpose(y_nhwc, (0, 3, 1, 2))     # back to NCHW


# ------------------------------ pure-JAX reference ---------------------------


def upsample_reference(x_nchw, conv_weight=None, conv_bias=None, *, with_conv=True):
    xu = jnp.repeat(jnp.repeat(x_nchw, 2, axis=2), 2, axis=3)
    if not with_conv:
        return xu
    out = jax.lax.conv_general_dilated(
        xu, conv_weight, window_strides=(1, 1), padding=((1, 1), (1, 1)),
        dimension_numbers=("NCHW", "OIHW", "NCHW"))
    return out + conv_bias[None, :, None, None]


# ----------------------------------- main ------------------------------------


if __name__ == "__main__":
    key = jax.random.PRNGKey(0)
    N, C, H, W = 2, 4, 16, 16
    k_x, k_w, k_b = jax.random.split(key, 3)

    x = jax.random.normal(k_x, (N, C, H, W), jnp.float32)

    # Deterministic synthetic parameters (torch-default-style uniform init).
    fan_in = C * 3 * 3
    bound = 1.0 / (fan_in ** 0.5)
    conv_w = jax.random.uniform(k_w, (C, C, 3, 3), jnp.float32, -bound, bound)
    conv_b = jax.random.uniform(k_b, (C,), jnp.float32, -bound, bound)

    # with_conv=True path
    y = jax.block_until_ready(upsample_pallas(x, conv_w, conv_b, with_conv=True))
    y_ref = upsample_reference(x, conv_w, conv_b, with_conv=True)
    assert y.shape == (N, C, 2 * H, 2 * W)
    assert jnp.allclose(y, y_ref, atol=1e-4, rtol=1e-4)

    # with_conv=False path
    y2 = jax.block_until_ready(upsample_pallas(x, with_conv=False))
    y2_ref = upsample_reference(x, with_conv=False)
    assert y2.shape == (N, C, 2 * H, 2 * W)
    assert jnp.allclose(y2, y2_ref)

    print("KERNEL_OK")
</pallas_src>

<mosaic_0001>
module attributes {stable_mosaic.version = 11 : i64} {
  func.func @_upsample_conv_kernel(%arg0: i32, %arg1: i32, %arg2: memref<1x16x16x4xf32, #tpu.memory_space<vmem>>, %arg3: memref<1x1x16x4xf32, #tpu.memory_space<vmem>>, %arg4: memref<1x1x16x4xf32, #tpu.memory_space<vmem>>, %arg5: memref<2x24x8xf32, #tpu.memory_space<vmem>>, %arg6: memref<1x8xf32, #tpu.memory_space<vmem>>, %arg7: memref<1x16x2x16x8xf32, #tpu.memory_space<vmem>>, %arg8: memref<18x18x4xf32, #tpu.memory_space<vmem>>, %arg9: memref<16x16x36xf32, #tpu.memory_space<vmem>>) attributes {dimension_semantics = [#tpu.dimension_semantics<parallel>, #tpu.dimension_semantics<parallel>], iteration_bounds = array<i64: 2, 1>, scalar_prefetch = 0 : i64, scratch_operands = 2 : i64, tpu.core_type = #tpu.core_type<tc>, window_params = [{transform_indices = @transform_0, window_bounds = array<i64: 1, 16, 16, 4>}, {transform_indices = @transform_1, window_bounds = array<i64: 1, 1, 16, 4>}, {transform_indices = @transform_2, window_bounds = array<i64: 1, 1, 16, 4>}, {pipeline_mode = #tpu.pipeline_mode<synchronous>, transform_indices = @transform_3, window_bounds = array<i64: 2, 24, 8>}, {pipeline_mode = #tpu.pipeline_mode<synchronous>, transform_indices = @transform_4, window_bounds = array<i64: 1, 8>}, {transform_indices = @transform_5, window_bounds = array<i64: 1, 16, 2, 16, 8>}]} {
    %c0 = arith.constant 0 : index
    %c0_0 = arith.constant 0 : index
    %c0_1 = arith.constant 0 : index
    %c0_2 = arith.constant 0 : index
    %0 = vector.load %arg3[%c0, %c0_0, %c0_1, %c0_2] : memref<1x1x16x4xf32, #tpu.memory_space<vmem>>, vector<1x1x16x4xf32>
    %1 = vector.shape_cast %0 : vector<1x1x16x4xf32> to vector<1x16x4xf32>
    %c0_3 = arith.constant 0 : index
    %c0_4 = arith.constant 0 : index
    %c0_5 = arith.constant 0 : index
    %c0_6 = arith.constant 0 : index
    %2 = vector.load %arg4[%c0_3, %c0_4, %c0_5, %c0_6] : memref<1x1x16x4xf32, #tpu.memory_space<vmem>>, vector<1x1x16x4xf32>
    %3 = vector.shape_cast %2 : vector<1x1x16x4xf32> to vector<1x16x4xf32>
    %cst = arith.constant 0.000000e+00 : f32
    %4 = vector.broadcast %cst : f32 to vector<1x16x4xf32>
    %c0_i32 = arith.constant 0 : i32
    %5 = arith.cmpi eq, %arg1, %c0_i32 : i32
    %6 = arith.select %5, %4, %1 : vector<1x16x4xf32>
    %c0_7 = arith.constant 0 : index
    %c1 = arith.constant 1 : index
    %c0_8 = arith.constant 0 : index
    %7 = vector.load %arg8[%c0_7, %c1, %c0_8] : memref<18x18x4xf32, #tpu.memory_space<vmem>>, vector<1x16x4xf32>
    tpu.vector_store %arg8[%c0_7, %c1, %c0_8], %6 {strides = array<i32>} : memref<18x18x4xf32, #tpu.memory_space<vmem>>, vector<1x16x4xf32>,
    %c0_9 = arith.constant 0 : index
    %c0_10 = arith.constant 0 : index
    %c0_11 = arith.constant 0 : index
    %c0_12 = arith.constant 0 : index
    %8 = vector.load %arg2[%c0_9, %c0_10, %c0_11, %c0_12] : memref<1x16x16x4xf32, #tpu.memory_space<vmem>>, vector<1x16x16x4xf32>
    %9 = vector.shape_cast %8 : vector<1x16x16x4xf32> to vector<16x16x4xf32>
    %c1_13 = arith.constant 1 : index
    %c1_14 = arith.constant 1 : index
    %c0_15 = arith.constant 0 : index
    %10 = vector.load %arg8[%c1_13, %c1_14, %c0_15] : memref<18x18x4xf32, #tpu.memory_space<vmem>>, vector<16x16x4xf32>
    tpu.vector_store %arg8[%c1_13, %c1_14, %c0_15], %9 {strides = array<i32>} : memref<18x18x4xf32, #tpu.memory_space<vmem>>, vector<16x16x4xf32>,
    %c0_i32_16 = arith.constant 0 : i32
    %11 = arith.cmpi eq, %arg1, %c0_i32_16 : i32
    %12 = arith.select %11, %4, %3 : vector<1x16x4xf32>
    %c17 = arith.constant 17 : index
    %c1_17 = arith.constant 1 : index
    %c0_18 = arith.constant 0 : index
    %13 = vector.load %arg8[%c17, %c1_17, %c0_18] : memref<18x18x4xf32, #tpu.memory_space<vmem>>, vector<1x16x4xf32>
    tpu.vector_store %arg8[%c17, %c1_17, %c0_18], %12 {strides = array<i32>} : memref<18x18x4xf32, #tpu.memory_space<vmem>>, vector<1x16x4xf32>,
    %cst_19 = arith.constant 0.000000e+00 : f32
    %14 = vector.broadcast %cst_19 : f32 to vector<18x1x4xf32>
    %c0_20 = arith.constant 0 : index
    %c0_21 = arith.constant 0 : index
    %c0_22 = arith.constant 0 : index
    %15 = vector.load %arg8[%c0_20, %c0_21, %c0_22] : memref<18x18x4xf32, #tpu.memory_space<vmem>>, vector<18x1x4xf32>
    tpu.vector_store %arg8[%c0_20, %c0_21, %c0_22], %14 {strides = array<i32>} : memref<18x18x4xf32, #tpu.memory_space<vmem>>, vector<18x1x4xf32>,
    %c0_23 = arith.constant 0 : index
    %c17_24 = arith.constant 17 : index
    %c0_25 = arith.constant 0 : index
    %16 = vector.load %arg8[%c0_23, %c17_24, %c0_25] : memref<18x18x4xf32, #tpu.memory_space<vmem>>, vector<18x1x4xf32>
    tpu.vector_store %arg8[%c0_23, %c17_24, %c0_25], %14 {strides = array<i32>} : memref<18x18x4xf32, #tpu.memory_space<vmem>>, vector<18x1x4xf32>,
    %c0_26 = arith.constant 0 : index
    %c0_27 = arith.constant 0 : index
    %c0_28 = arith.constant 0 : index
    %17 = vector.load %arg8[%c0_26, %c0_27, %c0_28] : memref<18x18x4xf32, #tpu.memory_space<vmem>>, vector<16x16x4xf32>
    %c0_29 = arith.constant 0 : index
    %c0_30 = arith.constant 0 : index
    %c0_31 = arith.constant 0 : index
    %18 = vector.load %arg9[%c0_29, %c0_30, %c0_31] : memref<16x16x36xf32, #tpu.memory_space<vmem>>, vector<16x16x4xf32>
    tpu.vector_store %arg9[%c0_29, %c0_30, %c0_31], %17 {strides = array<i32>} : memref<16x16x36xf32, #tpu.memory_space<vmem>>, vector<16x16x4xf32>,
    %c0_32 = arith.constant 0 : index
    %c1_33 = arith.constant 1 : index
    %c0_34 = arith.constant 0 : index
    %19 = vector.load %arg8[%c0_32, %c1_33, %c0_34] : memref<18x18x4xf32, #tpu.memory_space<vmem>>, vector<16x16x4xf32>
    %c0_35 = arith.constant 0 : index
    %c0_36 = arith.constant 0 : index
    %c4 = arith.constant 4 : index
    %20 = vector.load %arg9[%c0_35, %c0_36, %c4] : memref<16x16x36xf32, #tpu.memory_space<vmem>>, vector<16x16x4xf32>
    tpu.vector_store %arg9[%c0_35, %c0_36, %c4], %19 {strides = array<i32>} : memref<16x16x36xf32, #tpu.memory_space<vmem>>, vector<16x16x4xf32>,
    %c0_37 = arith.constant 0 : index
    %c2 = arith.constant 2 : index
    %c0_38 = arith.constant 0 : index
    %21 = vector.load %arg8[%c0_37, %c2, %c0_38] : memref<18x18x4xf32, #tpu.memory_space<vmem>>, vector<16x16x4xf32>
    %c0_39 = arith.constant 0 : index
    %c0_40 = arith.constant 0 : index
    %c8 = arith.constant 8 : index
    %22 = vector.load %arg9[%c0_39, %c0_40, %c8] : memref<16x16x36xf32, #tpu.memory_space<vmem>>, vector<16x16x4xf32>
    tpu.vector_store %arg9[%c0_39, %c0_40, %c8], %21 {strides = array<i32>} : memref<16x16x36xf32, #tpu.memory_space<vmem>>, vector<16x16x4xf32>,
    %c1_41 = arith.constant 1 : index
    %c0_42 = arith.constant 0 : index
    %c0_43 = arith.constant 0 : index
    %23 = vector.load %arg8[%c1_41, %c0_42, %c0_43] : memref<18x18x4xf32, #tpu.memory_space<vmem>>, vector<16x16x4xf32>
    %c0_44 = arith.constant 0 : index
    %c0_45 = arith.constant 0 : index
    %c12 = arith.constant 12 : index
    %24 = vector.load %arg9[%c0_44, %c0_45, %c12] : memref<16x16x36xf32, #tpu.memory_space<vmem>>, vector<16x16x4xf32>
    tpu.vector_store %arg9[%c0_44, %c0_45, %c12], %23 {strides = array<i32>} : memref<16x16x36xf32, #tpu.memory_space<vmem>>, vector<16x16x4xf32>,
    %c1_46 = arith.constant 1 : index
    %c1_47 = arith.constant 1 : index
    %c0_48 = arith.constant 0 : index
    %25 = vector.load %arg8[%c1_46, %c1_47, %c0_48] : memref<18x18x4xf32, #tpu.memory_space<vmem>>, vector<16x16x4xf32>
    %c0_49 = arith.constant 0 : index
    %c0_50 = arith.constant 0 : index
    %c16 = arith.constant 16 : index
    %26 = vector.load %arg9[%c0_49, %c0_50, %c16] : memref<16x16x36xf32, #tpu.memory_space<vmem>>, vector<16x16x4xf32>
    tpu.vector_store %arg9[%c0_49, %c0_50, %c16], %25 {strides = array<i32>} : memref<16x16x36xf32, #tpu.memory_space<vmem>>, vector<16x16x4xf32>,
    %c1_51 = arith.constant 1 : index
    %c2_52 = arith.constant 2 : index
    %c0_53 = arith.constant 0 : index
    %27 = vector.load %arg8[%c1_51, %c2_52, %c0_53] : memref<18x18x4xf32, #tpu.memory_space<vmem>>, vector<16x16x4xf32>
    %c0_54 = arith.constant 0 : index
    %c0_55 = arith.constant 0 : index
    %c20 = arith.constant 20 : index
    %28 = vector.load %arg9[%c0_54, %c0_55, %c20] : memref<16x16x36xf32, #tpu.memory_space<vmem>>, vector<16x16x4xf32>
    tpu.vector_store %arg9[%c0_54, %c0_55, %c20], %27 {strides = array<i32>} : memref<16x16x36xf32, #tpu.memory_space<vmem>>, vector<16x16x4xf32>,
    %c2_56 = arith.constant 2 : index
    %c0_57 = arith.constant 0 : index
    %c0_58 = arith.constant 0 : index
    %29 = vector.load %arg8[%c2_56, %c0_57, %c0_58] : memref<18x18x4xf32, #tpu.memory_space<vmem>>, vector<16x16x4xf32>
    %c0_59 = arith.constant 0 : index
    %c0_60 = arith.constant 0 : index
    %c24 = arith.constant 24 : index
    %30 = vector.load %arg9[%c0_59, %c0_60, %c24] : memref<16x16x36xf32, #tpu.memory_space<vmem>>, vector<16x16x4xf32>
    tpu.vector_store %arg9[%c0_59, %c0_60, %c24], %29 {strides = array<i32>} : memref<16x16x36xf32, #tpu.memory_space<vmem>>, vector<16x16x4xf32>,
    %c2_61 = arith.constant 2 : index
    %c1_62 = arith.constant 1 : index
    %c0_63 = arith.constant 0 : index
    %31 = vector.load %arg8[%c2_61, %c1_62, %c0_63] : memref<18x18x4xf32, #tpu.memory_space<vmem>>, vector<16x16x4xf32>
    %c0_64 = arith.constant 0 : index
    %c0_65 = arith.constant 0 : index
    %c28 = arith.constant 28 : index
    %32 = vector.load %arg9[%c0_64, %c0_65, %c28] : memref<16x16x36xf32, #tpu.memory_space<vmem>>, vector<16x16x4xf32>
    tpu.vector_store %arg9[%c0_64, %c0_65, %c28], %31 {strides = array<i32>} : memref<16x16x36xf32, #tpu.memory_space<vmem>>, vector<16x16x4xf32>,
    %c2_66 = arith.constant 2 : index
    %c2_67 = arith.constant 2 : index
    %c0_68 = arith.constant 0 : index
    %33 = vector.load %arg8[%c2_66, %c2_67, %c0_68] : memref<18x18x4xf32, #tpu.memory_space<vmem>>, vector<16x16x4xf32>
    %c0_69 = arith.constant 0 : index
    %c0_70 = arith.constant 0 : index
    %c32 = arith.constant 32 : index
    %34 = vector.load %arg9[%c0_69, %c0_70, %c32] : memref<16x16x36xf32, #tpu.memory_space<vmem>>, vector<16x16x4xf32>
    tpu.vector_store %arg9[%c0_69, %c0_70, %c32], %33 {strides = array<i32>} : memref<16x16x36xf32, #tpu.memory_space<vmem>>, vector<16x16x4xf32>,
    %c0_71 = arith.constant 0 : index
    %c0_72 = arith.constant 0 : index
    %35 = vector.load %arg6[%c0_71, %c0_72] : memref<1x8xf32, #tpu.memory_space<vmem>>, vector<1x8xf32>
    %c0_73 = arith.constant 0 : index
    %c0_74 = arith.constant 0 : index
    %c0_75 = arith.constant 0 : index
    %36 = vector.load %arg9[%c0_73, %c0_74, %c0_75] : memref<16x16x36xf32, #tpu.memory_space<vmem>>, vector<16x16x24xf32>
    %37 = vector.shape_cast %36 : vector<16x16x24xf32> to vector<256x24xf32>
    %c0_76 = arith.constant 0 : index
    %c0_77 = arith.constant 0 : index
    %c0_78 = arith.constant 0 : index
    %38 = vector.load %arg5[%c0_76, %c0_77, %c0_78] : memref<2x24x8xf32, #tpu.memory_space<vmem>>, vector<1x24x8xf32>
    %39 = vector.shape_cast %38 : vector<1x24x8xf32> to vector<24x8xf32>
    %cst_79 = arith.constant dense<0.000000e+00> : vector<256x8xf32>
    %40 = tpu.matmul %37, %39, %cst_79 {dimension_numbers = #tpu.dot_dimension_numbers<[1], [0], [0], [1], [0, 0, 1, 1], [], []>} : vector<256x24xf32>, vector<24x8xf32>, vector<256x8xf32> -> vector<256x8xf32>
    %41 = vector.broadcast %35 : vector<1x8xf32> to vector<256x8xf32>
    %42 = arith.addf %40, %41 : vector<256x8xf32>
    %43 = vector.shape_cast %42 : vector<256x8xf32> to vector<16x16x8xf32>
    %c0_80 = arith.constant 0 : index
    %c0_81 = arith.constant 0 : index
    %c0_82 = arith.constant 0 : index
    %c0_83 = arith.constant 0 : index
    %c0_84 = arith.constant 0 : index
    %44 = vector.load %arg7[%c0_80, %c0_81, %c0_82, %c0_83, %c0_84] : memref<1x16x2x16x8xf32, #tpu.memory_space<vmem>>, vector<1x16x1x16x8xf32>
    %45 = vector.shape_cast %44 : vector<1x16x1x16x8xf32> to vector<16x16x8xf32>
    %46 = vector.shape_cast %43 : vector<16x16x8xf32> to vector<1x16x1x16x8xf32>
    tpu.vector_store %arg7[%c0_80, %c0_81, %c0_82, %c0_83, %c0_84], %46 {strides = array<i32>} : memref<1x16x2x16x8xf32, #tpu.memory_space<vmem>>, vector<1x16x1x16x8xf32>,
    %c0_85 = arith.constant 0 : index
    %c0_86 = arith.constant 0 : index
    %c12_87 = arith.constant 12 : index
    %47 = vector.load %arg9[%c0_85, %c0_86, %c12_87] : memref<16x16x36xf32, #tpu.memory_space<vmem>>, vector<16x16x24xf32>
    %48 = vector.shape_cast %47 : vector<16x16x24xf32> to vector<256x24xf32>
    %c1_88 = arith.constant 1 : index
    %c0_89 = arith.constant 0 : index
    %c0_90 = arith.constant 0 : index
    %49 = vector.load %arg5[%c1_88, %c0_89, %c0_90] : memref<2x24x8xf32, #tpu.memory_space<vmem>>, vector<1x24x8xf32>
    %50 = vector.shape_cast %49 : vector<1x24x8xf32> to vector<24x8xf32>
    %cst_91 = arith.constant dense<0.000000e+00> : vector<256x8xf32>
    %51 = tpu.matmul %48, %50, %cst_91 {dimension_numbers = #tpu.dot_dimension_numbers<[1], [0], [0], [1], [0, 0, 1, 1], [], []>} : vector<256x24xf32>, vector<24x8xf32>, vector<256x8xf32> -> vector<256x8xf32>
    %52 = vector.broadcast %35 : vector<1x8xf32> to vector<256x8xf32>
    %53 = arith.addf %51, %52 : vector<256x8xf32>
    %54 = vector.shape_cast %53 : vector<256x8xf32> to vector<16x16x8xf32>
    %c0_92 = arith.constant 0 : index
    %c0_93 = arith.constant 0 : index
    %c1_94 = arith.constant 1 : index
    %c0_95 = arith.constant 0 : index
    %c0_96 = arith.constant 0 : index
    %55 = vector.load %arg7[%c0_92, %c0_93, %c1_94, %c0_95, %c0_96] : memref<1x16x2x16x8xf32, #tpu.memory_space<vmem>>, vector<1x16x1x16x8xf32>
    %56 = vector.shape_cast %55 : vector<1x16x1x16x8xf32> to vector<16x16x8xf32>
    %57 = vector.shape_cast %54 : vector<16x16x8xf32> to vector<1x16x1x16x8xf32>
    tpu.vector_store %arg7[%c0_92, %c0_93, %c1_94, %c0_95, %c0_96], %57 {strides = array<i32>} : memref<1x16x2x16x8xf32, #tpu.memory_space<vmem>>, vector<1x16x1x16x8xf32>,
    return
  }
  func.func @transform_0(%arg0: i32, %arg1: i32) -> (i32, i32, i32, i32) {
    %c0_i32 = arith.constant 0 : i32
    %c0_i32_0 = arith.constant 0 : i32
    %c0_i32_1 = arith.constant 0 : i32
    return %arg0, %arg1, %c0_i32, %c0_i32_0 : i32, i32, i32, i32
  }
  func.func @transform_1(%arg0: i32, %arg1: i32) -> (i32, i32, i32, i32) {
    %c16_i32 = arith.constant 16 : i32
    %0 = arith.muli %arg1, %c16_i32 : i32
    %c1_i32 = arith.constant 1 : i32
    %1 = arith.subi %0, %c1_i32 : i32
    %c0_i32 = arith.constant 0 : i32
    %2 = arith.maxsi %1, %c0_i32 : i32
    %c0_i32_0 = arith.constant 0 : i32
    %c0_i32_1 = arith.constant 0 : i32
    %c0_i32_2 = arith.constant 0 : i32
    return %arg0, %2, %c0_i32_0, %c0_i32_1 : i32, i32, i32, i32
  }
  func.func @transform_2(%arg0: i32, %arg1: i32) -> (i32, i32, i32, i32) {
    %c1_i32 = arith.constant 1 : i32
    %0 = arith.addi %arg1, %c1_i32 : i32
    %c16_i32 = arith.constant 16 : i32
    %1 = arith.muli %0, %c16_i32 : i32
    %c15_i32 = arith.constant 15 : i32
    %2 = arith.minsi %1, %c15_i32 : i32
    %c0_i32 = arith.constant 0 : i32
    %c0_i32_0 = arith.constant 0 : i32
    %c0_i32_1 = arith.constant 0 : i32
    return %arg0, %2, %c0_i32, %c0_i32_0 : i32, i32, i32, i32
  }
  func.func @transform_3(%arg0: i32, %arg1: i32) -> (i32, i32, i32) {
    %c0_i32 = arith.constant 0 : i32
    %c0_i32_0 = arith.constant 0 : i32
    %c0_i32_1 = arith.constant 0 : i32
    %c0_i32_2 = arith.constant 0 : i32
    return %c0_i32, %c0_i32_0, %c0_i32_1 : i32, i32, i32
  }
  func.func @transform_4(%arg0: i32, %arg1: i32) -> (i32, i32) {
    %c0_i32 = arith.constant 0 : i32
    %c0_i32_0 = arith.constant 0 : i32
    %c0_i32_1 = arith.constant 0 : i32
    return %c0_i32, %c0_i32_0 : i32, i32
  }
  func.func @transform_5(%arg0: i32, %arg1: i32) -> (i32, i32, i32, i32, i32) {
    %c0_i32 = arith.constant 0 : i32
    %c0_i32_0 = arith.constant 0 : i32
    %c0_i32_1 = arith.constant 0 : i32
    %c0_i32_2 = arith.constant 0 : i32
    return %arg0, %arg1, %c0_i32, %c0_i32_0, %c0_i32_1 : i32, i32, i32, i32, i32
  }
}

</mosaic_0001>

<llo_original>
// kernel: tpu_custom_call.1
$region0: #{tpu_custom_call.1}
  #allocation0 [shape = 'u32[]', space=smem, size = 0x4, offset = 0x4, fixed_abs, tag = 'smem constant byte address 0x4 - core index']
  #allocation1 [shape = 'u32[144,128]{1,0:T(1,128)}', space=vmem, size = 0x12000, scoped, tag = 'internal scratch']
  #allocation2 [shape = 'f32[18,18,4]{2,1,0:T(8,128)}', space=vmem, size = 0x36000, scoped, tag = 'scratch operand']
  #allocation3 [shape = 'f32[16,16,36]{2,1,0:T(8,128)}', space=vmem, size = 0x20000, scoped, tag = 'scratch operand']
  %s0 = inlined_call_operand.vmem [shape: f32[2,16,16,4], index: 0, kind: input, shape index: {}]
  %s1 = inlined_call_operand.vmem [shape: f32[2,16,16,4], index: 1, kind: input, shape index: {}]
  %s2 = inlined_call_operand.vmem [shape: f32[2,16,16,4], index: 2, kind: input, shape index: {}]
  %s3 = inlined_call_operand.vmem [shape: f32[2,24,8], index: 3, kind: input, shape index: {}]
  %s4 = inlined_call_operand.vmem [shape: f32[1,8], index: 4, kind: input, shape index: {}]
  %s5 = inlined_call_operand.vmem [shape: f32[2,16,2,16,8], index: 5, kind: output, shape index: {}]
  %s6 = sld [smem:[#allocation0]]
  $region53: #{tpu_custom_call.1} parent=0
    _
  %s8 = ssub.s32 1, %s6
  %s9 = scalar_select 0, %s8, %s6
  loop: start=0, step=1, limit=4
  $region2: #{tpu_custom_call.1} parent=0 // loop_pre_header
    _
  $region3: #{tpu_custom_call.1} parent=0 // loop_header
    %s11 = sphi 0, %s15
    %p12 = scmp.ge.s32.totalorder %s11, 4
    %s18 = sphi 0, %s30
    %s19 = sphi 0, %s26
    %s20 = sphi 0, %s18
    %s21 = sphi 0, %s19
    %s22 = sphi 0, %s20
    %s23 = sphi 0, %s21
    %s35 = sphi 0, %s37
    %s38 = sphi 0, %s35
    %s39 = sphi 0, %s38
    %s55 = sphi 0, %s39
    %s71 = sphi 0, %s73
    %s74 = sphi 0, %s71
    %s75 = sphi 0, %s74
    %s91 = sphi 0, %s75
    %s107 = sphi 0, %s109
    %s110 = sphi 0, %s107
    %s111 = sphi 0, %s110
    %s127 = sphi 0, %s111
    %s131 = sphi 0, %s131
    %s133 = sphi 0, %s131
    %s134 = sphi 0, %s133
    %s148 = sphi 0, %s134
    %s152 = sphi 0, %s152
    %s154 = sphi 0, %s152
    %s155 = sphi 0, %s154
    %s169 = sphi 0, %s155
    %s177 = sphi 0, %s179
    %s180 = sphi 0, %s177
    %s181 = sphi 0, %s180
    %s197 = sphi 0, %s181
  $region4: #{tpu_custom_call.1} parent=0 // loop_header_branch
    %14 = sbr.rel (%p12) target = $region8
  $region5: #{tpu_custom_call.1} parent=0 // loop_body
    %s16 = ssub.s32 %s11, 1
    %s17 = ssub.s32 %s11, 2
    %s24 = sadd.s32 1, %s19
    %p25 = scmp.ge.s32.totalorder %s24, 1
    %s26 = scalar_select %p25, 0, %s24
    %s27 = sadd.s32 1, %s18
    %s28 = scalar_select %p25, %s27, %s18
    %p29 = scmp.ge.s32.totalorder %s28, 2
    %s30 = scalar_select %p29, 0, %s28
    %s31 = ssub.s32 %s18, %s30
    %s32 = ssub.s32 %s19, %s26
    %s33 = sor.u32 %s31, %s32
    %p34 = scmp.eq.s32.totalorder %s33, 0
    %s36 = sadd.s32 %s35, 1
    %s37 = scalar_select %p34, %s35, %s36
    %p40 = pneg %p34
    %p41 = scmp.eq.s32.totalorder %s11, 1
    %p42 = por %p40, %p41
    %p43 = scmp.ne.s32.totalorder %s35, %s38
    %p44 = scmp.eq.s32.totalorder %s11, 0
    %p45 = por %p43, %p44
    %p46 = scmp.ne.s32.totalorder %s35, %s38
    %p47 = scmp.eq.s32.totalorder %s16, 1
    %p48 = por %p46, %p47
    %p49 = scmp.ne.s32.totalorder %s38, %s39
    %p50 = scmp.eq.s32.totalorder %s16, 0
    %p51 = por %p49, %p50
    %p52 = scmp.ne.s32.totalorder %s38, %s39
    %p53 = scmp.eq.s32.totalorder %s17, 1
    %p54 = por %p52, %p53
    %p56 = scmp.ne.s32.totalorder %s39, %s55
    %p57 = scmp.eq.s32.totalorder %s17, 0
    %p58 = por %p56, %p57
    %s59 = smul.u32 %s19, 16
    %s60 = ssub.s32 %s59, 1
    %p61 = scmp.gt.s32.totalorder %s60, 0
    %s62 = scalar_select %p61, %s60, 0
    %s63 = smul.u32 %s26, 16
    %s64 = ssub.s32 %s63, 1
    %p65 = scmp.gt.s32.totalorder %s64, 0
    %s66 = scalar_select %p65, %s64, 0
    %s67 = ssub.s32 %s18, %s30
    %s68 = ssub.s32 %s62, %s66
    %s69 = sor.u32 %s67, %s68
    %p70 = scmp.eq.s32.totalorder %s69, 0
    %s72 = sadd.s32 %s71, 1
    %s73 = scalar_select %p70, %s71, %s72
    %p76 = pneg %p70
    %p77 = scmp.eq.s32.totalorder %s11, 1
    %p78 = por %p76, %p77
    %p79 = scmp.ne.s32.totalorder %s71, %s74
    %p80 = scmp.eq.s32.totalorder %s11, 0
    %p81 = por %p79, %p80
    %p82 = scmp.ne.s32.totalorder %s71, %s74
    %p83 = scmp.eq.s32.totalorder %s16, 1
    %p84 = por %p82, %p83
    %p85 = scmp.ne.s32.totalorder %s74, %s75
    %p86 = scmp.eq.s32.totalorder %s16, 0
    %p87 = por %p85, %p86
    %p88 = scmp.ne.s32.totalorder %s74, %s75
    %p89 = scmp.eq.s32.totalorder %s17, 1
    %p90 = por %p88, %p89
    %p92 = scmp.ne.s32.totalorder %s75, %s91
    %p93 = scmp.eq.s32.totalorder %s17, 0
    %p94 = por %p92, %p93
    %s95 = sadd.s32 %s19, 1
    %s96 = smul.u32 %s95, 16
    %p97 = scmp.lt.s32.totalorder %s96, 15
    %s98 = scalar_select %p97, %s96, 15
    %s99 = sadd.s32 %s26, 1
    %s100 = smul.u32 %s99, 16
    %p101 = scmp.lt.s32.totalorder %s100, 15
    %s102 = scalar_select %p101, %s100, 15
    %s103 = ssub.s32 %s18, %s30
    %s104 = ssub.s32 %s98, %s102
    %s105 = sor.u32 %s103, %s104
    %p106 = scmp.eq.s32.totalorder %s105, 0
    %s108 = sadd.s32 %s107, 1
    %s109 = scalar_select %p106, %s107, %s108
    %p112 = pneg %p106
    %p113 = scmp.eq.s32.totalorder %s11, 1
    %p114 = por %p112, %p113
    %p115 = scmp.ne.s32.totalorder %s107, %s110
    %p116 = scmp.eq.s32.totalorder %s11, 0
    %p117 = por %p115, %p116
    %p118 = scmp.ne.s32.totalorder %s107, %s110
    %p119 = scmp.eq.s32.totalorder %s16, 1
    %p120 = por %p118, %p119
    %p121 = scmp.ne.s32.totalorder %s110, %s111
    %p122 = scmp.eq.s32.totalorder %s16, 0
    %p123 = por %p121, %p122
    %p124 = scmp.ne.s32.totalorder %s110, %s111
    %p125 = scmp.eq.s32.totalorder %s17, 1
    %p126 = por %p124, %p125
    %p128 = scmp.ne.s32.totalorder %s111, %s127
    %p129 = scmp.eq.s32.totalorder %s17, 0
    %p130 = por %p128, %p129
    %s132 = sadd.s32 %s131, 1
    %p135 = scmp.eq.s32.totalorder %s11, 1
    %p136 = scmp.ne.s32.totalorder %s131, %s133
    %p137 = scmp.eq.s32.totalorder %s11, 0
    %p138 = por %p136, %p137
    %p139 = scmp.ne.s32.totalorder %s131, %s133
    %p140 = scmp.eq.s32.totalorder %s16, 1
    %p141 = por %p139, %p140
    %p142 = scmp.ne.s32.totalorder %s133, %s134
    %p143 = scmp.eq.s32.totalorder %s16, 0
    %p144 = por %p142, %p143
    %p145 = scmp.ne.s32.totalorder %s133, %s134
    %p146 = scmp.eq.s32.totalorder %s17, 1
    %p147 = por %p145, %p146
    %p149 = scmp.ne.s32.totalorder %s134, %s148
    %p150 = scmp.eq.s32.totalorder %s17, 0
    %p151 = por %p149, %p150
    %s153 = sadd.s32 %s152, 1
    %p156 = scmp.eq.s32.totalorder %s11, 1
    %p157 = scmp.ne.s32.totalorder %s152, %s154
    %p158 = scmp.eq.s32.totalorder %s11, 0
    %p159 = por %p157, %p158
    %p160 = scmp.ne.s32.totalorder %s152, %s154
    %p161 = scmp.eq.s32.totalorder %s16, 1
    %p162 = por %p160, %p161
    %p163 = scmp.ne.s32.totalorder %s154, %s155
    %p164 = scmp.eq.s32.totalorder %s16, 0
    %p165 = por %p163, %p164
    %p166 = scmp.ne.s32.totalorder %s154, %s155
    %p167 = scmp.eq.s32.totalorder %s17, 1
    %p168 = por %p166, %p167
    %p170 = scmp.ne.s32.totalorder %s155, %s169
    %p171 = scmp.eq.s32.totalorder %s17, 0
    %p172 = por %p170, %p171
    %s173 = ssub.s32 %s18, %s30
    %s174 = ssub.s32 %s19, %s26
    %s175 = sor.u32 %s173, %s174
    %p176 = scmp.eq.s32.totalorder %s175, 0
    %s178 = sadd.s32 %s177, 1
    %s179 = scalar_select %p176, %s177, %s178
    %p182 = pneg %p176
    %p183 = scmp.eq.s32.totalorder %s11, 1
    %p184 = por %p182, %p183
    %p185 = scmp.ne.s32.totalorder %s177, %s180
    %p186 = scmp.eq.s32.totalorder %s11, 0
    %p187 = por %p185, %p186
    %p188 = scmp.ne.s32.totalorder %s177, %s180
    %p189 = scmp.eq.s32.totalorder %s16, 1
    %p190 = por %p188, %p189
    %p191 = scmp.ne.s32.totalorder %s180, %s181
    %p192 = scmp.eq.s32.totalorder %s16, 0
    %p193 = por %p191, %p192
    %p194 = scmp.ne.s32.totalorder %s180, %s181
    %p195 = scmp.eq.s32.totalorder %s17, 1
    %p196 = por %p194, %p195
    %p198 = scmp.ne.s32.totalorder %s181, %s197
    %p199 = scmp.eq.s32.totalorder %s17, 0
    %p200 = por %p198, %p199
    %p201 = scmp.le.s32.totalorder 1, %s11
    %p202 = scmp.lt.s32.totalorder %s11, 3
    %p203 = pnand %p201, %p202
    %p204 = pneg %p203
    // Predicated region
    $region9: #{tpu_custom_call.1} parent=5 // pred_check
      _
    $region10: #{tpu_custom_call.1} parent=5 // pred_check_branch
      %206 = sbr.rel (%p203) target = $region12
    $region11: #{tpu_custom_call.1} parent=5 // pred_region
      %s207 = ssub.s32 %s11, 1
      // Predicated region
      $region13: #{tpu_custom_call.1} parent=11 // pred_check
        %p208 = pneg %p144
      $region14: #{tpu_custom_call.1} parent=11 // pred_check_branch
        %210 = sbr.rel (%p208) target = $region16
      $region15: #{tpu_custom_call.1} parent=11 // pred_region
        _
      $region16: #{tpu_custom_call.1} parent=11 // pred_fallthru
        _
      // Predicated region
      $region17: #{tpu_custom_call.1} parent=11 // pred_check
        %p211 = pneg %p165
      $region18: #{tpu_custom_call.1} parent=11 // pred_check_branch
        %213 = sbr.rel (%p211) target = $region20
      $region19: #{tpu_custom_call.1} parent=11 // pred_region
        _
      $region20: #{tpu_custom_call.1} parent=11 // pred_fallthru
        _
    $region12: #{tpu_custom_call.1} parent=5 // pred_fallthru
      _
    %p214 = scmp.lt.s32.totalorder %s11, 2
    // Predicated region
    $region21: #{tpu_custom_call.1} parent=5 // pred_check
      %p215 = pneg %p214
    $region22: #{tpu_custom_call.1} parent=5 // pred_check_branch
      %217 = sbr.rel (%p215) target = $region24
    $region23: #{tpu_custom_call.1} parent=5 // pred_region
      // Predicated region
      $region25: #{tpu_custom_call.1} parent=23 // pred_check
        %p218 = pneg %p45
      $region26: #{tpu_custom_call.1} parent=23 // pred_check_branch
        %220 = sbr.rel (%p218) target = $region28
      $region27: #{tpu_custom_call.1} parent=23 // pred_region
        %s221 = smul.u32 16, %s19
        %p222 = scmp.lt.s32.totalorder %s18, 1
        %s223 = scalar_select %p222, %s18, 1
        %p224 = scmp.lt.s32.totalorder %s221, 15
        %s225 = scalar_select %p224, %s221, 15
        %s226 = smul.addr %s225, 2
        %s227 = smul.addr %s223, 32
        %s228 = sadd.s32 %s226, %s227
        %s229 = smul.addr %s228, 8
        %s230 = scalar_lea.vmem %s0, %s229
        %s231 = smul.u32 16, %s19
      $region28: #{tpu_custom_call.1} parent=23 // pred_fallthru
        _
      // Predicated region
      $region29: #{tpu_custom_call.1} parent=23 // pred_check
        %p232 = pneg %p81
      $region30: #{tpu_custom_call.1} parent=23 // pred_check_branch
        %234 = sbr.rel (%p232) target = $region32
      $region31: #{tpu_custom_call.1} parent=23 // pred_region
        %s235 = smul.u32 %s19, 16
        %s236 = ssub.s32 %s235, 1
        %p237 = scmp.gt.s32.totalorder %s236, 0
        %s238 = scalar_select %p237, %s236, 0
        %p239 = scmp.lt.s32.totalorder %s18, 1
        %s240 = scalar_select %p239, %s18, 1
        %p241 = scmp.lt.s32.totalorder %s238, 15
        %s242 = scalar_select %p241, %s238, 15
        %s243 = smul.addr %s242, 2
        %s244 = smul.addr %s240, 32
        %s245 = sadd.s32 %s243, %s244
        %s246 = smul.addr %s245, 8
        %s247 = scalar_lea.vmem %s1, %s246
        %s248 = smul.u32 %s19, 16
        %s249 = ssub.s32 %s248, 1
        %p250 = scmp.gt.s32.totalorder %s249, 0
        %s251 = scalar_select %p250, %s249, 0
      $region32: #{tpu_custom_call.1} parent=23 // pred_fallthru
        _
      // Predicated region
      $region33: #{tpu_custom_call.1} parent=23 // pred_check
        %p252 = pneg %p117
      $region34: #{tpu_custom_call.1} parent=23 // pred_check_branch
        %254 = sbr.rel (%p252) target = $region36
      $region35: #{tpu_custom_call.1} parent=23 // pred_region
        %s255 = sadd.s32 %s19, 1
        %s256 = smul.u32 %s255, 16
        %p257 = scmp.lt.s32.totalorder %s256, 15
        %s258 = scalar_select %p257, %s256, 15
        %p259 = scmp.lt.s32.totalorder %s18, 1
        %s260 = scalar_select %p259, %s18, 1
        %p261 = scmp.lt.s32.totalorder %s258, 15
        %s262 = scalar_select %p261, %s258, 15
        %s263 = smul.addr %s262, 2
        %s264 = smul.addr %s260, 32
        %s265 = sadd.s32 %s263, %s264
        %s266 = smul.addr %s265, 8
        %s267 = scalar_lea.vmem %s2, %s266
        %s268 = sadd.s32 %s19, 1
        %s269 = smul.u32 %s268, 16
        %p270 = scmp.lt.s32.totalorder %s269, 15
        %s271 = scalar_select %p270, %s269, 15
      $region36: #{tpu_custom_call.1} parent=23 // pred_fallthru
        _
    $region24: #{tpu_custom_call.1} parent=5 // pred_fallthru
      _
    %p272 = scmp.le.s32.totalorder 1, %s11
    %p273 = scmp.lt.s32.totalorder %s11, 3
    %p274 = pnand %p272, %p273
    %p275 = pneg %p274
    // Predicated region
    $region37: #{tpu_custom_call.1} parent=5 // pred_check
      _
    $region38: #{tpu_custom_call.1} parent=5 // pred_check_branch
      %277 = sbr.rel (%p274) target = $region40
    $region39: #{tpu_custom_call.1} parent=5 // pred_region
      %s278 = ssub.s32 %s11, 1
      %s279 = smul.u32 16, %s21
      %p280 = scmp.lt.s32.totalorder %s20, 1
      %s281 = scalar_select %p280, %s20, 1
      %p282 = scmp.lt.s32.totalorder %s279, 15
      %s283 = scalar_select %p282, %s279, 15
      %s284 = smul.addr %s283, 2
      %s285 = smul.addr %s281, 32
      %s286 = sadd.s32 %s284, %s285
      %s287 = smul.addr %s286, 8
      %s288 = scalar_lea.vmem %s0, %s287
      %p289 = pneg %p51
      %p290 = pneg %p48
      %s291 = smul.u32 %s21, 16
      %s292 = ssub.s32 %s291, 1
      %p293 = scmp.gt.s32.totalorder %s292, 0
      %s294 = scalar_select %p293, %s292, 0
      %p295 = scmp.lt.s32.totalorder %s20, 1
      %s296 = scalar_select %p295, %s20, 1
      %p297 = scmp.lt.s32.totalorder %s294, 15
      %s298 = scalar_select %p297, %s294, 15
      %s299 = smul.addr %s298, 2
      %s300 = smul.addr %s296, 32
      %s301 = sadd.s32 %s299, %s300
      %s302 = smul.addr %s301, 8
      %s303 = scalar_lea.vmem %s1, %s302
      %p304 = pneg %p87
      %p305 = pneg %p84
      %s306 = sadd.s32 %s21, 1
      %s307 = smul.u32 %s306, 16
      %p308 = scmp.lt.s32.totalorder %s307, 15
      %s309 = scalar_select %p308, %s307, 15
      %p310 = scmp.lt.s32.totalorder %s20, 1
      %s311 = scalar_select %p310, %s20, 1
      %p312 = scmp.lt.s32.totalorder %s309, 15
      %s313 = scalar_select %p312, %s309, 15
      %s314 = smul.addr %s313, 2
      %s315 = smul.addr %s311, 32
      %s316 = sadd.s32 %s314, %s315
      %s317 = smul.addr %s316, 8
      %s318 = scalar_lea.vmem %s2, %s317
      %p319 = pneg %p123
      %p320 = pneg %p120
      %p321 = pneg %p144
      %p322 = pneg %p141
      %p323 = pneg %p165
      %p324 = pneg %p162
      %p325 = pneg %p193
      %p326 = pneg %p190
      %s327 = smul.u32 16, %s21
      %p328 = scmp.lt.s32.totalorder %s20, 1
      %s329 = scalar_select %p328, %s20, 1
      %p330 = scmp.lt.s32.totalorder %s327, 15
      %s331 = scalar_select %p330, %s327, 15
      %s332 = smul.addr %s331, 4
      %s333 = smul.addr %s329, 64
      %s334 = sadd.s32 %s332, %s333
      %s335 = smul.addr %s334, 8
      %s336 = scalar_lea.vmem %s5, %s335
      %s337 = smul.u32 16, %s21
      %p338 = scmp.lt.s32.totalorder %s20, 1
      %s339 = scalar_select %p338, %s20, 1
      %p340 = scmp.lt.s32.totalorder %s337, 15
      %s341 = scalar_select %p340, %s337, 15
      %s342 = smul.addr %s341, 2
      %s343 = smul.addr %s339, 32
      %s344 = sadd.s32 %s342, %s343
      %s345 = smul.addr %s344, 8
      %s346 = scalar_lea.vmem %s0, %s345
      %s347 = smul.u32 16, %s21
      %s348 = smul.u32 %s21, 16
      %s349 = ssub.s32 %s348, 1
      %p350 = scmp.gt.s32.totalorder %s349, 0
      %s351 = scalar_select %p350, %s349, 0
      %p352 = scmp.lt.s32.totalorder %s20, 1
      %s353 = scalar_select %p352, %s20, 1
      %p354 = scmp.lt.s32.totalorder %s351, 15
      %s355 = scalar_select %p354, %s351, 15
      %s356 = smul.addr %s355, 2
      %s357 = smul.addr %s353, 32
      %s358 = sadd.s32 %s356, %s357
      %s359 = smul.addr %s358, 8
      %s360 = scalar_lea.vmem %s1, %s359
      %s361 = smul.u32 %s21, 16
      %s362 = ssub.s32 %s361, 1
      %p363 = scmp.gt.s32.totalorder %s362, 0
      %s364 = scalar_select %p363, %s362, 0
      %s365 = sadd.s32 %s21, 1
      %s366 = smul.u32 %s365, 16
      %p367 = scmp.lt.s32.totalorder %s366, 15
      %s368 = scalar_select %p367, %s366, 15
      %p369 = scmp.lt.s32.totalorder %s20, 1
      %s370 = scalar_select %p369, %s20, 1
      %p371 = scmp.lt.s32.totalorder %s368, 15
      %s372 = scalar_select %p371, %s368, 15
      %s373 = smul.addr %s372, 2
      %s374 = smul.addr %s370, 32
      %s375 = sadd.s32 %s373, %s374
      %s376 = smul.addr %s375, 8
      %s377 = scalar_lea.vmem %s2, %s376
      %s378 = sadd.s32 %s21, 1
      %s379 = smul.u32 %s378, 16
      %p380 = scmp.lt.s32.totalorder %s379, 15
      %s381 = scalar_select %p380, %s379, 15
      %s382 = smul.u32 16, %s21
      %p383 = scmp.lt.s32.totalorder %s20, 1
      %s384 = scalar_select %p383, %s20, 1
      %p385 = scmp.lt.s32.totalorder %s382, 15
      %s386 = scalar_select %p385, %s382, 15
      %s387 = smul.addr %s386, 4
      %s388 = smul.addr %s384, 64
      %s389 = sadd.s32 %s387, %s388
      %s390 = smul.addr %s389, 8
      %s391 = scalar_lea.vmem %s5, %s390
      %s392 = smul.u32 16, %s21
      %v393 = vld [vmem:[%s360] sm:$0xff]
      %v394 = vld [vmem:[%s360 + $0x8] sm:$0xff]
      %v395 = vld [vmem:[%s377] sm:$0xff]
      %v396 = vld [vmem:[%s377 + $0x8] sm:$0xff]
      %p397 = scmp.eq.s32.totalorder %s21, 0
      %s398 = scalar_select %p397, 1, 0
      %v399 = vstv %s398
      %vm400 = vcmp.eq.s32.totalorder %v399, 1
      %v401 = vsel %vm400, 0.0, %v393
      %v402 = vsel %vm400, 0.0, %v394
      %vm403 = vcmask 31744
      %404 = vst.msk [vmem:[#allocation2 + $0x1] sm:$0xff] %vm403, %v401
      %405 = vst.msk [vmem:[#allocation2 + $0x9] sm:$0xff] %vm403, %v402
      %v406 = vld [vmem:[%s346] sm:$0xff]
      %v407 = vld [vmem:[%s346 + $0x8] sm:$0xff]
      %v408 = vld [vmem:[%s346 + $0x10] sm:$0xff]
      %v409 = vld [vmem:[%s346 + $0x18] sm:$0xff]
      %v410 = vld [vmem:[%s346 + $0x20] sm:$0xff]
      %v411 = vld [vmem:[%s346 + $0x28] sm:$0xff]
      %v412 = vld [vmem:[%s346 + $0x30] sm:$0xff]
      %v413 = vld [vmem:[%s346 + $0x38] sm:$0xff]
      %v414 = vld [vmem:[%s346 + $0x40] sm:$0xff]
      %v415 = vld [vmem:[%s346 + $0x48] sm:$0xff]
      %v416 = vld [vmem:[%s346 + $0x50] sm:$0xff]
      %v417 = vld [vmem:[%s346 + $0x58] sm:$0xff]
      %v418 = vld [vmem:[%s346 + $0x60] sm:$0xff]
      %v419 = vld [vmem:[%s346 + $0x68] sm:$0xff]
      %v420 = vld [vmem:[%s346 + $0x70] sm:$0xff]
      %v421 = vld [vmem:[%s346 + $0x78] sm:$0xff]
      %v422 = vld [vmem:[%s346 + $0x80] sm:$0xff]
      %v423 = vld [vmem:[%s346 + $0x88] sm:$0xff]
      %v424 = vld [vmem:[%s346 + $0x90] sm:$0xff]
      %v425 = vld [vmem:[%s346 + $0x98] sm:$0xff]
      %v426 = vld [vmem:[%s346 + $0xa0] sm:$0xff]
      %v427 = vld [vmem:[%s346 + $0xa8] sm:$0xff]
      %v428 = vld [vmem:[%s346 + $0xb0] sm:$0xff]
      %v429 = vld [vmem:[%s346 + $0xb8] sm:$0xff]
      %v430 = vld [vmem:[%s346 + $0xc0] sm:$0xff]
      %v431 = vld [vmem:[%s346 + $0xc8] sm:$0xff]
      %v432 = vld [vmem:[%s346 + $0xd0] sm:$0xff]
      %v433 = vld [vmem:[%s346 + $0xd8] sm:$0xff]
      %v434 = vld [vmem:[%s346 + $0xe0] sm:$0xff]
      %v435 = vld [vmem:[%s346 + $0xe8] sm:$0xff]
      %v436 = vld [vmem:[%s346 + $0xf0] sm:$0xff]
      %v437 = vld [vmem:[%s346 + $0xf8] sm:$0xff]
      %s438 = scalar_lea.vmem [#allocation2], 24
      %439 = vst.msk [vmem:[%s438 + $0x1] sm:$0xff] %vm403, %v406
      %440 = vst.msk [vmem:[%s438 + $0x9] sm:$0xff] %vm403, %v407
      %441 = vst.msk [vmem:[%s438 + $0x19] sm:$0xff] %vm403, %v408
      %442 = vst.msk [vmem:[%s438 + $0x21] sm:$0xff] %vm403, %v409
      %443 = vst.msk [vmem:[%s438 + $0x31] sm:$0xff] %vm403, %v410
      %444 = vst.msk [vmem:[%s438 + $0x39] sm:$0xff] %vm403, %v411
      %445 = vst.msk [vmem:[%s438 + $0x49] sm:$0xff] %vm403, %v412
      %446 = vst.msk [vmem:[%s438 + $0x51] sm:$0xff] %vm403, %v413
      %447 = vst.msk [vmem:[%s438 + $0x61] sm:$0xff] %vm403, %v414
      %448 = vst.msk [vmem:[%s438 + $0x69] sm:$0xff] %vm403, %v415
      %449 = vst.msk [vmem:[%s438 + $0x79] sm:$0xff] %vm403, %v416
      %450 = vst.msk [vmem:[%s438 + $0x81] sm:$0xff] %vm403, %v417
      %451 = vst.msk [vmem:[%s438 + $0x91] sm:$0xff] %vm403, %v418
      %452 = vst.msk [vmem:[%s438 + $0x99] sm:$0xff] %vm403, %v419
      %453 = vst.msk [vmem:[%s438 + $0xa9] sm:$0xff] %vm403, %v420
      %454 = vst.msk [vmem:[%s438 + $0xb1] sm:$0xff] %vm403, %v421
      %455 = vst.msk [vmem:[%s438 + $0xc1] sm:$0xff] %vm403, %v422
      %456 = vst.msk [vmem:[%s438 + $0xc9] sm:$0xff] %vm403, %v423
      %457 = vst.msk [vmem:[%s438 + $0xd9] sm:$0xff] %vm403, %v424
      %458 = vst.msk [vmem:[%s438 + $0xe1] sm:$0xff] %vm403, %v425
      %459 = vst.msk [vmem:[%s438 + $0xf1] sm:$0xff] %vm403, %v426
      %460 = vst.msk [vmem:[%s438 + $0xf9] sm:$0xff] %vm403, %v427
      %461 = vst.msk [vmem:[%s438 + $0x109] sm:$0xff] %vm403, %v428
      %462 = vst.msk [vmem:[%s438 + $0x111] sm:$0xff] %vm403, %v429
      %463 = vst.msk [vmem:[%s438 + $0x121] sm:$0xff] %vm403, %v430
      %464 = vst.msk [vmem:[%s438 + $0x129] sm:$0xff] %vm403, %v431
      %465 = vst.msk [vmem:[%s438 + $0x139] sm:$0xff] %vm403, %v432
      %466 = vst.msk [vmem:[%s438 + $0x141] sm:$0xff] %vm403, %v433
      %467 = vst.msk [vmem:[%s438 + $0x151] sm:$0xff] %vm403, %v434
      %468 = vst.msk [vmem:[%s438 + $0x159] sm:$0xff] %vm403, %v435
      %469 = vst.msk [vmem:[%s438 + $0x169] sm:$0xff] %vm403, %v436
      %470 = vst.msk [vmem:[%s438 + $0x171] sm:$0xff] %vm403, %v437
      %v471 = vsel %vm400, 0.0, %v395
      %v472 = vsel %vm400, 0.0, %v396
      %s473 = scalar_lea.vmem [#allocation2], 408
      %474 = vst.msk [vmem:[%s473 + $0x1] sm:$0xff] %vm403, %v471
      %475 = vst.msk [vmem:[%s473 + $0x9] sm:$0xff] %vm403, %v472
      %vm476 = vcmask 24576
      %477 = vst.msk [vmem:[#allocation2] sm:$0x1] %vm476, 0.0
      %478 = vst.msk [vmem:[#allocation2 + $0x18] sm:$0x1] %vm476, 0.0
      %479 = vst.msk [vmem:[#allocation2 + $0x30] sm:$0x1] %vm476, 0.0
      %480 = vst.msk [vmem:[#allocation2 + $0x48] sm:$0x1] %vm476, 0.0
      %481 = vst.msk [vmem:[#allocation2 + $0x60] sm:$0x1] %vm476, 0.0
      %482 = vst.msk [vmem:[#allocation2 + $0x78] sm:$0x1] %vm476, 0.0
      %483 = vst.msk [vmem:[#allocation2 + $0x90] sm:$0x1] %vm476, 0.0
      %484 = vst.msk [vmem:[#allocation2 + $0xa8] sm:$0x1] %vm476, 0.0
      %485 = vst.msk [vmem:[#allocation2 + $0xc0] sm:$0x1] %vm476, 0.0
      %486 = vst.msk [vmem:[#allocation2 + $0xd8] sm:$0x1] %vm476, 0.0
      %487 = vst.msk [vmem:[#allocation2 + $0xf0] sm:$0x1] %vm476, 0.0
      %488 = vst.msk [vmem:[#allocation2 + $0x108] sm:$0x1] %vm476, 0.0
      %489 = vst.msk [vmem:[#allocation2 + $0x120] sm:$0x1] %vm476, 0.0
      %490 = vst.msk [vmem:[#allocation2 + $0x138] sm:$0x1] %vm476, 0.0
      %491 = vst.msk [vmem:[#allocation2 + $0x150] sm:$0x1] %vm476, 0.0
      %492 = vst.msk [vmem:[#allocation2 + $0x168] sm:$0x1] %vm476, 0.0
      %493 = vst.msk [vmem:[#allocation2 + $0x180] sm:$0x1] %vm476, 0.0
      %494 = vst.msk [vmem:[#allocation2 + $0x198] sm:$0x1] %vm476, 0.0
      %495 = vst.msk [vmem:[#allocation2 + $0x11] sm:$0x1] %vm476, 0.0
      %496 = vst.msk [vmem:[#allocation2 + $0x29] sm:$0x1] %vm476, 0.0
      %497 = vst.msk [vmem:[#allocation2 + $0x41] sm:$0x1] %vm476, 0.0
      %498 = vst.msk [vmem:[#allocation2 + $0x59] sm:$0x1] %vm476, 0.0
      %499 = vst.msk [vmem:[#allocation2 + $0x71] sm:$0x1] %vm476, 0.0
      %500 = vst.msk [vmem:[#allocation2 + $0x89] sm:$0x1] %vm476, 0.0
      %501 = vst.msk [vmem:[#allocation2 + $0xa1] sm:$0x1] %vm476, 0.0
      %502 = vst.msk [vmem:[#allocation2 + $0xb9] sm:$0x1] %vm476, 0.0
      %503 = vst.msk [vmem:[#allocation2 + $0xd1] sm:$0x1] %vm476, 0.0
      %504 = vst.msk [vmem:[#allocation2 + $0xe9] sm:$0x1] %vm476, 0.0
      %505 = vst.msk [vmem:[#allocation2 + $0x101] sm:$0x1] %vm476, 0.0
      %506 = vst.msk [vmem:[#allocation2 + $0x119] sm:$0x1] %vm476, 0.0
      %507 = vst.msk [vmem:[#allocation2 + $0x131] sm:$0x1] %vm476, 0.0
      %508 = vst.msk [vmem:[#allocation2 + $0x149] sm:$0x1] %vm476, 0.0
      %509 = vst.msk [vmem:[#allocation2 + $0x161] sm:$0x1] %vm476, 0.0
      %510 = vst.msk [vmem:[#allocation2 + $0x179] sm:$0x1] %vm476, 0.0
      %511 = vst.msk [vmem:[#allocation2 + $0x191] sm:$0x1] %vm476, 0.0
      %512 = vst.msk [vmem:[#allocation2 + $0x1a9] sm:$0x1] %vm476, 0.0
      %v513 = vld [vmem:[#allocation2] sm:$0xff]
      %v514 = vld [vmem:[#allocation2 + $0x8] sm:$0xff]
      %v515 = vld [vmem:[#allocation2 + $0x18] sm:$0xff]
      %v516 = vld [vmem:[#allocation2 + $0x20] sm:$0xff]
      %v517 = vld [vmem:[#allocation2 + $0x30] sm:$0xff]
      %v518 = vld [vmem:[#allocation2 + $0x38] sm:$0xff]
      %v519 = vld [vmem:[#allocation2 + $0x48] sm:$0xff]
      %v520 = vld [vmem:[#allocation2 + $0x50] sm:$0xff]
      %v521 = vld [vmem:[#allocation2 + $0x60] sm:$0xff]
      %v522 = vld [vmem:[#allocation2 + $0x68] sm:$0xff]
      %v523 = vld [vmem:[#allocation2 + $0x78] sm:$0xff]
      %v524 = vld [vmem:[#allocation2 + $0x80] sm:$0xff]
      %v525 = vld [vmem:[#allocation2 + $0x90] sm:$0xff]
      %v526 = vld [vmem:[#allocation2 + $0x98] sm:$0xff]
      %v527 = vld [vmem:[#allocation2 + $0xa8] sm:$0xff]
      %v528 = vld [vmem:[#allocation2 + $0xb0] sm:$0xff]
      %v529 = vld [vmem:[#allocation2 + $0xc0] sm:$0xff]
      %v530 = vld [vmem:[#allocation2 + $0xc8] sm:$0xff]
      %v531 = vld [vmem:[#allocation2 + $0xd8] sm:$0xff]
      %v532 = vld [vmem:[#allocation2 + $0xe0] sm:$0xff]
      %v533 = vld [vmem:[#allocation2 + $0xf0] sm:$0xff]
      %v534 = vld [vmem:[#allocation2 + $0xf8] sm:$0xff]
      %v535 = vld [vmem:[#allocation2 + $0x108] sm:$0xff]
      %v536 = vld [vmem:[#allocation2 + $0x110] sm:$0xff]
      %v537 = vld [vmem:[#allocation2 + $0x120] sm:$0xff]
      %v538 = vld [vmem:[#allocation2 + $0x128] sm:$0xff]
      %v539 = vld [vmem:[#allocation2 + $0x138] sm:$0xff]
      %v540 = vld [vmem:[#allocation2 + $0x140] sm:$0xff]
      %v541 = vld [vmem:[#allocation2 + $0x150] sm:$0xff]
      %v542 = vld [vmem:[#allocation2 + $0x158] sm:$0xff]
      %v543 = vld [vmem:[#allocation2 + $0x168] sm:$0xff]
      %v544 = vld [vmem:[#allocation2 + $0x170] sm:$0xff]
      %545 = vst.msk [vmem:[#allocation3] sm:$0xff] %vm403, %v513
      %546 = vst.msk [vmem:[#allocation3 + $0x8] sm:$0xff] %vm403, %v514
      %547 = vst.msk [vmem:[#allocation3 + $0x10] sm:$0xff] %vm403, %v515
      %548 = vst.msk [vmem:[#allocation3 + $0x18] sm:$0xff] %vm403, %v516
      %549 = vst.msk [vmem:[#allocation3 + $0x20] sm:$0xff] %vm403, %v517
      %550 = vst.msk [vmem:[#allocation3 + $0x28] sm:$0xff] %vm403, %v518
      %551 = vst.msk [vmem:[#allocation3 + $0x30] sm:$0xff] %vm403, %v519
      %552 = vst.msk [vmem:[#allocation3 + $0x38] sm:$0xff] %vm403, %v520
      %553 = vst.msk [vmem:[#allocation3 + $0x40] sm:$0xff] %vm403, %v521
      %554 = vst.msk [vmem:[#allocation3 + $0x48] sm:$0xff] %vm403, %v522
      %555 = vst.msk [vmem:[#allocation3 + $0x50] sm:$0xff] %vm403, %v523
      %556 = vst.msk [vmem:[#allocation3 + $0x58] sm:$0xff] %vm403, %v524
      %557 = vst.msk [vmem:[#allocation3 + $0x60] sm:$0xff] %vm403, %v525
      %558 = vst.msk [vmem:[#allocation3 + $0x68] sm:$0xff] %vm403, %v526
      %559 = vst.msk [vmem:[#allocation3 + $0x70] sm:$0xff] %vm403, %v527
      %560 = vst.msk [vmem:[#allocation3 + $0x78] sm:$0xff] %vm403, %v528
      %561 = vst.msk [vmem:[#allocation3 + $0x80] sm:$0xff] %vm403, %v529
      %562 = vst.msk [vmem:[#allocation3 + $0x88] sm:$0xff] %vm403, %v530
      %563 = vst.msk [vmem:[#allocation3 + $0x90] sm:$0xff] %vm403, %v531
      %564 = vst.msk [vmem:[#allocation3 + $0x98] sm:$0xff] %vm403, %v532
      %565 = vst.msk [vmem:[#allocation3 + $0xa0] sm:$0xff] %vm403, %v533
      %566 = vst.msk [vmem:[#allocation3 + $0xa8] sm:$0xff] %vm403, %v534
      %567 = vst.msk [vmem:[#allocation3 + $0xb0] sm:$0xff] %vm403, %v535
      %568 = vst.msk [vmem:[#allocation3 + $0xb8] sm:$0xff] %vm403, %v536
      %569 = vst.msk [vmem:[#allocation3 + $0xc0] sm:$0xff] %vm403, %v537
      %570 = vst.msk [vmem:[#allocation3 + $0xc8] sm:$0xff] %vm403, %v538
      %571 = vst.msk [vmem:[#allocation3 + $0xd0] sm:$0xff] %vm403, %v539
      %572 = vst.msk [vmem:[#allocation3 + $0xd8] sm:$0xff] %vm403, %v540
      %573 = vst.msk [vmem:[#allocation3 + $0xe0] sm:$0xff] %vm403, %v541
      %574 = vst.msk [vmem:[#allocation3 + $0xe8] sm:$0xff] %vm403, %v542
      %575 = vst.msk [vmem:[#allocation3 + $0xf0] sm:$0xff] %vm403, %v543
      %576 = vst.msk [vmem:[#allocation3 + $0xf8] sm:$0xff] %vm403, %v544
      %v577 = vld [vmem:[#allocation2 + $0x1] sm:$0xff]
      %v578 = vld [vmem:[#allocation2 + $0x9] sm:$0xff]
      %v579 = vld [vmem:[#allocation2 + $0x19] sm:$0xff]
      %v580 = vld [vmem:[#allocation2 + $0x21] sm:$0xff]
      %v581 = vld [vmem:[#allocation2 + $0x31] sm:$0xff]
      %v582 = vld [vmem:[#allocation2 + $0x39] sm:$0xff]
      %v583 = vld [vmem:[#allocation2 + $0x49] sm:$0xff]
      %v584 = vld [vmem:[#allocation2 + $0x51] sm:$0xff]
      %v585 = vld [vmem:[#allocation2 + $0x61] sm:$0xff]
      %v586 = vld [vmem:[#allocation2 + $0x69] sm:$0xff]
      %v587 = vld [vmem:[#allocation2 + $0x79] sm:$0xff]
      %v588 = vld [vmem:[#allocation2 + $0x81] sm:$0xff]
      %v589 = vld [vmem:[#allocation2 + $0x91] sm:$0xff]
      %v590 = vld [vmem:[#allocation2 + $0x99] sm:$0xff]
      %v591 = vld [vmem:[#allocation2 + $0xa9] sm:$0xff]
      %v592 = vld [vmem:[#allocation2 + $0xb1] sm:$0xff]
      %v593 = vld [vmem:[#allocation2 + $0xc1] sm:$0xff]
      %v594 = vld [vmem:[#allocation2 + $0xc9] sm:$0xff]
      %v595 = vld [vmem:[#allocation2 + $0xd9] sm:$0xff]
      %v596 = vld [vmem:[#allocation2 + $0xe1] sm:$0xff]
      %v597 = vld [vmem:[#allocation2 + $0xf1] sm:$0xff]
      %v598 = vld [vmem:[#allocation2 + $0xf9] sm:$0xff]
      %v599 = vld [vmem:[#allocation2 + $0x109] sm:$0xff]
      %v600 = vld [vmem:[#allocation2 + $0x111] sm:$0xff]
      %v601 = vld [vmem:[#allocation2 + $0x121] sm:$0xff]
      %v602 = vld [vmem:[#allocation2 + $0x129] sm:$0xff]
      %v603 = vld [vmem:[#allocation2 + $0x139] sm:$0xff]
      %v604 = vld [vmem:[#allocation2 + $0x141] sm:$0xff]
      %v605 = vld [vmem:[#allocation2 + $0x151] sm:$0xff]
      %v606 = vld [vmem:[#allocation2 + $0x159] sm:$0xff]
      %v607 = vld [vmem:[#allocation2 + $0x169] sm:$0xff]
      %v608 = vld [vmem:[#allocation2 + $0x171] sm:$0xff]
      %641 = vrot.lane.b32.xlu0 %v577, 4
      %v642 = vpop.permute.xlu0 %641
      %643 = vrot.lane.b32.xlu0 %v578, 4
      %v644 = vpop.permute.xlu0 %643
      %645 = vrot.lane.b32.xlu0 %v579, 4
      %v646 = vpop.permute.xlu0 %645
      %647 = vrot.lane.b32.xlu0 %v580, 4
      %v648 = vpop.permute.xlu0 %647
      %649 = vrot.lane.b32.xlu0 %v581, 4
      %v650 = vpop.permute.xlu0 %649
      %651 = vrot.lane.b32.xlu0 %v582, 4
      %v652 = vpop.permute.xlu0 %651
      %653 = vrot.lane.b32.xlu0 %v583, 4
      %v654 = vpop.permute.xlu0 %653
      %655 = vrot.lane.b32.xlu0 %v584, 4
      %v656 = vpop.permute.xlu0 %655
      %657 = vrot.lane.b32.xlu0 %v585, 4
      %v658 = vpop.permute.xlu0 %657
      %659 = vrot.lane.b32.xlu0 %v586, 4
      %v660 = vpop.permute.xlu0 %659
      %661 = vrot.lane.b32.xlu0 %v587, 4
      %v662 = vpop.permute.xlu0 %661
      %663 = vrot.lane.b32.xlu0 %v588, 4
      %v664 = vpop.permute.xlu0 %663
      %665 = vrot.lane.b32.xlu0 %v589, 4
      %v666 = vpop.permute.xlu0 %665
      %667 = vrot.lane.b32.xlu0 %v590, 4
      %v668 = vpop.permute.xlu0 %667
      %669 = vrot.lane.b32.xlu0 %v591, 4
      %v670 = vpop.permute.xlu0 %669
      %671 = vrot.lane.b32.xlu0 %v592, 4
      %v672 = vpop.permute.xlu0 %671
      %673 = vrot.lane.b32.xlu0 %v593, 4
      %v674 = vpop.permute.xlu0 %673
      %675 = vrot.lane.b32.xlu0 %v594, 4
      %v676 = vpop.permute.xlu0 %675
      %677 = vrot.lane.b32.xlu0 %v595, 4
      %v678 = vpop.permute.xlu0 %677
      %679 = vrot.lane.b32.xlu0 %v596, 4
      %v680 = vpop.permute.xlu0 %679
      %681 = vrot.lane.b32.xlu0 %v597, 4
      %v682 = vpop.permute.xlu0 %681
      %683 = vrot.lane.b32.xlu0 %v598, 4
      %v684 = vpop.permute.xlu0 %683
      %685 = vrot.lane.b32.xlu0 %v599, 4
      %v686 = vpop.permute.xlu0 %685
      %687 = vrot.lane.b32.xlu0 %v600, 4
      %v688 = vpop.permute.xlu0 %687
      %689 = vrot.lane.b32.xlu0 %v601, 4
      %v690 = vpop.permute.xlu0 %689
      %691 = vrot.lane.b32.xlu0 %v602, 4
      %v692 = vpop.permute.xlu0 %691
      %693 = vrot.lane.b32.xlu0 %v603, 4
      %v694 = vpop.permute.xlu0 %693
      %695 = vrot.lane.b32.xlu0 %v604, 4
      %v696 = vpop.permute.xlu0 %695
      %697 = vrot.lane.b32.xlu0 %v605, 4
      %v698 = vpop.permute.xlu0 %697
      %699 = vrot.lane.b32.xlu0 %v606, 4
      %v700 = vpop.permute.xlu0 %699
      %701 = vrot.lane.b32.xlu0 %v607, 4
      %v702 = vpop.permute.xlu0 %701
      %703 = vrot.lane.b32.xlu0 %v608, 4
      %v704 = vpop.permute.xlu0 %703
      %vm737 = vcmask 64544
      %738 = vst.msk [vmem:[#allocation3] sm:$0xff] %vm737, %v642
      %739 = vst.msk [vmem:[#allocation3 + $0x8] sm:$0xff] %vm737, %v644
      %740 = vst.msk [vmem:[#allocation3 + $0x10] sm:$0xff] %vm737, %v646
      %741 = vst.msk [vmem:[#allocation3 + $0x18] sm:$0xff] %vm737, %v648
      %742 = vst.msk [vmem:[#allocation3 + $0x20] sm:$0xff] %vm737, %v650
      %743 = vst.msk [vmem:[#allocation3 + $0x28] sm:$0xff] %vm737, %v652
      %744 = vst.msk [vmem:[#allocation3 + $0x30] sm:$0xff] %vm737, %v654
      %745 = vst.msk [vmem:[#allocation3 + $0x38] sm:$0xff] %vm737, %v656
      %746 = vst.msk [vmem:[#allocation3 + $0x40] sm:$0xff] %vm737, %v658
      %747 = vst.msk [vmem:[#allocation3 + $0x48] sm:$0xff] %vm737, %v660
      %748 = vst.msk [vmem:[#allocation3 + $0x50] sm:$0xff] %vm737, %v662
      %749 = vst.msk [vmem:[#allocation3 + $0x58] sm:$0xff] %vm737, %v664
      %750 = vst.msk [vmem:[#allocation3 + $0x60] sm:$0xff] %vm737, %v666
      %751 = vst.msk [vmem:[#allocation3 + $0x68] sm:$0xff] %vm737, %v668
      %752 = vst.msk [vmem:[#allocation3 + $0x70] sm:$0xff] %vm737, %v670
      %753 = vst.msk [vmem:[#allocation3 + $0x78] sm:$0xff] %vm737, %v672
      %754 = vst.msk [vmem:[#allocation3 + $0x80] sm:$0xff] %vm737, %v674
      %755 = vst.msk [vmem:[#allocation3 + $0x88] sm:$0xff] %vm737, %v676
      %756 = vst.msk [vmem:[#allocation3 + $0x90] sm:$0xff] %vm737, %v678
      %757 = vst.msk [vmem:[#allocation3 + $0x98] sm:$0xff] %vm737, %v680
      %758 = vst.msk [vmem:[#allocation3 + $0xa0] sm:$0xff] %vm737, %v682
      %759 = vst.msk [vmem:[#allocation3 + $0xa8] sm:$0xff] %vm737, %v684
      %760 = vst.msk [vmem:[#allocation3 + $0xb0] sm:$0xff] %vm737, %v686
      %761 = vst.msk [vmem:[#allocation3 + $0xb8] sm:$0xff] %vm737, %v688
      %762 = vst.msk [vmem:[#allocation3 + $0xc0] sm:$0xff] %vm737, %v690
      %763 = vst.msk [vmem:[#allocation3 + $0xc8] sm:$0xff] %vm737, %v692
      %764 = vst.msk [vmem:[#allocation3 + $0xd0] sm:$0xff] %vm737, %v694
      %765 = vst.msk [vmem:[#allocation3 + $0xd8] sm:$0xff] %vm737, %v696
      %766 = vst.msk [vmem:[#allocation3 + $0xe0] sm:$0xff] %vm737, %v698
      %767 = vst.msk [vmem:[#allocation3 + $0xe8] sm:$0xff] %vm737, %v700
      %768 = vst.msk [vmem:[#allocation3 + $0xf0] sm:$0xff] %vm737, %v702
      %769 = vst.msk [vmem:[#allocation3 + $0xf8] sm:$0xff] %vm737, %v704
      %v770 = vld [vmem:[#allocation2 + $0x2] sm:$0xff]
      %v771 = vld [vmem:[#allocation2 + $0xa] sm:$0xff]
      %v772 = vld [vmem:[#allocation2 + $0x1a] sm:$0xff]
      %v773 = vld [vmem:[#allocation2 + $0x22] sm:$0xff]
      %v774 = vld [vmem:[#allocation2 + $0x32] sm:$0xff]
      %v775 = vld [vmem:[#allocation2 + $0x3a] sm:$0xff]
      %v776 = vld [vmem:[#allocation2 + $0x4a] sm:$0xff]
      %v777 = vld [vmem:[#allocation2 + $0x52] sm:$0xff]
      %v778 = vld [vmem:[#allocation2 + $0x62] sm:$0xff]
      %v779 = vld [vmem:[#allocation2 + $0x6a] sm:$0xff]
      %v780 = vld [vmem:[#allocation2 + $0x7a] sm:$0xff]
      %v781 = vld [vmem:[#allocation2 + $0x82] sm:$0xff]
      %v782 = vld [vmem:[#allocation2 + $0x92] sm:$0xff]
      %v783 = vld [vmem:[#allocation2 + $0x9a] sm:$0xff]
      %v784 = vld [vmem:[#allocation2 + $0xaa] sm:$0xff]
      %v785 = vld [vmem:[#allocation2 + $0xb2] sm:$0xff]
      %v786 = vld [vmem:[#allocation2 + $0xc2] sm:$0xff]
      %v787 = vld [vmem:[#allocation2 + $0xca] sm:$0xff]
      %v788 = vld [vmem:[#allocation2 + $0xda] sm:$0xff]
      %v789 = vld [vmem:[#allocation2 + $0xe2] sm:$0xff]
      %v790 = vld [vmem:[#allocation2 + $0xf2] sm:$0xff]
      %v791 = vld [vmem:[#allocation2 + $0xfa] sm:$0xff]
      %v792 = vld [vmem:[#allocation2 + $0x10a] sm:$0xff]
      %v793 = vld [vmem:[#allocation2 + $0x112] sm:$0xff]
      %v794 = vld [vmem:[#allocation2 + $0x122] sm:$0xff]
      %v795 = vld [vmem:[#allocation2 + $0x12a] sm:$0xff]
      %v796 = vld [vmem:[#allocation2 + $0x13a] sm:$0xff]
      %v797 = vld [vmem:[#allocation2 + $0x142] sm:$0xff]
      %v798 = vld [vmem:[#allocation2 + $0x152] sm:$0xff]
      %v799 = vld [vmem:[#allocation2 + $0x15a] sm:$0xff]
      %v800 = vld [vmem:[#allocation2 + $0x16a] sm:$0xff]
      %v801 = vld [vmem:[#allocation2 + $0x172] sm:$0xff]
      %834 = vrot.lane.b32.xlu0 %v770, 8
      %v835 = vpop.permute.xlu0 %834
      %836 = vrot.lane.b32.xlu0 %v771, 8
      %v837 = vpop.permute.xlu0 %836
      %838 = vrot.lane.b32.xlu0 %v772, 8
      %v839 = vpop.permute.xlu0 %838
      %840 = vrot.lane.b32.xlu0 %v773, 8
      %v841 = vpop.permute.xlu0 %840
      %842 = vrot.lane.b32.xlu0 %v774, 8
      %v843 = vpop.permute.xlu0 %842
      %844 = vrot.lane.b32.xlu0 %v775, 8
      %v845 = vpop.permute.xlu0 %844
      %846 = vrot.lane.b32.xlu0 %v776, 8
      %v847 = vpop.permute.xlu0 %846
      %848 = vrot.lane.b32.xlu0 %v777, 8
      %v849 = vpop.permute.xlu0 %848
      %850 = vrot.lane.b32.xlu0 %v778, 8
      %v851 = vpop.permute.xlu0 %850
      %852 = vrot.lane.b32.xlu0 %v779, 8
      %v853 = vpop.permute.xlu0 %852
      %854 = vrot.lane.b32.xlu0 %v780, 8
      %v855 = vpop.permute.xlu0 %854
      %856 = vrot.lane.b32.xlu0 %v781, 8
      %v857 = vpop.permute.xlu0 %856
      %858 = vrot.lane.b32.xlu0 %v782, 8
      %v859 = vpop.permute.xlu0 %858
      %860 = vrot.lane.b32.xlu0 %v783, 8
      %v861 = vpop.permute.xlu0 %860
      %862 = vrot.lane.b32.xlu0 %v784, 8
      %v863 = vpop.permute.xlu0 %862
      %864 = vrot.lane.b32.xlu0 %v785, 8
      %v865 = vpop.permute.xlu0 %864
      %866 = vrot.lane.b32.xlu0 %v786, 8
      %v867 = vpop.permute.xlu0 %866
      %868 = vrot.lane.b32.xlu0 %v787, 8
      %v869 = vpop.permute.xlu0 %868
      %870 = vrot.lane.b32.xlu0 %v788, 8
      %v871 = vpop.permute.xlu0 %870
      %872 = vrot.lane.b32.xlu0 %v789, 8
      %v873 = vpop.permute.xlu0 %872
      %874 = vrot.lane.b32.xlu0 %v790, 8
      %v875 = vpop.permute.xlu0 %874
      %876 = vrot.lane.b32.xlu0 %v791, 8
      %v877 = vpop.permute.xlu0 %876
      %878 = vrot.lane.b32.xlu0 %v792, 8
      %v879 = vpop.permute.xlu0 %878
      %880 = vrot.lane.b32.xlu0 %v793, 8
      %v881 = vpop.permute.xlu0 %880
      %882 = vrot.lane.b32.xlu0 %v794, 8
      %v883 = vpop.permute.xlu0 %882
      %884 = vrot.lane.b32.xlu0 %v795, 8
      %v885 = vpop.permute.xlu0 %884
      %886 = vrot.lane.b32.xlu0 %v796, 8
      %v887 = vpop.permute.xlu0 %886
      %888 = vrot.lane.b32.xlu0 %v797, 8
      %v889 = vpop.permute.xlu0 %888
      %890 = vrot.lane.b32.xlu0 %v798, 8
      %v891 = vpop.permute.xlu0 %890
      %892 = vrot.lane.b32.xlu0 %v799, 8
      %v893 = vpop.permute.xlu0 %892
      %894 = vrot.lane.b32.xlu0 %v800, 8
      %v895 = vpop.permute.xlu0 %894
      %896 = vrot.lane.b32.xlu0 %v801, 8
      %v897 = vpop.permute.xlu0 %896
      %vm930 = vcmask 97344
      %931 = vst.msk [vmem:[#allocation3] sm:$0xff] %vm930, %v835
      %932 = vst.msk [vmem:[#allocation3 + $0x8] sm:$0xff] %vm930, %v837
      %933 = vst.msk [vmem:[#allocation3 + $0x10] sm:$0xff] %vm930, %v839
      %934 = vst.msk [vmem:[#allocation3 + $0x18] sm:$0xff] %vm930, %v841
      %935 = vst.msk [vmem:[#allocation3 + $0x20] sm:$0xff] %vm930, %v843
      %936 = vst.msk [vmem:[#allocation3 + $0x28] sm:$0xff] %vm930, %v845
      %937 = vst.msk [vmem:[#allocation3 + $0x30] sm:$0xff] %vm930, %v847
      %938 = vst.msk [vmem:[#allocation3 + $0x38] sm:$0xff] %vm930, %v849
      %939 = vst.msk [vmem:[#allocation3 + $0x40] sm:$0xff] %vm930, %v851
      %940 = vst.msk [vmem:[#allocation3 + $0x48] sm:$0xff] %vm930, %v853
      %941 = vst.msk [vmem:[#allocation3 + $0x50] sm:$0xff] %vm930, %v855
      %942 = vst.msk [vmem:[#allocation3 + $0x58] sm:$0xff] %vm930, %v857
      %943 = vst.msk [vmem:[#allocation3 + $0x60] sm:$0xff] %vm930, %v859
      %944 = vst.msk [vmem:[#allocation3 + $0x68] sm:$0xff] %vm930, %v861
      %945 = vst.msk [vmem:[#allocation3 + $0x70] sm:$0xff] %vm930, %v863
      %946 = vst.msk [vmem:[#allocation3 + $0x78] sm:$0xff] %vm930, %v865
      %947 = vst.msk [vmem:[#allocation3 + $0x80] sm:$0xff] %vm930, %v867
      %948 = vst.msk [vmem:[#allocation3 + $0x88] sm:$0xff] %vm930, %v869
      %949 = vst.msk [vmem:[#allocation3 + $0x90] sm:$0xff] %vm930, %v871
      %950 = vst.msk [vmem:[#allocation3 + $0x98] sm:$0xff] %vm930, %v873
      %951 = vst.msk [vmem:[#allocation3 + $0xa0] sm:$0xff] %vm930, %v875
      %952 = vst.msk [vmem:[#allocation3 + $0xa8] sm:$0xff] %vm930, %v877
      %953 = vst.msk [vmem:[#allocation3 + $0xb0] sm:$0xff] %vm930, %v879
      %954 = vst.msk [vmem:[#allocation3 + $0xb8] sm:$0xff] %vm930, %v881
      %955 = vst.msk [vmem:[#allocation3 + $0xc0] sm:$0xff] %vm930, %v883
      %956 = vst.msk [vmem:[#allocation3 + $0xc8] sm:$0xff] %vm930, %v885
      %957 = vst.msk [vmem:[#allocation3 + $0xd0] sm:$0xff] %vm930, %v887
      %958 = vst.msk [vmem:[#allocation3 + $0xd8] sm:$0xff] %vm930, %v889
      %959 = vst.msk [vmem:[#allocation3 + $0xe0] sm:$0xff] %vm930, %v891
      %960 = vst.msk [vmem:[#allocation3 + $0xe8] sm:$0xff] %vm930, %v893
      %961 = vst.msk [vmem:[#allocation3 + $0xf0] sm:$0xff] %vm930, %v895
      %962 = vst.msk [vmem:[#allocation3 + $0xf8] sm:$0xff] %vm930, %v897
      %v963 = vld [vmem:[%s438] sm:$0xff]
      %v964 = vld [vmem:[%s438 + $0x8] sm:$0xff]
      %v965 = vld [vmem:[%s438 + $0x18] sm:$0xff]
      %v966 = vld [vmem:[%s438 + $0x20] sm:$0xff]
      %v967 = vld [vmem:[%s438 + $0x30] sm:$0xff]
      %v968 = vld [vmem:[%s438 + $0x38] sm:$0xff]
      %v969 = vld [vmem:[%s438 + $0x48] sm:$0xff]
      %v970 = vld [vmem:[%s438 + $0x50] sm:$0xff]
      %v971 = vld [vmem:[%s438 + $0x60] sm:$0xff]
      %v972 = vld [vmem:[%s438 + $0x68] sm:$0xff]
      %v973 = vld [vmem:[%s438 + $0x78] sm:$0xff]
      %v974 = vld [vmem:[%s438 + $0x80] sm:$0xff]
      %v975 = vld [vmem:[%s438 + $0x90] sm:$0xff]
      %v976 = vld [vmem:[%s438 + $0x98] sm:$0xff]
      %v977 = vld [vmem:[%s438 + $0xa8] sm:$0xff]
      %v978 = vld [vmem:[%s438 + $0xb0] sm:$0xff]
      %v979 = vld [vmem:[%s438 + $0xc0] sm:$0xff]
      %v980 = vld [vmem:[%s438 + $0xc8] sm:$0xff]
      %v981 = vld [vmem:[%s438 + $0xd8] sm:$0xff]
      %v982 = vld [vmem:[%s438 + $0xe0] sm:$0xff]
      %v983 = vld [vmem:[%s438 + $0xf0] sm:$0xff]
      %v984 = vld [vmem:[%s438 + $0xf8] sm:$0xff]
      %v985 = vld [vmem:[%s438 + $0x108] sm:$0xff]
      %v986 = vld [vmem:[%s438 + $0x110] sm:$0xff]
      %v987 = vld [vmem:[%s438 + $0x120] sm:$0xff]
      %v988 = vld [vmem:[%s438 + $0x128] sm:$0xff]
      %v989 = vld [vmem:[%s438 + $0x138] sm:$0xff]
      %v990 = vld [vmem:[%s438 + $0x140] sm:$0xff]
      %v991 = vld [vmem:[%s438 + $0x150] sm:$0xff]
      %v992 = vld [vmem:[%s438 + $0x158] sm:$0xff]
      %v993 = vld [vmem:[%s438 + $0x168] sm:$0xff]
      %v994 = vld [vmem:[%s438 + $0x170] sm:$0xff]
      %1027 = vrot.lane.b32.xlu0 %v963, 12
      %v1028 = vpop.permute.xlu0 %1027
      %1029 = vrot.lane.b32.xlu0 %v964, 12
      %v1030 = vpop.permute.xlu0 %1029
      %1031 = vrot.lane.b32.xlu0 %v965, 12
      %v1032 = vpop.permute.xlu0 %1031
      %1033 = vrot.lane.b32.xlu0 %v966, 12
      %v1034 = vpop.permute.xlu0 %1033
      %1035 = vrot.lane.b32.xlu0 %v967, 12
      %v1036 = vpop.permute.xlu0 %1035
      %1037 = vrot.lane.b32.xlu0 %v968, 12
      %v1038 = vpop.permute.xlu0 %1037
      %1039 = vrot.lane.b32.xlu0 %v969, 12
      %v1040 = vpop.permute.xlu0 %1039
      %1041 = vrot.lane.b32.xlu0 %v970, 12
      %v1042 = vpop.permute.xlu0 %1041
      %1043 = vrot.lane.b32.xlu0 %v971, 12
      %v1044 = vpop.permute.xlu0 %1043
      %1045 = vrot.lane.b32.xlu0 %v972, 12
      %v1046 = vpop.permute.xlu0 %1045
      %1047 = vrot.lane.b32.xlu0 %v973, 12
      %v1048 = vpop.permute.xlu0 %1047
      %1049 = vrot.lane.b32.xlu0 %v974, 12
      %v1050 = vpop.permute.xlu0 %1049
      %1051 = vrot.lane.b32.xlu0 %v975, 12
      %v1052 = vpop.permute.xlu0 %1051
      %1053 = vrot.lane.b32.xlu0 %v976, 12
      %v1054 = vpop.permute.xlu0 %1053
      %1055 = vrot.lane.b32.xlu0 %v977, 12
      %v1056 = vpop.permute.xlu0 %1055
      %1057 = vrot.lane.b32.xlu0 %v978, 12
      %v1058 = vpop.permute.xlu0 %1057
      %1059 = vrot.lane.b32.xlu0 %v979, 12
      %v1060 = vpop.permute.xlu0 %1059
      %1061 = vrot.lane.b32.xlu0 %v980, 12
      %v1062 = vpop.permute.xlu0 %1061
      %1063 = vrot.lane.b32.xlu0 %v981, 12
      %v1064 = vpop.permute.xlu0 %1063
      %1065 = vrot.lane.b32.xlu0 %v982, 12
      %v1066 = vpop.permute.xlu0 %1065
      %1067 = vrot.lane.b32.xlu0 %v983, 12
      %v1068 = vpop.permute.xlu0 %1067
      %1069 = vrot.lane.b32.xlu0 %v984, 12
      %v1070 = vpop.permute.xlu0 %1069
      %1071 = vrot.lane.b32.xlu0 %v985, 12
      %v1072 = vpop.permute.xlu0 %1071
      %1073 = vrot.lane.b32.xlu0 %v986, 12
      %v1074 = vpop.permute.xlu0 %1073
      %1075 = vrot.lane.b32.xlu0 %v987, 12
      %v1076 = vpop.permute.xlu0 %1075
      %1077 = vrot.lane.b32.xlu0 %v988, 12
      %v1078 = vpop.permute.xlu0 %1077
      %1079 = vrot.lane.b32.xlu0 %v989, 12
      %v1080 = vpop.permute.xlu0 %1079
      %1081 = vrot.lane.b32.xlu0 %v990, 12
      %v1082 = vpop.permute.xlu0 %1081
      %1083 = vrot.lane.b32.xlu0 %v991, 12
      %v1084 = vpop.permute.xlu0 %1083
      %1085 = vrot.lane.b32.xlu0 %v992, 12
      %v1086 = vpop.permute.xlu0 %1085
      %1087 = vrot.lane.b32.xlu0 %v993, 12
      %v1088 = vpop.permute.xlu0 %1087
      %1089 = vrot.lane.b32.xlu0 %v994, 12
      %v1090 = vpop.permute.xlu0 %1089
      %vm1123 = vcmask 130144
      %1124 = vst.msk [vmem:[#allocation3] sm:$0xff] %vm1123, %v1028
      %1125 = vst.msk [vmem:[#allocation3 + $0x8] sm:$0xff] %vm1123, %v1030
      %1126 = vst.msk [vmem:[#allocation3 + $0x10] sm:$0xff] %vm1123, %v1032
      %1127 = vst.msk [vmem:[#allocation3 + $0x18] sm:$0xff] %vm1123, %v1034
      %1128 = vst.msk [vmem:[#allocation3 + $0x20] sm:$0xff] %vm1123, %v1036
      %1129 = vst.msk [vmem:[#allocation3 + $0x28] sm:$0xff] %vm1123, %v1038
      %1130 = vst.msk [vmem:[#allocation3 + $0x30] sm:$0xff] %vm1123, %v1040
      %1131 = vst.msk [vmem:[#allocation3 + $0x38] sm:$0xff] %vm1123, %v1042
      %1132 = vst.msk [vmem:[#allocation3 + $0x40] sm:$0xff] %vm1123, %v1044
      %1133 = vst.msk [vmem:[#allocation3 + $0x48] sm:$0xff] %vm1123, %v1046
      %1134 = vst.msk [vmem:[#allocation3 + $0x50] sm:$0xff] %vm1123, %v1048
      %1135 = vst.msk [vmem:[#allocation3 + $0x58] sm:$0xff] %vm1123, %v1050
      %1136 = vst.msk [vmem:[#allocation3 + $0x60] sm:$0xff] %vm1123, %v1052
      %1137 = vst.msk [vmem:[#allocation3 + $0x68] sm:$0xff] %vm1123, %v1054
      %1138 = vst.msk [vmem:[#allocation3 + $0x70] sm:$0xff] %vm1123, %v1056
      %1139 = vst.msk [vmem:[#allocation3 + $0x78] sm:$0xff] %vm1123, %v1058
      %1140 = vst.msk [vmem:[#allocation3 + $0x80] sm:$0xff] %vm1123, %v1060
      %1141 = vst.msk [vmem:[#allocation3 + $0x88] sm:$0xff] %vm1123, %v1062
      %1142 = vst.msk [vmem:[#allocation3 + $0x90] sm:$0xff] %vm1123, %v1064
      %1143 = vst.msk [vmem:[#allocation3 + $0x98] sm:$0xff] %vm1123, %v1066
      %1144 = vst.msk [vmem:[#allocation3 + $0xa0] sm:$0xff] %vm1123, %v1068
      %1145 = vst.msk [vmem:[#allocation3 + $0xa8] sm:$0xff] %vm1123, %v1070
      %1146 = vst.msk [vmem:[#allocation3 + $0xb0] sm:$0xff] %vm1123, %v1072
      %1147 = vst.msk [vmem:[#allocation3 + $0xb8] sm:$0xff] %vm1123, %v1074
      %1148 = vst.msk [vmem:[#allocation3 + $0xc0] sm:$0xff] %vm1123, %v1076
      %1149 = vst.msk [vmem:[#allocation3 + $0xc8] sm:$0xff] %vm1123, %v1078
      %1150 = vst.msk [vmem:[#allocation3 + $0xd0] sm:$0xff] %vm1123, %v1080
      %1151 = vst.msk [vmem:[#allocation3 + $0xd8] sm:$0xff] %vm1123, %v1082
      %1152 = vst.msk [vmem:[#allocation3 + $0xe0] sm:$0xff] %vm1123, %v1084
      %1153 = vst.msk [vmem:[#allocation3 + $0xe8] sm:$0xff] %vm1123, %v1086
      %1154 = vst.msk [vmem:[#allocation3 + $0xf0] sm:$0xff] %vm1123, %v1088
      %1155 = vst.msk [vmem:[#allocation3 + $0xf8] sm:$0xff] %vm1123, %v1090
      %v1156 = vld [vmem:[%s438 + $0x1] sm:$0xff]
      %v1157 = vld [vmem:[%s438 + $0x9] sm:$0xff]
      %v1158 = vld [vmem:[%s438 + $0x19] sm:$0xff]
      %v1159 = vld [vmem:[%s438 + $0x21] sm:$0xff]
      %v1160 = vld [vmem:[%s438 + $0x31] sm:$0xff]
      %v1161 = vld [vmem:[%s438 + $0x39] sm:$0xff]
      %v1162 = vld [vmem:[%s438 + $0x49] sm:$0xff]
      %v1163 = vld [vmem:[%s438 + $0x51] sm:$0xff]
      %v1164 = vld [vmem:[%s438 + $0x61] sm:$0xff]
      %v1165 = vld [vmem:[%s438 + $0x69] sm:$0xff]
      %v1166 = vld [vmem:[%s438 + $0x79] sm:$0xff]
      %v1167 = vld [vmem:[%s438 + $0x81] sm:$0xff]
      %v1168 = vld [vmem:[%s438 + $0x91] sm:$0xff]
      %v1169 = vld [vmem:[%s438 + $0x99] sm:$0xff]
      %v1170 = vld [vmem:[%s438 + $0xa9] sm:$0xff]
      %v1171 = vld [vmem:[%s438 + $0xb1] sm:$0xff]
      %v1172 = vld [vmem:[%s438 + $0xc1] sm:$0xff]
      %v1173 = vld [vmem:[%s438 + $0xc9] sm:$0xff]
      %v1174 = vld [vmem:[%s438 + $0xd9] sm:$0xff]
      %v1175 = vld [vmem:[%s438 + $0xe1] sm:$0xff]
      %v1176 = vld [vmem:[%s438 + $0xf1] sm:$0xff]
      %v1177 = vld [vmem:[%s438 + $0xf9] sm:$0xff]
      %v1178 = vld [vmem:[%s438 + $0x109] sm:$0xff]
      %v1179 = vld [vmem:[%s438 + $0x111] sm:$0xff]
      %v1180 = vld [vmem:[%s438 + $0x121] sm:$0xff]
      %v1181 = vld [vmem:[%s438 + $0x129] sm:$0xff]
      %v1182 = vld [vmem:[%s438 + $0x139] sm:$0xff]
      %v1183 = vld [vmem:[%s438 + $0x141] sm:$0xff]
      %v1184 = vld [vmem:[%s438 + $0x151] sm:$0xff]
      %v1185 = vld [vmem:[%s438 + $0x159] sm:$0xff]
      %v1186 = vld [vmem:[%s438 + $0x169] sm:$0xff]
      %v1187 = vld [vmem:[%s438 + $0x171] sm:$0xff]
      %1220 = vrot.lane.b32.xlu0 %v1156, 16
      %v1221 = vpop.permute.xlu0 %1220
      %1222 = vrot.lane.b32.xlu0 %v1157, 16
      %v1223 = vpop.permute.xlu0 %1222
      %1224 = vrot.lane.b32.xlu0 %v1158, 16
      %v1225 = vpop.permute.xlu0 %1224
      %1226 = vrot.lane.b32.xlu0 %v1159, 16
      %v1227 = vpop.permute.xlu0 %1226
      %1228 = vrot.lane.b32.xlu0 %v1160, 16
      %v1229 = vpop.permute.xlu0 %1228
      %1230 = vrot.lane.b32.xlu0 %v1161, 16
      %v1231 = vpop.permute.xlu0 %1230
      %1232 = vrot.lane.b32.xlu0 %v1162, 16
      %v1233 = vpop.permute.xlu0 %1232
      %1234 = vrot.lane.b32.xlu0 %v1163, 16
      %v1235 = vpop.permute.xlu0 %1234
      %1236 = vrot.lane.b32.xlu0 %v1164, 16
      %v1237 = vpop.permute.xlu0 %1236
      %1238 = vrot.lane.b32.xlu0 %v1165, 16
      %v1239 = vpop.permute.xlu0 %1238
      %1240 = vrot.lane.b32.xlu0 %v1166, 16
      %v1241 = vpop.permute.xlu0 %1240
      %1242 = vrot.lane.b32.xlu0 %v1167, 16
      %v1243 = vpop.permute.xlu0 %1242
      %1244 = vrot.lane.b32.xlu0 %v1168, 16
      %v1245 = vpop.permute.xlu0 %1244
      %1246 = vrot.lane.b32.xlu0 %v1169, 16
      %v1247 = vpop.permute.xlu0 %1246
      %1248 = vrot.lane.b32.xlu0 %v1170, 16
      %v1249 = vpop.permute.xlu0 %1248
      %1250 = vrot.lane.b32.xlu0 %v1171, 16
      %v1251 = vpop.permute.xlu0 %1250
      %1252 = vrot.lane.b32.xlu0 %v1172, 16
      %v1253 = vpop.permute.xlu0 %1252
      %1254 = vrot.lane.b32.xlu0 %v1173, 16
      %v1255 = vpop.permute.xlu0 %1254
      %1256 = vrot.lane.b32.xlu0 %v1174, 16
      %v1257 = vpop.permute.xlu0 %1256
      %1258 = vrot.lane.b32.xlu0 %v1175, 16
      %v1259 = vpop.permute.xlu0 %1258
      %1260 = vrot.lane.b32.xlu0 %v1176, 16
      %v1261 = vpop.permute.xlu0 %1260
      %1262 = vrot.lane.b32.xlu0 %v1177, 16
      %v1263 = vpop.permute.xlu0 %1262
      %1264 = vrot.lane.b32.xlu0 %v1178, 16
      %v1265 = vpop.permute.xlu0 %1264
      %1266 = vrot.lane.b32.xlu0 %v1179, 16
      %v1267 = vpop.permute.xlu0 %1266
      %1268 = vrot.lane.b32.xlu0 %v1180, 16
      %v1269 = vpop.permute.xlu0 %1268
      %1270 = vrot.lane.b32.xlu0 %v1181, 16
      %v1271 = vpop.permute.xlu0 %1270
      %1272 = vrot.lane.b32.xlu0 %v1182, 16
      %v1273 = vpop.permute.xlu0 %1272
      %1274 = vrot.lane.b32.xlu0 %v1183, 16
      %v1275 = vpop.permute.xlu0 %1274
      %1276 = vrot.lane.b32.xlu0 %v1184, 16
      %v1277 = vpop.permute.xlu0 %1276
      %1278 = vrot.lane.b32.xlu0 %v1185, 16
      %v1279 = vpop.permute.xlu0 %1278
      %1280 = vrot.lane.b32.xlu0 %v1186, 16
      %v1281 = vpop.permute.xlu0 %1280
      %1282 = vrot.lane.b32.xlu0 %v1187, 16
      %v1283 = vpop.permute.xlu0 %1282
      %vm1316 = vcmask 162944
      %1317 = vst.msk [vmem:[#allocation3] sm:$0xff] %vm1316, %v1221
      %1318 = vst.msk [vmem:[#allocation3 + $0x8] sm:$0xff] %vm1316, %v1223
      %1319 = vst.msk [vmem:[#allocation3 + $0x10] sm:$0xff] %vm1316, %v1225
      %1320 = vst.msk [vmem:[#allocation3 + $0x18] sm:$0xff] %vm1316, %v1227
      %1321 = vst.msk [vmem:[#allocation3 + $0x20] sm:$0xff] %vm1316, %v1229
      %1322 = vst.msk [vmem:[#allocation3 + $0x28] sm:$0xff] %vm1316, %v1231
      %1323 = vst.msk [vmem:[#allocation3 + $0x30] sm:$0xff] %vm1316, %v1233
      %1324 = vst.msk [vmem:[#allocation3 + $0x38] sm:$0xff] %vm1316, %v1235
      %1325 = vst.msk [vmem:[#allocation3 + $0x40] sm:$0xff] %vm1316, %v1237
      %1326 = vst.msk [vmem:[#allocation3 + $0x48] sm:$0xff] %vm1316, %v1239
      %1327 = vst.msk [vmem:[#allocation3 + $0x50] sm:$0xff] %vm1316, %v1241
      %1328 = vst.msk [vmem:[#allocation3 + $0x58] sm:$0xff] %vm1316, %v1243
      %1329 = vst.msk [vmem:[#allocation3 + $0x60] sm:$0xff] %vm1316, %v1245
      %1330 = vst.msk [vmem:[#allocation3 + $0x68] sm:$0xff] %vm1316, %v1247
      %1331 = vst.msk [vmem:[#allocation3 + $0x70] sm:$0xff] %vm1316, %v1249
      %1332 = vst.msk [vmem:[#allocation3 + $0x78] sm:$0xff] %vm1316, %v1251
      %1333 = vst.msk [vmem:[#allocation3 + $0x80] sm:$0xff] %vm1316, %v1253
      %1334 = vst.msk [vmem:[#allocation3 + $0x88] sm:$0xff] %vm1316, %v1255
      %1335 = vst.msk [vmem:[#allocation3 + $0x90] sm:$0xff] %vm1316, %v1257
      %1336 = vst.msk [vmem:[#allocation3 + $0x98] sm:$0xff] %vm1316, %v1259
      %1337 = vst.msk [vmem:[#allocation3 + $0xa0] sm:$0xff] %vm1316, %v1261
      %1338 = vst.msk [vmem:[#allocation3 + $0xa8] sm:$0xff] %vm1316, %v1263
      %1339 = vst.msk [vmem:[#allocation3 + $0xb0] sm:$0xff] %vm1316, %v1265
      %1340 = vst.msk [vmem:[#allocation3 + $0xb8] sm:$0xff] %vm1316, %v1267
      %1341 = vst.msk [vmem:[#allocation3 + $0xc0] sm:$0xff] %vm1316, %v1269
      %1342 = vst.msk [vmem:[#allocation3 + $0xc8] sm:$0xff] %vm1316, %v1271
      %1343 = vst.msk [vmem:[#allocation3 + $0xd0] sm:$0xff] %vm1316, %v1273
      %1344 = vst.msk [vmem:[#allocation3 + $0xd8] sm:$0xff] %vm1316, %v1275
      %1345 = vst.msk [vmem:[#allocation3 + $0xe0] sm:$0xff] %vm1316, %v1277
      %1346 = vst.msk [vmem:[#allocation3 + $0xe8] sm:$0xff] %vm1316, %v1279
      %1347 = vst.msk [vmem:[#allocation3 + $0xf0] sm:$0xff] %vm1316, %v1281
      %1348 = vst.msk [vmem:[#allocation3 + $0xf8] sm:$0xff] %vm1316, %v1283
      %v1349 = vld [vmem:[%s438 + $0x2] sm:$0xff]
      %v1350 = vld [vmem:[%s438 + $0xa] sm:$0xff]
      %v1351 = vld [vmem:[%s438 + $0x1a] sm:$0xff]
      %v1352 = vld [vmem:[%s438 + $0x22] sm:$0xff]
      %v1353 = vld [vmem:[%s438 + $0x32] sm:$0xff]
      %v1354 = vld [vmem:[%s438 + $0x3a] sm:$0xff]
      %v1355 = vld [vmem:[%s438 + $0x4a] sm:$0xff]
      %v1356 = vld [vmem:[%s438 + $0x52] sm:$0xff]
      %v1357 = vld [vmem:[%s438 + $0x62] sm:$0xff]
      %v1358 = vld [vmem:[%s438 + $0x6a] sm:$0xff]
      %v1359 = vld [vmem:[%s438 + $0x7a] sm:$0xff]
      %v1360 = vld [vmem:[%s438 + $0x82] sm:$0xff]
      %v1361 = vld [vmem:[%s438 + $0x92] sm:$0xff]
      %v1362 = vld [vmem:[%s438 + $0x9a] sm:$0xff]
      %v1363 = vld [vmem:[%s438 + $0xaa] sm:$0xff]
      %v1364 = vld [vmem:[%s438 + $0xb2] sm:$0xff]
      %v1365 = vld [vmem:[%s438 + $0xc2] sm:$0xff]
      %v1366 = vld [vmem:[%s438 + $0xca] sm:$0xff]
      %v1367 = vld [vmem:[%s438 + $0xda] sm:$0xff]
      %v1368 = vld [vmem:[%s438 + $0xe2] sm:$0xff]
      %v1369 = vld [vmem:[%s438 + $0xf2] sm:$0xff]
      %v1370 = vld [vmem:[%s438 + $0xfa] sm:$0xff]
      %v1371 = vld [vmem:[%s438 + $0x10a] sm:$0xff]
      %v1372 = vld [vmem:[%s438 + $0x112] sm:$0xff]
      %v1373 = vld [vmem:[%s438 + $0x122] sm:$0xff]
      %v1374 = vld [vmem:[%s438 + $0x12a] sm:$0xff]
      %v1375 = vld [vmem:[%s438 + $0x13a] sm:$0xff]
      %v1376 = vld [vmem:[%s438 + $0x142] sm:$0xff]
      %v1377 = vld [vmem:[%s438 + $0x152] sm:$0xff]
      %v1378 = vld [vmem:[%s438 + $0x15a] sm:$0xff]
      %v1379 = vld [vmem:[%s438 + $0x16a] sm:$0xff]
      %v1380 = vld [vmem:[%s438 + $0x172] sm:$0xff]
      %1413 = vrot.lane.b32.xlu0 %v1349, 20
      %v1414 = vpop.permute.xlu0 %1413
      %1415 = vrot.lane.b32.xlu0 %v1350, 20
      %v1416 = vpop.permute.xlu0 %1415
      %1417 = vrot.lane.b32.xlu0 %v1351, 20
      %v1418 = vpop.permute.xlu0 %1417
      %1419 = vrot.lane.b32.xlu0 %v1352, 20
      %v1420 = vpop.permute.xlu0 %1419
      %1421 = vrot.lane.b32.xlu0 %v1353, 20
      %v1422 = vpop.permute.xlu0 %1421
      %1423 = vrot.lane.b32.xlu0 %v1354, 20
      %v1424 = vpop.permute.xlu0 %1423
      %1425 = vrot.lane.b32.xlu0 %v1355, 20
      %v1426 = vpop.permute.xlu0 %1425
      %1427 = vrot.lane.b32.xlu0 %v1356, 20
      %v1428 = vpop.permute.xlu0 %1427
      %1429 = vrot.lane.b32.xlu0 %v1357, 20
      %v1430 = vpop.permute.xlu0 %1429
      %1431 = vrot.lane.b32.xlu0 %v1358, 20
      %v1432 = vpop.permute.xlu0 %1431
      %1433 = vrot.lane.b32.xlu0 %v1359, 20
      %v1434 = vpop.permute.xlu0 %1433
      %1435 = vrot.lane.b32.xlu0 %v1360, 20
      %v1436 = vpop.permute.xlu0 %1435
      %1437 = vrot.lane.b32.xlu0 %v1361, 20
      %v1438 = vpop.permute.xlu0 %1437
      %1439 = vrot.lane.b32.xlu0 %v1362, 20
      %v1440 = vpop.permute.xlu0 %1439
      %1441 = vrot.lane.b32.xlu0 %v1363, 20
      %v1442 = vpop.permute.xlu0 %1441
      %1443 = vrot.lane.b32.xlu0 %v1364, 20
      %v1444 = vpop.permute.xlu0 %1443
      %1445 = vrot.lane.b32.xlu0 %v1365, 20
      %v1446 = vpop.permute.xlu0 %1445
      %1447 = vrot.lane.b32.xlu0 %v1366, 20
      %v1448 = vpop.permute.xlu0 %1447
      %1449 = vrot.lane.b32.xlu0 %v1367, 20
      %v1450 = vpop.permute.xlu0 %1449
      %1451 = vrot.lane.b32.xlu0 %v1368, 20
      %v1452 = vpop.permute.xlu0 %1451
      %1453 = vrot.lane.b32.xlu0 %v1369, 20
      %v1454 = vpop.permute.xlu0 %1453
      %1455 = vrot.lane.b32.xlu0 %v1370, 20
      %v1456 = vpop.permute.xlu0 %1455
      %1457 = vrot.lane.b32.xlu0 %v1371, 20
      %v1458 = vpop.permute.xlu0 %1457
      %1459 = vrot.lane.b32.xlu0 %v1372, 20
      %v1460 = vpop.permute.xlu0 %1459
      %1461 = vrot.lane.b32.xlu0 %v1373, 20
      %v1462 = vpop.permute.xlu0 %1461
      %1463 = vrot.lane.b32.xlu0 %v1374, 20
      %v1464 = vpop.permute.xlu0 %1463
      %1465 = vrot.lane.b32.xlu0 %v1375, 20
      %v1466 = vpop.permute.xlu0 %1465
      %1467 = vrot.lane.b32.xlu0 %v1376, 20
      %v1468 = vpop.permute.xlu0 %1467
      %1469 = vrot.lane.b32.xlu0 %v1377, 20
      %v1470 = vpop.permute.xlu0 %1469
      %1471 = vrot.lane.b32.xlu0 %v1378, 20
      %v1472 = vpop.permute.xlu0 %1471
      %1473 = vrot.lane.b32.xlu0 %v1379, 20
      %v1474 = vpop.permute.xlu0 %1473
      %1475 = vrot.lane.b32.xlu0 %v1380, 20
      %v1476 = vpop.permute.xlu0 %1475
      %vm1509 = vcmask 195744
      %1510 = vst.msk [vmem:[#allocation3] sm:$0xff] %vm1509, %v1414
      %1511 = vst.msk [vmem:[#allocation3 + $0x8] sm:$0xff] %vm1509, %v1416
      %1512 = vst.msk [vmem:[#allocation3 + $0x10] sm:$0xff] %vm1509, %v1418
      %1513 = vst.msk [vmem:[#allocation3 + $0x18] sm:$0xff] %vm1509, %v1420
      %1514 = vst.msk [vmem:[#allocation3 + $0x20] sm:$0xff] %vm1509, %v1422
      %1515 = vst.msk [vmem:[#allocation3 + $0x28] sm:$0xff] %vm1509, %v1424
      %1516 = vst.msk [vmem:[#allocation3 + $0x30] sm:$0xff] %vm1509, %v1426
      %1517 = vst.msk [vmem:[#allocation3 + $0x38] sm:$0xff] %vm1509, %v1428
      %1518 = vst.msk [vmem:[#allocation3 + $0x40] sm:$0xff] %vm1509, %v1430
      %1519 = vst.msk [vmem:[#allocation3 + $0x48] sm:$0xff] %vm1509, %v1432
      %1520 = vst.msk [vmem:[#allocation3 + $0x50] sm:$0xff] %vm1509, %v1434
      %1521 = vst.msk [vmem:[#allocation3 + $0x58] sm:$0xff] %vm1509, %v1436
      %1522 = vst.msk [vmem:[#allocation3 + $0x60] sm:$0xff] %vm1509, %v1438
      %1523 = vst.msk [vmem:[#allocation3 + $0x68] sm:$0xff] %vm1509, %v1440
      %1524 = vst.msk [vmem:[#allocation3 + $0x70] sm:$0xff] %vm1509, %v1442
      %1525 = vst.msk [vmem:[#allocation3 + $0x78] sm:$0xff] %vm1509, %v1444
      %1526 = vst.msk [vmem:[#allocation3 + $0x80] sm:$0xff] %vm1509, %v1446
      %1527 = vst.msk [vmem:[#allocation3 + $0x88] sm:$0xff] %vm1509, %v1448
      %1528 = vst.msk [vmem:[#allocation3 + $0x90] sm:$0xff] %vm1509, %v1450
      %1529 = vst.msk [vmem:[#allocation3 + $0x98] sm:$0xff] %vm1509, %v1452
      %1530 = vst.msk [vmem:[#allocation3 + $0xa0] sm:$0xff] %vm1509, %v1454
      %1531 = vst.msk [vmem:[#allocation3 + $0xa8] sm:$0xff] %vm1509, %v1456
      %1532 = vst.msk [vmem:[#allocation3 + $0xb0] sm:$0xff] %vm1509, %v1458
      %1533 = vst.msk [vmem:[#allocation3 + $0xb8] sm:$0xff] %vm1509, %v1460
      %1534 = vst.msk [vmem:[#allocation3 + $0xc0] sm:$0xff] %vm1509, %v1462
      %1535 = vst.msk [vmem:[#allocation3 + $0xc8] sm:$0xff] %vm1509, %v1464
      %1536 = vst.msk [vmem:[#allocation3 + $0xd0] sm:$0xff] %vm1509, %v1466
      %1537 = vst.msk [vmem:[#allocation3 + $0xd8] sm:$0xff] %vm1509, %v1468
      %1538 = vst.msk [vmem:[#allocation3 + $0xe0] sm:$0xff] %vm1509, %v1470
      %1539 = vst.msk [vmem:[#allocation3 + $0xe8] sm:$0xff] %vm1509, %v1472
      %1540 = vst.msk [vmem:[#allocation3 + $0xf0] sm:$0xff] %vm1509, %v1474
      %1541 = vst.msk [vmem:[#allocation3 + $0xf8] sm:$0xff] %vm1509, %v1476
      %s1542 = scalar_lea.vmem [#allocation2], 48
      %v1543 = vld [vmem:[%s1542] sm:$0xff]
      %v1544 = vld [vmem:[%s1542 + $0x8] sm:$0xff]
      %v1545 = vld [vmem:[%s1542 + $0x18] sm:$0xff]
      %v1546 = vld [vmem:[%s1542 + $0x20] sm:$0xff]
      %v1547 = vld [vmem:[%s1542 + $0x30] sm:$0xff]
      %v1548 = vld [vmem:[%s1542 + $0x38] sm:$0xff]
      %v1549 = vld [vmem:[%s1542 + $0x48] sm:$0xff]
      %v1550 = vld [vmem:[%s1542 + $0x50] sm:$0xff]
      %v1551 = vld [vmem:[%s1542 + $0x60] sm:$0xff]
      %v1552 = vld [vmem:[%s1542 + $0x68] sm:$0xff]
      %v1553 = vld [vmem:[%s1542 + $0x78] sm:$0xff]
      %v1554 = vld [vmem:[%s1542 + $0x80] sm:$0xff]
      %v1555 = vld [vmem:[%s1542 + $0x90] sm:$0xff]
      %v1556 = vld [vmem:[%s1542 + $0x98] sm:$0xff]
      %v1557 = vld [vmem:[%s1542 + $0xa8] sm:$0xff]
      %v1558 = vld [vmem:[%s1542 + $0xb0] sm:$0xff]
      %v1559 = vld [vmem:[%s1542 + $0xc0] sm:$0xff]
      %v1560 = vld [vmem:[%s1542 + $0xc8] sm:$0xff]
      %v1561 = vld [vmem:[%s1542 + $0xd8] sm:$0xff]
      %v1562 = vld [vmem:[%s1542 + $0xe0] sm:$0xff]
      %v1563 = vld [vmem:[%s1542 + $0xf0] sm:$0xff]
      %v1564 = vld [vmem:[%s1542 + $0xf8] sm:$0xff]
      %v1565 = vld [vmem:[%s1542 + $0x108] sm:$0xff]
      %v1566 = vld [vmem:[%s1542 + $0x110] sm:$0xff]
      %v1567 = vld [vmem:[%s1542 + $0x120] sm:$0xff]
      %v1568 = vld [vmem:[%s1542 + $0x128] sm:$0xff]
      %v1569 = vld [vmem:[%s1542 + $0x138] sm:$0xff]
      %v1570 = vld [vmem:[%s1542 + $0x140] sm:$0xff]
      %v1571 = vld [vmem:[%s1542 + $0x150] sm:$0xff]
      %v1572 = vld [vmem:[%s1542 + $0x158] sm:$0xff]
      %v1573 = vld [vmem:[%s1542 + $0x168] sm:$0xff]
      %v1574 = vld [vmem:[%s1542 + $0x170] sm:$0xff]
      %1607 = vrot.lane.b32.xlu0 %v1543, 24
      %v1608 = vpop.permute.xlu0 %1607
      %1609 = vrot.lane.b32.xlu0 %v1544, 24
      %v1610 = vpop.permute.xlu0 %1609
      %1611 = vrot.lane.b32.xlu0 %v1545, 24
      %v1612 = vpop.permute.xlu0 %1611
      %1613 = vrot.lane.b32.xlu0 %v1546, 24
      %v1614 = vpop.permute.xlu0 %1613
      %1615 = vrot.lane.b32.xlu0 %v1547, 24
      %v1616 = vpop.permute.xlu0 %1615
      %1617 = vrot.lane.b32.xlu0 %v1548, 24
      %v1618 = vpop.permute.xlu0 %1617
      %1619 = vrot.lane.b32.xlu0 %v1549, 24
      %v1620 = vpop.permute.xlu0 %1619
      %1621 = vrot.lane.b32.xlu0 %v1550, 24
      %v1622 = vpop.permute.xlu0 %1621
      %1623 = vrot.lane.b32.xlu0 %v1551, 24
      %v1624 = vpop.permute.xlu0 %1623
      %1625 = vrot.lane.b32.xlu0 %v1552, 24
      %v1626 = vpop.permute.xlu0 %1625
      %1627 = vrot.lane.b32.xlu0 %v1553, 24
      %v1628 = vpop.permute.xlu0 %1627
      %1629 = vrot.lane.b32.xlu0 %v1554, 24
      %v1630 = vpop.permute.xlu0 %1629
      %1631 = vrot.lane.b32.xlu0 %v1555, 24
      %v1632 = vpop.permute.xlu0 %1631
      %1633 = vrot.lane.b32.xlu0 %v1556, 24
      %v1634 = vpop.permute.xlu0 %1633
      %1635 = vrot.lane.b32.xlu0 %v1557, 24
      %v1636 = vpop.permute.xlu0 %1635
      %1637 = vrot.lane.b32.xlu0 %v1558, 24
      %v1638 = vpop.permute.xlu0 %1637
      %1639 = vrot.lane.b32.xlu0 %v1559, 24
      %v1640 = vpop.permute.xlu0 %1639
      %1641 = vrot.lane.b32.xlu0 %v1560, 24
      %v1642 = vpop.permute.xlu0 %1641
      %1643 = vrot.lane.b32.xlu0 %v1561, 24
      %v1644 = vpop.permute.xlu0 %1643
      %1645 = vrot.lane.b32.xlu0 %v1562, 24
      %v1646 = vpop.permute.xlu0 %1645
      %1647 = vrot.lane.b32.xlu0 %v1563, 24
      %v1648 = vpop.permute.xlu0 %1647
      %1649 = vrot.lane.b32.xlu0 %v1564, 24
      %v1650 = vpop.permute.xlu0 %1649
      %1651 = vrot.lane.b32.xlu0 %v1565, 24
      %v1652 = vpop.permute.xlu0 %1651
      %1653 = vrot.lane.b32.xlu0 %v1566, 24
      %v1654 = vpop.permute.xlu0 %1653
      %1655 = vrot.lane.b32.xlu0 %v1567, 24
      %v1656 = vpop.permute.xlu0 %1655
      %1657 = vrot.lane.b32.xlu0 %v1568, 24
      %v1658 = vpop.permute.xlu0 %1657
      %1659 = vrot.lane.b32.xlu0 %v1569, 24
      %v1660 = vpop.permute.xlu0 %1659
      %1661 = vrot.lane.b32.xlu0 %v1570, 24
      %v1662 = vpop.permute.xlu0 %1661
      %1663 = vrot.lane.b32.xlu0 %v1571, 24
      %v1664 = vpop.permute.xlu0 %1663
      %1665 = vrot.lane.b32.xlu0 %v1572, 24
      %v1666 = vpop.permute.xlu0 %1665
      %1667 = vrot.lane.b32.xlu0 %v1573, 24
      %v1668 = vpop.permute.xlu0 %1667
      %1669 = vrot.lane.b32.xlu0 %v1574, 24
      %v1670 = vpop.permute.xlu0 %1669
      %vm1703 = vcmask 228544
      %1704 = vst.msk [vmem:[#allocation3] sm:$0xff] %vm1703, %v1608
      %1705 = vst.msk [vmem:[#allocation3 + $0x8] sm:$0xff] %vm1703, %v1610
      %1706 = vst.msk [vmem:[#allocation3 + $0x10] sm:$0xff] %vm1703, %v1612
      %1707 = vst.msk [vmem:[#allocation3 + $0x18] sm:$0xff] %vm1703, %v1614
      %1708 = vst.msk [vmem:[#allocation3 + $0x20] sm:$0xff] %vm1703, %v1616
      %1709 = vst.msk [vmem:[#allocation3 + $0x28] sm:$0xff] %vm1703, %v1618
      %1710 = vst.msk [vmem:[#allocation3 + $0x30] sm:$0xff] %vm1703, %v1620
      %1711 = vst.msk [vmem:[#allocation3 + $0x38] sm:$0xff] %vm1703, %v1622
      %1712 = vst.msk [vmem:[#allocation3 + $0x40] sm:$0xff] %vm1703, %v1624
      %1713 = vst.msk [vmem:[#allocation3 + $0x48] sm:$0xff] %vm1703, %v1626
      %1714 = vst.msk [vmem:[#allocation3 + $0x50] sm:$0xff] %vm1703, %v1628
      %1715 = vst.msk [vmem:[#allocation3 + $0x58] sm:$0xff] %vm1703, %v1630
      %1716 = vst.msk [vmem:[#allocation3 + $0x60] sm:$0xff] %vm1703, %v1632
      %1717 = vst.msk [vmem:[#allocation3 + $0x68] sm:$0xff] %vm1703, %v1634
      %1718 = vst.msk [vmem:[#allocation3 + $0x70] sm:$0xff] %vm1703, %v1636
      %1719 = vst.msk [vmem:[#allocation3 + $0x78] sm:$0xff] %vm1703, %v1638
      %1720 = vst.msk [vmem:[#allocation3 + $0x80] sm:$0xff] %vm1703, %v1640
      %1721 = vst.msk [vmem:[#allocation3 + $0x88] sm:$0xff] %vm1703, %v1642
      %1722 = vst.msk [vmem:[#allocation3 + $0x90] sm:$0xff] %vm1703, %v1644
      %1723 = vst.msk [vmem:[#allocation3 + $0x98] sm:$0xff] %vm1703, %v1646
      %1724 = vst.msk [vmem:[#allocation3 + $0xa0] sm:$0xff] %vm1703, %v1648
      %1725 = vst.msk [vmem:[#allocation3 + $0xa8] sm:$0xff] %vm1703, %v1650
      %1726 = vst.msk [vmem:[#allocation3 + $0xb0] sm:$0xff] %vm1703, %v1652
      %1727 = vst.msk [vmem:[#allocation3 + $0xb8] sm:$0xff] %vm1703, %v1654
      %1728 = vst.msk [vmem:[#allocation3 + $0xc0] sm:$0xff] %vm1703, %v1656
      %1729 = vst.msk [vmem:[#allocation3 + $0xc8] sm:$0xff] %vm1703, %v1658
      %1730 = vst.msk [vmem:[#allocation3 + $0xd0] sm:$0xff] %vm1703, %v1660
      %1731 = vst.msk [vmem:[#allocation3 + $0xd8] sm:$0xff] %vm1703, %v1662
      %1732 = vst.msk [vmem:[#allocation3 + $0xe0] sm:$0xff] %vm1703, %v1664
      %1733 = vst.msk [vmem:[#allocation3 + $0xe8] sm:$0xff] %vm1703, %v1666
      %1734 = vst.msk [vmem:[#allocation3 + $0xf0] sm:$0xff] %vm1703, %v1668
      %1735 = vst.msk [vmem:[#allocation3 + $0xf8] sm:$0xff] %vm1703, %v1670
      %v1736 = vld [vmem:[%s1542 + $0x1] sm:$0xff]
      %v1737 = vld [vmem:[%s1542 + $0x9] sm:$0xff]
      %v1738 = vld [vmem:[%s1542 + $0x19] sm:$0xff]
      %v1739 = vld [vmem:[%s1542 + $0x21] sm:$0xff]
      %v1740 = vld [vmem:[%s1542 + $0x31] sm:$0xff]
      %v1741 = vld [vmem:[%s1542 + $0x39] sm:$0xff]
      %v1742 = vld [vmem:[%s1542 + $0x49] sm:$0xff]
      %v1743 = vld [vmem:[%s1542 + $0x51] sm:$0xff]
      %v1744 = vld [vmem:[%s1542 + $0x61] sm:$0xff]
      %v1745 = vld [vmem:[%s1542 + $0x69] sm:$0xff]
      %v1746 = vld [vmem:[%s1542 + $0x79] sm:$0xff]
      %v1747 = vld [vmem:[%s1542 + $0x81] sm:$0xff]
      %v1748 = vld [vmem:[%s1542 + $0x91] sm:$0xff]
      %v1749 = vld [vmem:[%s1542 + $0x99] sm:$0xff]
      %v1750 = vld [vmem:[%s1542 + $0xa9] sm:$0xff]
      %v1751 = vld [vmem:[%s1542 + $0xb1] sm:$0xff]
      %v1752 = vld [vmem:[%s1542 + $0xc1] sm:$0xff]
      %v1753 = vld [vmem:[%s1542 + $0xc9] sm:$0xff]
      %v1754 = vld [vmem:[%s1542 + $0xd9] sm:$0xff]
      %v1755 = vld [vmem:[%s1542 + $0xe1] sm:$0xff]
      %v1756 = vld [vmem:[%s1542 + $0xf1] sm:$0xff]
      %v1757 = vld [vmem:[%s1542 + $0xf9] sm:$0xff]
      %v1758 = vld [vmem:[%s1542 + $0x109] sm:$0xff]
      %v1759 = vld [vmem:[%s1542 + $0x111] sm:$0xff]
      %v1760 = vld [vmem:[%s1542 + $0x121] sm:$0xff]
      %v1761 = vld [vmem:[%s1542 + $0x129] sm:$0xff]
      %v1762 = vld [vmem:[%s1542 + $0x139] sm:$0xff]
      %v1763 = vld [vmem:[%s1542 + $0x141] sm:$0xff]
      %v1764 = vld [vmem:[%s1542 + $0x151] sm:$0xff]
      %v1765 = vld [vmem:[%s1542 + $0x159] sm:$0xff]
      %v1766 = vld [vmem:[%s1542 + $0x169] sm:$0xff]
      %v1767 = vld [vmem:[%s1542 + $0x171] sm:$0xff]
      %1800 = vrot.lane.b32.xlu0 %v1736, 28
      %v1801 = vpop.permute.xlu0 %1800
      %1802 = vrot.lane.b32.xlu0 %v1737, 28
      %v1803 = vpop.permute.xlu0 %1802
      %1804 = vrot.lane.b32.xlu0 %v1738, 28
      %v1805 = vpop.permute.xlu0 %1804
      %1806 = vrot.lane.b32.xlu0 %v1739, 28
      %v1807 = vpop.permute.xlu0 %1806
      %1808 = vrot.lane.b32.xlu0 %v1740, 28
      %v1809 = vpop.permute.xlu0 %1808
      %1810 = vrot.lane.b32.xlu0 %v1741, 28
      %v1811 = vpop.permute.xlu0 %1810
      %1812 = vrot.lane.b32.xlu0 %v1742, 28
      %v1813 = vpop.permute.xlu0 %1812
      %1814 = vrot.lane.b32.xlu0 %v1743, 28
      %v1815 = vpop.permute.xlu0 %1814
      %1816 = vrot.lane.b32.xlu0 %v1744, 28
      %v1817 = vpop.permute.xlu0 %1816
      %1818 = vrot.lane.b32.xlu0 %v1745, 28
      %v1819 = vpop.permute.xlu0 %1818
      %1820 = vrot.lane.b32.xlu0 %v1746, 28
      %v1821 = vpop.permute.xlu0 %1820
      %1822 = vrot.lane.b32.xlu0 %v1747, 28
      %v1823 = vpop.permute.xlu0 %1822
      %1824 = vrot.lane.b32.xlu0 %v1748, 28
      %v1825 = vpop.permute.xlu0 %1824
      %1826 = vrot.lane.b32.xlu0 %v1749, 28
      %v1827 = vpop.permute.xlu0 %1826
      %1828 = vrot.lane.b32.xlu0 %v1750, 28
      %v1829 = vpop.permute.xlu0 %1828
      %1830 = vrot.lane.b32.xlu0 %v1751, 28
      %v1831 = vpop.permute.xlu0 %1830
      %1832 = vrot.lane.b32.xlu0 %v1752, 28
      %v1833 = vpop.permute.xlu0 %1832
      %1834 = vrot.lane.b32.xlu0 %v1753, 28
      %v1835 = vpop.permute.xlu0 %1834
      %1836 = vrot.lane.b32.xlu0 %v1754, 28
      %v1837 = vpop.permute.xlu0 %1836
      %1838 = vrot.lane.b32.xlu0 %v1755, 28
      %v1839 = vpop.permute.xlu0 %1838
      %1840 = vrot.lane.b32.xlu0 %v1756, 28
      %v1841 = vpop.permute.xlu0 %1840
      %1842 = vrot.lane.b32.xlu0 %v1757, 28
      %v1843 = vpop.permute.xlu0 %1842
      %1844 = vrot.lane.b32.xlu0 %v1758, 28
      %v1845 = vpop.permute.xlu0 %1844
      %1846 = vrot.lane.b32.xlu0 %v1759, 28
      %v1847 = vpop.permute.xlu0 %1846
      %1848 = vrot.lane.b32.xlu0 %v1760, 28
      %v1849 = vpop.permute.xlu0 %1848
      %1850 = vrot.lane.b32.xlu0 %v1761, 28
      %v1851 = vpop.permute.xlu0 %1850
      %1852 = vrot.lane.b32.xlu0 %v1762, 28
      %v1853 = vpop.permute.xlu0 %1852
      %1854 = vrot.lane.b32.xlu0 %v1763, 28
      %v1855 = vpop.permute.xlu0 %1854
      %1856 = vrot.lane.b32.xlu0 %v1764, 28
      %v1857 = vpop.permute.xlu0 %1856
      %1858 = vrot.lane.b32.xlu0 %v1765, 28
      %v1859 = vpop.permute.xlu0 %1858
      %1860 = vrot.lane.b32.xlu0 %v1766, 28
      %v1861 = vpop.permute.xlu0 %1860
      %1862 = vrot.lane.b32.xlu0 %v1767, 28
      %v1863 = vpop.permute.xlu0 %1862
      %vm1896 = vcmask 261344
      %1897 = vst.msk [vmem:[#allocation3] sm:$0xff] %vm1896, %v1801
      %1898 = vst.msk [vmem:[#allocation3 + $0x8] sm:$0xff] %vm1896, %v1803
      %1899 = vst.msk [vmem:[#allocation3 + $0x10] sm:$0xff] %vm1896, %v1805
      %1900 = vst.msk [vmem:[#allocation3 + $0x18] sm:$0xff] %vm1896, %v1807
      %1901 = vst.msk [vmem:[#allocation3 + $0x20] sm:$0xff] %vm1896, %v1809
      %1902 = vst.msk [vmem:[#allocation3 + $0x28] sm:$0xff] %vm1896, %v1811
      %1903 = vst.msk [vmem:[#allocation3 + $0x30] sm:$0xff] %vm1896, %v1813
      %1904 = vst.msk [vmem:[#allocation3 + $0x38] sm:$0xff] %vm1896, %v1815
      %1905 = vst.msk [vmem:[#allocation3 + $0x40] sm:$0xff] %vm1896, %v1817
      %1906 = vst.msk [vmem:[#allocation3 + $0x48] sm:$0xff] %vm1896, %v1819
      %1907 = vst.msk [vmem:[#allocation3 + $0x50] sm:$0xff] %vm1896, %v1821
      %1908 = vst.msk [vmem:[#allocation3 + $0x58] sm:$0xff] %vm1896, %v1823
      %1909 = vst.msk [vmem:[#allocation3 + $0x60] sm:$0xff] %vm1896, %v1825
      %1910 = vst.msk [vmem:[#allocation3 + $0x68] sm:$0xff] %vm1896, %v1827
      %1911 = vst.msk [vmem:[#allocation3 + $0x70] sm:$0xff] %vm1896, %v1829
      %1912 = vst.msk [vmem:[#allocation3 + $0x78] sm:$0xff] %vm1896, %v1831
      %1913 = vst.msk [vmem:[#allocation3 + $0x80] sm:$0xff] %vm1896, %v1833
      %1914 = vst.msk [vmem:[#allocation3 + $0x88] sm:$0xff] %vm1896, %v1835
      %1915 = vst.msk [vmem:[#allocation3 + $0x90] sm:$0xff] %vm1896, %v1837
      %1916 = vst.msk [vmem:[#allocation3 + $0x98] sm:$0xff] %vm1896, %v1839
      %1917 = vst.msk [vmem:[#allocation3 + $0xa0] sm:$0xff] %vm1896, %v1841
      %1918 = vst.msk [vmem:[#allocation3 + $0xa8] sm:$0xff] %vm1896, %v1843
      %1919 = vst.msk [vmem:[#allocation3 + $0xb0] sm:$0xff] %vm1896, %v1845
      %1920 = vst.msk [vmem:[#allocation3 + $0xb8] sm:$0xff] %vm1896, %v1847
      %1921 = vst.msk [vmem:[#allocation3 + $0xc0] sm:$0xff] %vm1896, %v1849
      %1922 = vst.msk [vmem:[#allocation3 + $0xc8] sm:$0xff] %vm1896, %v1851
      %1923 = vst.msk [vmem:[#allocation3 + $0xd0] sm:$0xff] %vm1896, %v1853
      %1924 = vst.msk [vmem:[#allocation3 + $0xd8] sm:$0xff] %vm1896, %v1855
      %1925 = vst.msk [vmem:[#allocation3 + $0xe0] sm:$0xff] %vm1896, %v1857
      %1926 = vst.msk [vmem:[#allocation3 + $0xe8] sm:$0xff] %vm1896, %v1859
      %1927 = vst.msk [vmem:[#allocation3 + $0xf0] sm:$0xff] %vm1896, %v1861
      %1928 = vst.msk [vmem:[#allocation3 + $0xf8] sm:$0xff] %vm1896, %v1863
      %v1929 = vld [vmem:[%s1542 + $0x2] sm:$0xff]
      %v1930 = vld [vmem:[%s1542 + $0xa] sm:$0xff]
      %v1931 = vld [vmem:[%s1542 + $0x1a] sm:$0xff]
      %v1932 = vld [vmem:[%s1542 + $0x22] sm:$0xff]
      %v1933 = vld [vmem:[%s1542 + $0x32] sm:$0xff]
      %v1934 = vld [vmem:[%s1542 + $0x3a] sm:$0xff]
      %v1935 = vld [vmem:[%s1542 + $0x4a] sm:$0xff]
      %v1936 = vld [vmem:[%s1542 + $0x52] sm:$0xff]
      %v1937 = vld [vmem:[%s1542 + $0x62] sm:$0xff]
      %v1938 = vld [vmem:[%s1542 + $0x6a] sm:$0xff]
      %v1939 = vld [vmem:[%s1542 + $0x7a] sm:$0xff]
      %v1940 = vld [vmem:[%s1542 + $0x82] sm:$0xff]
      %v1941 = vld [vmem:[%s1542 + $0x92] sm:$0xff]
      %v1942 = vld [vmem:[%s1542 + $0x9a] sm:$0xff]
      %v1943 = vld [vmem:[%s1542 + $0xaa] sm:$0xff]
      %v1944 = vld [vmem:[%s1542 + $0xb2] sm:$0xff]
      %v1945 = vld [vmem:[%s1542 + $0xc2] sm:$0xff]
      %v1946 = vld [vmem:[%s1542 + $0xca] sm:$0xff]
      %v1947 = vld [vmem:[%s1542 + $0xda] sm:$0xff]
      %v1948 = vld [vmem:[%s1542 + $0xe2] sm:$0xff]
      %v1949 = vld [vmem:[%s1542 + $0xf2] sm:$0xff]
      %v1950 = vld [vmem:[%s1542 + $0xfa] sm:$0xff]
      %v1951 = vld [vmem:[%s1542 + $0x10a] sm:$0xff]
      %v1952 = vld [vmem:[%s1542 + $0x112] sm:$0xff]
      %v1953 = vld [vmem:[%s1542 + $0x122] sm:$0xff]
      %v1954 = vld [vmem:[%s1542 + $0x12a] sm:$0xff]
      %v1955 = vld [vmem:[%s1542 + $0x13a] sm:$0xff]
      %v1956 = vld [vmem:[%s1542 + $0x142] sm:$0xff]
      %v1957 = vld [vmem:[%s1542 + $0x152] sm:$0xff]
      %v1958 = vld [vmem:[%s1542 + $0x15a] sm:$0xff]
      %v1959 = vld [vmem:[%s1542 + $0x16a] sm:$0xff]
      %v1960 = vld [vmem:[%s1542 + $0x172] sm:$0xff]
      %1993 = vrot.lane.b32.xlu0 %v1929, 32
      %v1994 = vpop.permute.xlu0 %1993
      %1995 = vrot.lane.b32.xlu0 %v1930, 32
      %v1996 = vpop.permute.xlu0 %1995
      %1997 = vrot.lane.b32.xlu0 %v1931, 32
      %v1998 = vpop.permute.xlu0 %1997
      %1999 = vrot.lane.b32.xlu0 %v1932, 32
      %v2000 = vpop.permute.xlu0 %1999
      %2001 = vrot.lane.b32.xlu0 %v1933, 32
      %v2002 = vpop.permute.xlu0 %2001
      %2003 = vrot.lane.b32.xlu0 %v1934, 32
      %v2004 = vpop.permute.xlu0 %2003
      %2005 = vrot.lane.b32.xlu0 %v1935, 32
      %v2006 = vpop.permute.xlu0 %2005
      %2007 = vrot.lane.b32.xlu0 %v1936, 32
      %v2008 = vpop.permute.xlu0 %2007
      %2009 = vrot.lane.b32.xlu0 %v1937, 32
      %v2010 = vpop.permute.xlu0 %2009
      %2011 = vrot.lane.b32.xlu0 %v1938, 32
      %v2012 = vpop.permute.xlu0 %2011
      %2013 = vrot.lane.b32.xlu0 %v1939, 32
      %v2014 = vpop.permute.xlu0 %2013
      %2015 = vrot.lane.b32.xlu0 %v1940, 32
      %v2016 = vpop.permute.xlu0 %2015
      %2017 = vrot.lane.b32.xlu0 %v1941, 32
      %v2018 = vpop.permute.xlu0 %2017
      %2019 = vrot.lane.b32.xlu0 %v1942, 32
      %v2020 = vpop.permute.xlu0 %2019
      %2021 = vrot.lane.b32.xlu0 %v1943, 32
      %v2022 = vpop.permute.xlu0 %2021
      %2023 = vrot.lane.b32.xlu0 %v1944, 32
      %v2024 = vpop.permute.xlu0 %2023
      %2025 = vrot.lane.b32.xlu0 %v1945, 32
      %v2026 = vpop.permute.xlu0 %2025
      %2027 = vrot.lane.b32.xlu0 %v1946, 32
      %v2028 = vpop.permute.xlu0 %2027
      %2029 = vrot.lane.b32.xlu0 %v1947, 32
      %v2030 = vpop.permute.xlu0 %2029
      %2031 = vrot.lane.b32.xlu0 %v1948, 32
      %v2032 = vpop.permute.xlu0 %2031
      %2033 = vrot.lane.b32.xlu0 %v1949, 32
      %v2034 = vpop.permute.xlu0 %2033
      %2035 = vrot.lane.b32.xlu0 %v1950, 32
      %v2036 = vpop.permute.xlu0 %2035
      %2037 = vrot.lane.b32.xlu0 %v1951, 32
      %v2038 = vpop.permute.xlu0 %2037
      %2039 = vrot.lane.b32.xlu0 %v1952, 32
      %v2040 = vpop.permute.xlu0 %2039
      %2041 = vrot.lane.b32.xlu0 %v1953, 32
      %v2042 = vpop.permute.xlu0 %2041
      %2043 = vrot.lane.b32.xlu0 %v1954, 32
      %v2044 = vpop.permute.xlu0 %2043
      %2045 = vrot.lane.b32.xlu0 %v1955, 32
      %v2046 = vpop.permute.xlu0 %2045
      %2047 = vrot.lane.b32.xlu0 %v1956, 32
      %v2048 = vpop.permute.xlu0 %2047
      %2049 = vrot.lane.b32.xlu0 %v1957, 32
      %v2050 = vpop.permute.xlu0 %2049
      %2051 = vrot.lane.b32.xlu0 %v1958, 32
      %v2052 = vpop.permute.xlu0 %2051
      %2053 = vrot.lane.b32.xlu0 %v1959, 32
      %v2054 = vpop.permute.xlu0 %2053
      %2055 = vrot.lane.b32.xlu0 %v1960, 32
      %v2056 = vpop.permute.xlu0 %2055
      %vm2089 = vcmask 294144
      %2090 = vst.msk [vmem:[#allocation3] sm:$0xff] %vm2089, %v1994
      %2091 = vst.msk [vmem:[#allocation3 + $0x8] sm:$0xff] %vm2089, %v1996
      %2092 = vst.msk [vmem:[#allocation3 + $0x10] sm:$0xff] %vm2089, %v1998
      %2093 = vst.msk [vmem:[#allocation3 + $0x18] sm:$0xff] %vm2089, %v2000
      %2094 = vst.msk [vmem:[#allocation3 + $0x20] sm:$0xff] %vm2089, %v2002
      %2095 = vst.msk [vmem:[#allocation3 + $0x28] sm:$0xff] %vm2089, %v2004
      %2096 = vst.msk [vmem:[#allocation3 + $0x30] sm:$0xff] %vm2089, %v2006
      %2097 = vst.msk [vmem:[#allocation3 + $0x38] sm:$0xff] %vm2089, %v2008
      %2098 = vst.msk [vmem:[#allocation3 + $0x40] sm:$0xff] %vm2089, %v2010
      %2099 = vst.msk [vmem:[#allocation3 + $0x48] sm:$0xff] %vm2089, %v2012
      %2100 = vst.msk [vmem:[#allocation3 + $0x50] sm:$0xff] %vm2089, %v2014
      %2101 = vst.msk [vmem:[#allocation3 + $0x58] sm:$0xff] %vm2089, %v2016
      %2102 = vst.msk [vmem:[#allocation3 + $0x60] sm:$0xff] %vm2089, %v2018
      %2103 = vst.msk [vmem:[#allocation3 + $0x68] sm:$0xff] %vm2089, %v2020
      %2104 = vst.msk [vmem:[#allocation3 + $0x70] sm:$0xff] %vm2089, %v2022
      %2105 = vst.msk [vmem:[#allocation3 + $0x78] sm:$0xff] %vm2089, %v2024
      %2106 = vst.msk [vmem:[#allocation3 + $0x80] sm:$0xff] %vm2089, %v2026
      %2107 = vst.msk [vmem:[#allocation3 + $0x88] sm:$0xff] %vm2089, %v2028
      %2108 = vst.msk [vmem:[#allocation3 + $0x90] sm:$0xff] %vm2089, %v2030
      %2109 = vst.msk [vmem:[#allocation3 + $0x98] sm:$0xff] %vm2089, %v2032
      %2110 = vst.msk [vmem:[#allocation3 + $0xa0] sm:$0xff] %vm2089, %v2034
      %2111 = vst.msk [vmem:[#allocation3 + $0xa8] sm:$0xff] %vm2089, %v2036
      %2112 = vst.msk [vmem:[#allocation3 + $0xb0] sm:$0xff] %vm2089, %v2038
      %2113 = vst.msk [vmem:[#allocation3 + $0xb8] sm:$0xff] %vm2089, %v2040
      %2114 = vst.msk [vmem:[#allocation3 + $0xc0] sm:$0xff] %vm2089, %v2042
      %2115 = vst.msk [vmem:[#allocation3 + $0xc8] sm:$0xff] %vm2089, %v2044
      %2116 = vst.msk [vmem:[#allocation3 + $0xd0] sm:$0xff] %vm2089, %v2046
      %2117 = vst.msk [vmem:[#allocation3 + $0xd8] sm:$0xff] %vm2089, %v2048
      %2118 = vst.msk [vmem:[#allocation3 + $0xe0] sm:$0xff] %vm2089, %v2050
      %2119 = vst.msk [vmem:[#allocation3 + $0xe8] sm:$0xff] %vm2089, %v2052
      %2120 = vst.msk [vmem:[#allocation3 + $0xf0] sm:$0xff] %vm2089, %v2054
      %2121 = vst.msk [vmem:[#allocation3 + $0xf8] sm:$0xff] %vm2089, %v2056
      %v2122 = vld [vmem:[%s4] sm:$0x1]
      %v2123 = vld [vmem:[#allocation3] sm:$0xff]
      %v2124 = vld [vmem:[#allocation3 + $0x8] sm:$0xff]
      %v2125 = vld [vmem:[#allocation3 + $0x10] sm:$0xff]
      %v2126 = vld [vmem:[#allocation3 + $0x18] sm:$0xff]
      %v2127 = vld [vmem:[#allocation3 + $0x20] sm:$0xff]
      %v2128 = vld [vmem:[#allocation3 + $0x28] sm:$0xff]
      %v2129 = vld [vmem:[#allocation3 + $0x30] sm:$0xff]
      %v2130 = vld [vmem:[#allocation3 + $0x38] sm:$0xff]
      %v2131 = vld [vmem:[#allocation3 + $0x40] sm:$0xff]
      %v2132 = vld [vmem:[#allocation3 + $0x48] sm:$0xff]
      %v2133 = vld [vmem:[#allocation3 + $0x50] sm:$0xff]
      %v2134 = vld [vmem:[#allocation3 + $0x58] sm:$0xff]
      %v2135 = vld [vmem:[#allocation3 + $0x60] sm:$0xff]
      %v2136 = vld [vmem:[#allocation3 + $0x68] sm:$0xff]
      %v2137 = vld [vmem:[#allocation3 + $0x70] sm:$0xff]
      %v2138 = vld [vmem:[#allocation3 + $0x78] sm:$0xff]
      %v2139 = vld [vmem:[#allocation3 + $0x80] sm:$0xff]
      %v2140 = vld [vmem:[#allocation3 + $0x88] sm:$0xff]
      %v2141 = vld [vmem:[#allocation3 + $0x90] sm:$0xff]
      %v2142 = vld [vmem:[#allocation3 + $0x98] sm:$0xff]
      %v2143 = vld [vmem:[#allocation3 + $0xa0] sm:$0xff]
      %v2144 = vld [vmem:[#allocation3 + $0xa8] sm:$0xff]
      %v2145 = vld [vmem:[#allocation3 + $0xb0] sm:$0xff]
      %v2146 = vld [vmem:[#allocation3 + $0xb8] sm:$0xff]
      %v2147 = vld [vmem:[#allocation3 + $0xc0] sm:$0xff]
      %v2148 = vld [vmem:[#allocation3 + $0xc8] sm:$0xff]
      %v2149 = vld [vmem:[#allocation3 + $0xd0] sm:$0xff]
      %v2150 = vld [vmem:[#allocation3 + $0xd8] sm:$0xff]
      %v2151 = vld [vmem:[#allocation3 + $0xe0] sm:$0xff]
      %v2152 = vld [vmem:[#allocation3 + $0xe8] sm:$0xff]
      %v2153 = vld [vmem:[#allocation3 + $0xf0] sm:$0xff]
      %v2154 = vld [vmem:[#allocation3 + $0xf8] sm:$0xff]
      %v2155 = vld [vmem:[%s3] sm:$0xff]
      %v2156 = vld [vmem:[%s3 + $0x8] sm:$0xff]
      %v2157 = vld [vmem:[%s3 + $0x10] sm:$0xff]
      %v2159 = vlaneseq
      %v2160 = vshrl.u32 %v2159, 7
      %v2161 = vsub.s32 0, %v2160
      %v2162 = vrot.slane %v2122, %v2161
      %vm2164 = vcmask 195584
      %v2166 = vsel %vm2164, %v2123, 0
      %v2169 = vsel %vm2164, %v2124, 0
      %v2172 = vsel %vm2164, %v2125, 0
      %v2175 = vsel %vm2164, %v2126, 0
      %v2178 = vsel %vm2164, %v2127, 0
      %v2181 = vsel %vm2164, %v2128, 0
      %v2184 = vsel %vm2164, %v2129, 0
      %v2187 = vsel %vm2164, %v2130, 0
      %v2190 = vsel %vm2164, %v2131, 0
      %v2193 = vsel %vm2164, %v2132, 0
      %v2196 = vsel %vm2164, %v2133, 0
      %v2199 = vsel %vm2164, %v2134, 0
      %v2202 = vsel %vm2164, %v2135, 0
      %v2205 = vsel %vm2164, %v2136, 0
      %v2208 = vsel %vm2164, %v2137, 0
      %v2211 = vsel %vm2164, %v2138, 0
      %v2214 = vsel %vm2164, %v2139, 0
      %v2217 = vsel %vm2164, %v2140, 0
      %v2220 = vsel %vm2164, %v2141, 0
      %v2223 = vsel %vm2164, %v2142, 0
      %v2226 = vsel %vm2164, %v2143, 0
      %v2229 = vsel %vm2164, %v2144, 0
      %v2232 = vsel %vm2164, %v2145, 0
      %v2235 = vsel %vm2164, %v2146, 0
      %v2238 = vsel %vm2164, %v2147, 0
      %v2241 = vsel %vm2164, %v2148, 0
      %v2244 = vsel %vm2164, %v2149, 0
      %v2247 = vsel %vm2164, %v2150, 0
      %v2250 = vsel %vm2164, %v2151, 0
      %v2253 = vsel %vm2164, %v2152, 0
      %v2256 = vsel %vm2164, %v2153, 0
      %v2259 = vsel %vm2164, %v2154, 0
      %2261 = vmatprep.subr.mxu0 0.0
      %2262 = vmatpush1.msra.mxu0 %v2155
      %2263 = vmatprep.subr.mxu0 0.0
      %2264 = vmatpush1.msra.mxu0 %v2156
      %2265 = vmatprep.subr.mxu0 0.0
      %2266 = vmatpush1.msra.mxu0 %v2157
      %2267 = vmatprep.subr.mxu0 0.0
      %2268 = vmatpush1.msra.mxu0 0.0
      %2269 = vmatprep.subr.mxu0 0.0
      %2270 = vmatpush1.msra.mxu0 0.0
      %2271 = vmatprep.subr.mxu0 0.0
      %2272 = vmatpush1.msra.mxu0 0.0
      %2273 = vmatprep.subr.mxu0 0.0
      %2274 = vmatpush1.msra.mxu0 0.0
      %2275 = vmatprep.subr.mxu0 0.0
      %2276 = vmatpush1.msra.mxu0 0.0
      %2277 = vmatprep.subr.mxu0 0.0
      %2278 = vmatpush1.msra.mxu0 0.0
      %2279 = vmatprep.subr.mxu0 0.0
      %2280 = vmatpush1.msra.mxu0 0.0
      %2281 = vmatprep.subr.mxu0 0.0
      %2282 = vmatpush1.msra.mxu0 0.0
      %2283 = vmatprep.subr.mxu0 0.0
      %2284 = vmatpush1.msra.mxu0 0.0
      %2285 = vmatprep.subr.mxu0 0.0
      %2286 = vmatpush1.msra.mxu0 0.0
      %2287 = vmatprep.subr.mxu0 0.0
      %2288 = vmatpush1.msra.mxu0 0.0
      %2289 = vmatprep.subr.mxu0 0.0
      %2290 = vmatpush1.msra.mxu0 0.0
      %2291 = vmatprep.subr.mxu0 0.0
      %2292 = vmatpush1.msra.mxu0 0.0
      %2293 = vmatprep.subr.mxu0 0.0
      %2294 = vmatpush1.msra.mxu0 0.0
      %2295 = vmatprep.subr.mxu0 0.0
      %2296 = vmatpush1.msra.mxu0 0.0
      %2297 = vmatprep.subr.mxu0 0.0
      %2298 = vmatpush1.msra.mxu0 0.0
      %2299 = vmatprep.subr.mxu0 0.0
      %2300 = vmatpush1.msra.mxu0 0.0
      %2301 = vmatprep.subr.mxu0 0.0
      %2302 = vmatpush1.msra.mxu0 0.0
      %2303 = vmatprep.subr.mxu0 0.0
      %2304 = vmatpush1.msra.mxu0 0.0
      %2305 = vmatprep.subr.mxu0 0.0
      %2306 = vmatpush1.msra.mxu0 0.0
      %2307 = vmatprep.subr.mxu0 0.0
      %2308 = vmatpush1.msra.mxu0 0.0
      %2309 = vmatprep.subr.mxu0 0.0
      %2310 = vmatpush1.msra.mxu0 0.0
      %2311 = vmatprep.subr.mxu0 0.0
      %2312 = vmatpush1.msra.mxu0 0.0
      %2313 = vmatprep.subr.mxu0 0.0
      %2314 = vmatpush1.msra.mxu0 0.0
      %2315 = vmatprep.subr.mxu0 0.0
      %2316 = vmatpush1.msra.mxu0 0.0
      %2317 = vmatprep.subr.mxu0 0.0
      %2318 = vmatpush1.msra.mxu0 0.0
      %2319 = vmatprep.subr.mxu0 0.0
      %2320 = vmatpush1.msra.mxu0 0.0
      %2321 = vmatprep.subr.mxu0 0.0
      %2322 = vmatpush1.msra.mxu0 0.0
      %2323 = vmatprep.subr.mxu0 0.0
      %2324 = vmatpush1.msra.mxu0 0.0
      %2325 = vmatprep.mubr.f32.mxu0 0.0
      %2326 = vmatmul.mubr.f32.gmra.mrb[0].mxu0 %v2166
      %v2327 = vpop.f32.mrb[0].mxu0
      %v2328 = vadd.f32 %v2162, %v2327
      %v2329 = vpop.f32.mrb[0].mxu0
      %2330 = vmatprep.mubr.f32.mxu0 0.0
      %2331 = vmatmul.mubr.f32.gmra.mrb[0].mxu0 %v2169
      %v2332 = vpop.f32.mrb[0].mxu0
      %v2333 = vadd.f32 %v2162, %v2332
      %v2334 = vpop.f32.mrb[0].mxu0
      %2335 = vmatprep.mubr.f32.mxu0 0.0
      %2336 = vmatmul.mubr.f32.gmra.mrb[0].mxu0 %v2172
      %v2337 = vpop.f32.mrb[0].mxu0
      %v2338 = vadd.f32 %v2162, %v2337
      %v2339 = vpop.f32.mrb[0].mxu0
      %2340 = vmatprep.mubr.f32.mxu0 0.0
      %2341 = vmatmul.mubr.f32.gmra.mrb[0].mxu0 %v2175
      %v2342 = vpop.f32.mrb[0].mxu0
      %v2343 = vadd.f32 %v2162, %v2342
      %v2344 = vpop.f32.mrb[0].mxu0
      %2345 = vmatprep.mubr.f32.mxu0 0.0
      %2346 = vmatmul.mubr.f32.gmra.mrb[0].mxu0 %v2178
      %v2347 = vpop.f32.mrb[0].mxu0
      %v2348 = vadd.f32 %v2162, %v2347
      %v2349 = vpop.f32.mrb[0].mxu0
      %2350 = vmatprep.mubr.f32.mxu0 0.0
      %2351 = vmatmul.mubr.f32.gmra.mrb[0].mxu0 %v2181
      %v2352 = vpop.f32.mrb[0].mxu0
      %v2353 = vadd.f32 %v2162, %v2352
      %v2354 = vpop.f32.mrb[0].mxu0
      %2355 = vmatprep.mubr.f32.mxu0 0.0
      %2356 = vmatmul.mubr.f32.gmra.mrb[0].mxu0 %v2184
      %v2357 = vpop.f32.mrb[0].mxu0
      %v2358 = vadd.f32 %v2162, %v2357
      %v2359 = vpop.f32.mrb[0].mxu0
      %2360 = vmatprep.mubr.f32.mxu0 0.0
      %2361 = vmatmul.mubr.f32.gmra.mrb[0].mxu0 %v2187
      %v2362 = vpop.f32.mrb[0].mxu0
      %v2363 = vadd.f32 %v2162, %v2362
      %v2364 = vpop.f32.mrb[0].mxu0
      %2365 = vmatprep.mubr.f32.mxu0 0.0
      %2366 = vmatmul.mubr.f32.gmra.mrb[0].mxu0 %v2190
      %v2367 = vpop.f32.mrb[0].mxu0
      %v2368 = vadd.f32 %v2162, %v2367
      %v2369 = vpop.f32.mrb[0].mxu0
      %2370 = vmatprep.mubr.f32.mxu0 0.0
      %2371 = vmatmul.mubr.f32.gmra.mrb[0].mxu0 %v2193
      %v2372 = vpop.f32.mrb[0].mxu0
      %v2373 = vadd.f32 %v2162, %v2372
      %v2374 = vpop.f32.mrb[0].mxu0
      %2375 = vmatprep.mubr.f32.mxu0 0.0
      %2376 = vmatmul.mubr.f32.gmra.mrb[0].mxu0 %v2196
      %v2377 = vpop.f32.mrb[0].mxu0
      %v2378 = vadd.f32 %v2162, %v2377
      %v2379 = vpop.f32.mrb[0].mxu0
      %2380 = vmatprep.mubr.f32.mxu0 0.0
      %2381 = vmatmul.mubr.f32.gmra.mrb[0].mxu0 %v2199
      %v2382 = vpop.f32.mrb[0].mxu0
      %v2383 = vadd.f32 %v2162, %v2382
      %v2384 = vpop.f32.mrb[0].mxu0
      %2385 = vmatprep.mubr.f32.mxu0 0.0
      %2386 = vmatmul.mubr.f32.gmra.mrb[0].mxu0 %v2202
      %v2387 = vpop.f32.mrb[0].mxu0
      %v2388 = vadd.f32 %v2162, %v2387
      %v2389 = vpop.f32.mrb[0].mxu0
      %2390 = vmatprep.mubr.f32.mxu0 0.0
      %2391 = vmatmul.mubr.f32.gmra.mrb[0].mxu0 %v2205
      %v2392 = vpop.f32.mrb[0].mxu0
      %v2393 = vadd.f32 %v2162, %v2392
      %v2394 = vpop.f32.mrb[0].mxu0
      %2395 = vmatprep.mubr.f32.mxu0 0.0
      %2396 = vmatmul.mubr.f32.gmra.mrb[0].mxu0 %v2208
      %v2397 = vpop.f32.mrb[0].mxu0
      %v2398 = vadd.f32 %v2162, %v2397
      %v2399 = vpop.f32.mrb[0].mxu0
      %2400 = vmatprep.mubr.f32.mxu0 0.0
      %2401 = vmatmul.mubr.f32.gmra.mrb[0].mxu0 %v2211
      %v2402 = vpop.f32.mrb[0].mxu0
      %v2403 = vadd.f32 %v2162, %v2402
      %v2404 = vpop.f32.mrb[0].mxu0
      %2405 = vmatprep.mubr.f32.mxu0 0.0
      %2406 = vmatmul.mubr.f32.gmra.mrb[0].mxu0 %v2214
      %v2407 = vpop.f32.mrb[0].mxu0
      %v2408 = vadd.f32 %v2162, %v2407
      %v2409 = vpop.f32.mrb[0].mxu0
      %2410 = vmatprep.mubr.f32.mxu0 0.0
      %2411 = vmatmul.mubr.f32.gmra.mrb[0].mxu0 %v2217
      %v2412 = vpop.f32.mrb[0].mxu0
      %v2413 = vadd.f32 %v2162, %v2412
      %v2414 = vpop.f32.mrb[0].mxu0
      %2415 = vmatprep.mubr.f32.mxu0 0.0
      %2416 = vmatmul.mubr.f32.gmra.mrb[0].mxu0 %v2220
      %v2417 = vpop.f32.mrb[0].mxu0
      %v2418 = vadd.f32 %v2162, %v2417
      %v2419 = vpop.f32.mrb[0].mxu0
      %2420 = vmatprep.mubr.f32.mxu0 0.0
      %2421 = vmatmul.mubr.f32.gmra.mrb[0].mxu0 %v2223
      %v2422 = vpop.f32.mrb[0].mxu0
      %v2423 = vadd.f32 %v2162, %v2422
      %v2424 = vpop.f32.mrb[0].mxu0
      %2425 = vmatprep.mubr.f32.mxu0 0.0
      %2426 = vmatmul.mubr.f32.gmra.mrb[0].mxu0 %v2226
      %v2427 = vpop.f32.mrb[0].mxu0
      %v2428 = vadd.f32 %v2162, %v2427
      %v2429 = vpop.f32.mrb[0].mxu0
      %2430 = vmatprep.mubr.f32.mxu0 0.0
      %2431 = vmatmul.mubr.f32.gmra.mrb[0].mxu0 %v2229
      %v2432 = vpop.f32.mrb[0].mxu0
      %v2433 = vadd.f32 %v2162, %v2432
      %v2434 = vpop.f32.mrb[0].mxu0
      %2435 = vmatprep.mubr.f32.mxu0 0.0
      %2436 = vmatmul.mubr.f32.gmra.mrb[0].mxu0 %v2232
      %v2437 = vpop.f32.mrb[0].mxu0
      %v2438 = vadd.f32 %v2162, %v2437
      %v2439 = vpop.f32.mrb[0].mxu0
      %2440 = vmatprep.mubr.f32.mxu0 0.0
      %2441 = vmatmul.mubr.f32.gmra.mrb[0].mxu0 %v2235
      %v2442 = vpop.f32.mrb[0].mxu0
      %v2443 = vadd.f32 %v2162, %v2442
      %v2444 = vpop.f32.mrb[0].mxu0
      %2445 = vmatprep.mubr.f32.mxu0 0.0
      %2446 = vmatmul.mubr.f32.gmra.mrb[0].mxu0 %v2238
      %v2447 = vpop.f32.mrb[0].mxu0
      %v2448 = vadd.f32 %v2162, %v2447
      %v2449 = vpop.f32.mrb[0].mxu0
      %2450 = vmatprep.mubr.f32.mxu0 0.0
      %2451 = vmatmul.mubr.f32.gmra.mrb[0].mxu0 %v2241
      %v2452 = vpop.f32.mrb[0].mxu0
      %v2453 = vadd.f32 %v2162, %v2452
      %v2454 = vpop.f32.mrb[0].mxu0
      %2455 = vmatprep.mubr.f32.mxu0 0.0
      %2456 = vmatmul.mubr.f32.gmra.mrb[0].mxu0 %v2244
      %v2457 = vpop.f32.mrb[0].mxu0
      %v2458 = vadd.f32 %v2162, %v2457
      %v2459 = vpop.f32.mrb[0].mxu0
      %2460 = vmatprep.mubr.f32.mxu0 0.0
      %2461 = vmatmul.mubr.f32.gmra.mrb[0].mxu0 %v2247
      %v2462 = vpop.f32.mrb[0].mxu0
      %v2463 = vadd.f32 %v2162, %v2462
      %v2464 = vpop.f32.mrb[0].mxu0
      %2465 = vmatprep.mubr.f32.mxu0 0.0
      %2466 = vmatmul.mubr.f32.gmra.mrb[0].mxu0 %v2250
      %v2467 = vpop.f32.mrb[0].mxu0
      %v2468 = vadd.f32 %v2162, %v2467
      %v2469 = vpop.f32.mrb[0].mxu0
      %2470 = vmatprep.mubr.f32.mxu0 0.0
      %2471 = vmatmul.mubr.f32.gmra.mrb[0].mxu0 %v2253
      %v2472 = vpop.f32.mrb[0].mxu0
      %v2473 = vadd.f32 %v2162, %v2472
      %v2474 = vpop.f32.mrb[0].mxu0
      %2475 = vmatprep.mubr.f32.mxu0 0.0
      %2476 = vmatmul.mubr.f32.gmra.mrb[0].mxu0 %v2256
      %v2477 = vpop.f32.mrb[0].mxu0
      %v2478 = vadd.f32 %v2162, %v2477
      %v2479 = vpop.f32.mrb[0].mxu0
      %2480 = vmatprep.mubr.f32.mxu0 0.0
      %2481 = vmatmul.mubr.f32.gmra.mrb[0].mxu0 %v2259
      %v2482 = vpop.f32.mrb[0].mxu0
      %v2483 = vadd.f32 %v2162, %v2482
      %v2484 = vpop.f32.mrb[0].mxu0
      %2485 = vdwg.mxu0
      %vm2486 = vcmask 64512
      %2487 = vst.msk [vmem:[%s391] sm:$0xff] %vm2486, %v2328
      %2488 = vst.msk [vmem:[%s391 + $0x8] sm:$0xff] %vm2486, %v2333
      %2489 = vst.msk [vmem:[%s391 + $0x20] sm:$0xff] %vm2486, %v2338
      %2490 = vst.msk [vmem:[%s391 + $0x28] sm:$0xff] %vm2486, %v2343
      %2491 = vst.msk [vmem:[%s391 + $0x40] sm:$0xff] %vm2486, %v2348
      %2492 = vst.msk [vmem:[%s391 + $0x48] sm:$0xff] %vm2486, %v2353
      %2493 = vst.msk [vmem:[%s391 + $0x60] sm:$0xff] %vm2486, %v2358
      %2494 = vst.msk [vmem:[%s391 + $0x68] sm:$0xff] %vm2486, %v2363
      %2495 = vst.msk [vmem:[%s391 + $0x80] sm:$0xff] %vm2486, %v2368
      %2496 = vst.msk [vmem:[%s391 + $0x88] sm:$0xff] %vm2486, %v2373
      %2497 = vst.msk [vmem:[%s391 + $0xa0] sm:$0xff] %vm2486, %v2378
      %2498 = vst.msk [vmem:[%s391 + $0xa8] sm:$0xff] %vm2486, %v2383
      %2499 = vst.msk [vmem:[%s391 + $0xc0] sm:$0xff] %vm2486, %v2388
      %2500 = vst.msk [vmem:[%s391 + $0xc8] sm:$0xff] %vm2486, %v2393
      %2501 = vst.msk [vmem:[%s391 + $0xe0] sm:$0xff] %vm2486, %v2398
      %2502 = vst.msk [vmem:[%s391 + $0xe8] sm:$0xff] %vm2486, %v2403
      %2503 = vst.msk [vmem:[%s391 + $0x100] sm:$0xff] %vm2486, %v2408
      %2504 = vst.msk [vmem:[%s391 + $0x108] sm:$0xff] %vm2486, %v2413
      %2505 = vst.msk [vmem:[%s391 + $0x120] sm:$0xff] %vm2486, %v2418
      %2506 = vst.msk [vmem:[%s391 + $0x128] sm:$0xff] %vm2486, %v2423
      %2507 = vst.msk [vmem:[%s391 + $0x140] sm:$0xff] %vm2486, %v2428
      %2508 = vst.msk [vmem:[%s391 + $0x148] sm:$0xff] %vm2486, %v2433
      %2509 = vst.msk [vmem:[%s391 + $0x160] sm:$0xff] %vm2486, %v2438
      %2510 = vst.msk [vmem:[%s391 + $0x168] sm:$0xff] %vm2486, %v2443
      %2511 = vst.msk [vmem:[%s391 + $0x180] sm:$0xff] %vm2486, %v2448
      %2512 = vst.msk [vmem:[%s391 + $0x188] sm:$0xff] %vm2486, %v2453
      %2513 = vst.msk [vmem:[%s391 + $0x1a0] sm:$0xff] %vm2486, %v2458
      %2514 = vst.msk [vmem:[%s391 + $0x1a8] sm:$0xff] %vm2486, %v2463
      %2515 = vst.msk [vmem:[%s391 + $0x1c0] sm:$0xff] %vm2486, %v2468
      %2516 = vst.msk [vmem:[%s391 + $0x1c8] sm:$0xff] %vm2486, %v2473
      %2517 = vst.msk [vmem:[%s391 + $0x1e0] sm:$0xff] %vm2486, %v2478
      %2518 = vst.msk [vmem:[%s391 + $0x1e8] sm:$0xff] %vm2486, %v2483
      %v2519 = vld [vmem:[#allocation3] sm:$0xff]
      %v2520 = vld [vmem:[#allocation3 + $0x8] sm:$0xff]
      %v2521 = vld [vmem:[#allocation3 + $0x10] sm:$0xff]
      %v2522 = vld [vmem:[#allocation3 + $0x18] sm:$0xff]
      %v2523 = vld [vmem:[#allocation3 + $0x20] sm:$0xff]
      %v2524 = vld [vmem:[#allocation3 + $0x28] sm:$0xff]
      %v2525 = vld [vmem:[#allocation3 + $0x30] sm:$0xff]
      %v2526 = vld [vmem:[#allocation3 + $0x38] sm:$0xff]
      %v2527 = vld [vmem:[#allocation3 + $0x40] sm:$0xff]
      %v2528 = vld [vmem:[#allocation3 + $0x48] sm:$0xff]
      %v2529 = vld [vmem:[#allocation3 + $0x50] sm:$0xff]
      %v2530 = vld [vmem:[#allocation3 + $0x58] sm:$0xff]
      %v2531 = vld [vmem:[#allocation3 + $0x60] sm:$0xff]
      %v2532 = vld [vmem:[#allocation3 + $0x68] sm:$0xff]
      %v2533 = vld [vmem:[#allocation3 + $0x70] sm:$0xff]
      %v2534 = vld [vmem:[#allocation3 + $0x78] sm:$0xff]
      %v2535 = vld [vmem:[#allocation3 + $0x80] sm:$0xff]
      %v2536 = vld [vmem:[#allocation3 + $0x88] sm:$0xff]
      %v2537 = vld [vmem:[#allocation3 + $0x90] sm:$0xff]
      %v2538 = vld [vmem:[#allocation3 + $0x98] sm:$0xff]
      %v2539 = vld [vmem:[#allocation3 + $0xa0] sm:$0xff]
      %v2540 = vld [vmem:[#allocation3 + $0xa8] sm:$0xff]
      %v2541 = vld [vmem:[#allocation3 + $0xb0] sm:$0xff]
      %v2542 = vld [vmem:[#allocation3 + $0xb8] sm:$0xff]
      %v2543 = vld [vmem:[#allocation3 + $0xc0] sm:$0xff]
      %v2544 = vld [vmem:[#allocation3 + $0xc8] sm:$0xff]
      %v2545 = vld [vmem:[#allocation3 + $0xd0] sm:$0xff]
      %v2546 = vld [vmem:[#allocation3 + $0xd8] sm:$0xff]
      %v2547 = vld [vmem:[#allocation3 + $0xe0] sm:$0xff]
      %v2548 = vld [vmem:[#allocation3 + $0xe8] sm:$0xff]
      %v2549 = vld [vmem:[#allocation3 + $0xf0] sm:$0xff]
      %v2550 = vld [vmem:[#allocation3 + $0xf8] sm:$0xff]
      %s2551 = scalar_lea.vmem %s3, 24
      %v2552 = vld [vmem:[%s2551] sm:$0xff]
      %v2553 = vld [vmem:[%s2551 + $0x8] sm:$0xff]
      %v2554 = vld [vmem:[%s2551 + $0x10] sm:$0xff]
      %2587 = vrot.lane.b32.xlu0 %v2519, 116
      %v2588 = vpop.permute.xlu0 %2587
      %2589 = vrot.lane.b32.xlu0 %v2520, 116
      %v2590 = vpop.permute.xlu0 %2589
      %2591 = vrot.lane.b32.xlu0 %v2521, 116
      %v2592 = vpop.permute.xlu0 %2591
      %2593 = vrot.lane.b32.xlu0 %v2522, 116
      %v2594 = vpop.permute.xlu0 %2593
      %2595 = vrot.lane.b32.xlu0 %v2523, 116
      %v2596 = vpop.permute.xlu0 %2595
      %2597 = vrot.lane.b32.xlu0 %v2524, 116
      %v2598 = vpop.permute.xlu0 %2597
      %2599 = vrot.lane.b32.xlu0 %v2525, 116
      %v2600 = vpop.permute.xlu0 %2599
      %2601 = vrot.lane.b32.xlu0 %v2526, 116
      %v2602 = vpop.permute.xlu0 %2601
      %2603 = vrot.lane.b32.xlu0 %v2527, 116
      %v2604 = vpop.permute.xlu0 %2603
      %2605 = vrot.lane.b32.xlu0 %v2528, 116
      %v2606 = vpop.permute.xlu0 %2605
      %2607 = vrot.lane.b32.xlu0 %v2529, 116
      %v2608 = vpop.permute.xlu0 %2607
      %2609 = vrot.lane.b32.xlu0 %v2530, 116
      %v2610 = vpop.permute.xlu0 %2609
      %2611 = vrot.lane.b32.xlu0 %v2531, 116
      %v2612 = vpop.permute.xlu0 %2611
      %2613 = vrot.lane.b32.xlu0 %v2532, 116
      %v2614 = vpop.permute.xlu0 %2613
      %2615 = vrot.lane.b32.xlu0 %v2533, 116
      %v2616 = vpop.permute.xlu0 %2615
      %2617 = vrot.lane.b32.xlu0 %v2534, 116
      %v2618 = vpop.permute.xlu0 %2617
      %2619 = vrot.lane.b32.xlu0 %v2535, 116
      %v2620 = vpop.permute.xlu0 %2619
      %2621 = vrot.lane.b32.xlu0 %v2536, 116
      %v2622 = vpop.permute.xlu0 %2621
      %2623 = vrot.lane.b32.xlu0 %v2537, 116
      %v2624 = vpop.permute.xlu0 %2623
      %2625 = vrot.lane.b32.xlu0 %v2538, 116
      %v2626 = vpop.permute.xlu0 %2625
      %2627 = vrot.lane.b32.xlu0 %v2539, 116
      %v2628 = vpop.permute.xlu0 %2627
      %2629 = vrot.lane.b32.xlu0 %v2540, 116
      %v2630 = vpop.permute.xlu0 %2629
      %2631 = vrot.lane.b32.xlu0 %v2541, 116
      %v2632 = vpop.permute.xlu0 %2631
      %2633 = vrot.lane.b32.xlu0 %v2542, 116
      %v2634 = vpop.permute.xlu0 %2633
      %2635 = vrot.lane.b32.xlu0 %v2543, 116
      %v2636 = vpop.permute.xlu0 %2635
      %2637 = vrot.lane.b32.xlu0 %v2544, 116
      %v2638 = vpop.permute.xlu0 %2637
      %2639 = vrot.lane.b32.xlu0 %v2545, 116
      %v2640 = vpop.permute.xlu0 %2639
      %2641 = vrot.lane.b32.xlu0 %v2546, 116
      %v2642 = vpop.permute.xlu0 %2641
      %2643 = vrot.lane.b32.xlu0 %v2547, 116
      %v2644 = vpop.permute.xlu0 %2643
      %2645 = vrot.lane.b32.xlu0 %v2548, 116
      %v2646 = vpop.permute.xlu0 %2645
      %2647 = vrot.lane.b32.xlu0 %v2549, 116
      %v2648 = vpop.permute.xlu0 %2647
      %2649 = vrot.lane.b32.xlu0 %v2550, 116
      %v2650 = vpop.permute.xlu0 %2649
      %v2651 = vsel %vm2164, %v2588, 0
      %v2653 = vsel %vm2164, %v2590, 0
      %v2655 = vsel %vm2164, %v2592, 0
      %v2657 = vsel %vm2164, %v2594, 0
      %v2659 = vsel %vm2164, %v2596, 0
      %v2661 = vsel %vm2164, %v2598, 0
      %v2663 = vsel %vm2164, %v2600, 0
      %v2665 = vsel %vm2164, %v2602, 0
      %v2667 = vsel %vm2164, %v2604, 0
      %v2669 = vsel %vm2164, %v2606, 0
      %v2671 = vsel %vm2164, %v2608, 0
      %v2673 = vsel %vm2164, %v2610, 0
      %v2675 = vsel %vm2164, %v2612, 0
      %v2677 = vsel %vm2164, %v2614, 0
      %v2679 = vsel %vm2164, %v2616, 0
      %v2681 = vsel %vm2164, %v2618, 0
      %v2683 = vsel %vm2164, %v2620, 0
      %v2685 = vsel %vm2164, %v2622, 0
      %v2687 = vsel %vm2164, %v2624, 0
      %v2689 = vsel %vm2164, %v2626, 0
      %v2691 = vsel %vm2164, %v2628, 0
      %v2693 = vsel %vm2164, %v2630, 0
      %v2695 = vsel %vm2164, %v2632, 0
      %v2697 = vsel %vm2164, %v2634, 0
      %v2699 = vsel %vm2164, %v2636, 0
      %v2701 = vsel %vm2164, %v2638, 0
      %v2703 = vsel %vm2164, %v2640, 0
      %v2705 = vsel %vm2164, %v2642, 0
      %v2707 = vsel %vm2164, %v2644, 0
      %v2709 = vsel %vm2164, %v2646, 0
      %v2711 = vsel %vm2164, %v2648, 0
      %v2713 = vsel %vm2164, %v2650, 0
      %2715 = vmatprep.subr.mxu0 0.0
      %2716 = vmatpush1.msra.mxu0 %v2552
      %2717 = vmatprep.subr.mxu0 0.0
      %2718 = vmatpush1.msra.mxu0 %v2553
      %2719 = vmatprep.subr.mxu0 0.0
      %2720 = vmatpush1.msra.mxu0 %v2554
      %2721 = vmatprep.subr.mxu0 0.0
      %2722 = vmatpush1.msra.mxu0 0.0
      %2723 = vmatprep.subr.mxu0 0.0
      %2724 = vmatpush1.msra.mxu0 0.0
      %2725 = vmatprep.subr.mxu0 0.0
      %2726 = vmatpush1.msra.mxu0 0.0
      %2727 = vmatprep.subr.mxu0 0.0
      %2728 = vmatpush1.msra.mxu0 0.0
      %2729 = vmatprep.subr.mxu0 0.0
      %2730 = vmatpush1.msra.mxu0 0.0
      %2731 = vmatprep.subr.mxu0 0.0
      %2732 = vmatpush1.msra.mxu0 0.0
      %2733 = vmatprep.subr.mxu0 0.0
      %2734 = vmatpush1.msra.mxu0 0.0
      %2735 = vmatprep.subr.mxu0 0.0
      %2736 = vmatpush1.msra.mxu0 0.0
      %2737 = vmatprep.subr.mxu0 0.0
      %2738 = vmatpush1.msra.mxu0 0.0
      %2739 = vmatprep.subr.mxu0 0.0
      %2740 = vmatpush1.msra.mxu0 0.0
      %2741 = vmatprep.subr.mxu0 0.0
      %2742 = vmatpush1.msra.mxu0 0.0
      %2743 = vmatprep.subr.mxu0 0.0
      %2744 = vmatpush1.msra.mxu0 0.0
      %2745 = vmatprep.subr.mxu0 0.0
      %2746 = vmatpush1.msra.mxu0 0.0
      %2747 = vmatprep.subr.mxu0 0.0
      %2748 = vmatpush1.msra.mxu0 0.0
      %2749 = vmatprep.subr.mxu0 0.0
      %2750 = vmatpush1.msra.mxu0 0.0
      %2751 = vmatprep.subr.mxu0 0.0
      %2752 = vmatpush1.msra.mxu0 0.0
      %2753 = vmatprep.subr.mxu0 0.0
      %2754 = vmatpush1.msra.mxu0 0.0
      %2755 = vmatprep.subr.mxu0 0.0
      %2756 = vmatpush1.msra.mxu0 0.0
      %2757 = vmatprep.subr.mxu0 0.0
      %2758 = vmatpush1.msra.mxu0 0.0
      %2759 = vmatprep.subr.mxu0 0.0
      %2760 = vmatpush1.msra.mxu0 0.0
      %2761 = vmatprep.subr.mxu0 0.0
      %2762 = vmatpush1.msra.mxu0 0.0
      %2763 = vmatprep.subr.mxu0 0.0
      %2764 = vmatpush1.msra.mxu0 0.0
      %2765 = vmatprep.subr.mxu0 0.0
      %2766 = vmatpush1.msra.mxu0 0.0
      %2767 = vmatprep.subr.mxu0 0.0
      %2768 = vmatpush1.msra.mxu0 0.0
      %2769 = vmatprep.subr.mxu0 0.0
      %2770 = vmatpush1.msra.mxu0 0.0
      %2771 = vmatprep.subr.mxu0 0.0
      %2772 = vmatpush1.msra.mxu0 0.0
      %2773 = vmatprep.subr.mxu0 0.0
      %2774 = vmatpush1.msra.mxu0 0.0
      %2775 = vmatprep.subr.mxu0 0.0
      %2776 = vmatpush1.msra.mxu0 0.0
      %2777 = vmatprep.subr.mxu0 0.0
      %2778 = vmatpush1.msra.mxu0 0.0
      %2779 = vmatprep.mubr.f32.mxu0 0.0
      %2780 = vmatmul.mubr.f32.gmra.mrb[0].mxu0 %v2651
      %v2781 = vpop.f32.mrb[0].mxu0
      %v2782 = vadd.f32 %v2162, %v2781
      %v2783 = vpop.f32.mrb[0].mxu0
      %2784 = vmatprep.mubr.f32.mxu0 0.0
      %2785 = vmatmul.mubr.f32.gmra.mrb[0].mxu0 %v2653
      %v2786 = vpop.f32.mrb[0].mxu0
      %v2787 = vadd.f32 %v2162, %v2786
      %v2788 = vpop.f32.mrb[0].mxu0
      %2789 = vmatprep.mubr.f32.mxu0 0.0
      %2790 = vmatmul.mubr.f32.gmra.mrb[0].mxu0 %v2655
      %v2791 = vpop.f32.mrb[0].mxu0
      %v2792 = vadd.f32 %v2162, %v2791
      %v2793 = vpop.f32.mrb[0].mxu0
      %2794 = vmatprep.mubr.f32.mxu0 0.0
      %2795 = vmatmul.mubr.f32.gmra.mrb[0].mxu0 %v2657
      %v2796 = vpop.f32.mrb[0].mxu0
      %v2797 = vadd.f32 %v2162, %v2796
      %v2798 = vpop.f32.mrb[0].mxu0
      %2799 = vmatprep.mubr.f32.mxu0 0.0
      %2800 = vmatmul.mubr.f32.gmra.mrb[0].mxu0 %v2659
      %v2801 = vpop.f32.mrb[0].mxu0
      %v2802 = vadd.f32 %v2162, %v2801
      %v2803 = vpop.f32.mrb[0].mxu0
      %2804 = vmatprep.mubr.f32.mxu0 0.0
      %2805 = vmatmul.mubr.f32.gmra.mrb[0].mxu0 %v2661
      %v2806 = vpop.f32.mrb[0].mxu0
      %v2807 = vadd.f32 %v2162, %v2806
      %v2808 = vpop.f32.mrb[0].mxu0
      %2809 = vmatprep.mubr.f32.mxu0 0.0
      %2810 = vmatmul.mubr.f32.gmra.mrb[0].mxu0 %v2663
      %v2811 = vpop.f32.mrb[0].mxu0
      %v2812 = vadd.f32 %v2162, %v2811
      %v2813 = vpop.f32.mrb[0].mxu0
      %2814 = vmatprep.mubr.f32.mxu0 0.0
      %2815 = vmatmul.mubr.f32.gmra.mrb[0].mxu0 %v2665
      %v2816 = vpop.f32.mrb[0].mxu0
      %v2817 = vadd.f32 %v2162, %v2816
      %v2818 = vpop.f32.mrb[0].mxu0
      %2819 = vmatprep.mubr.f32.mxu0 0.0
      %2820 = vmatmul.mubr.f32.gmra.mrb[0].mxu0 %v2667
      %v2821 = vpop.f32.mrb[0].mxu0
      %v2822 = vadd.f32 %v2162, %v2821
      %v2823 = vpop.f32.mrb[0].mxu0
      %2824 = vmatprep.mubr.f32.mxu0 0.0
      %2825 = vmatmul.mubr.f32.gmra.mrb[0].mxu0 %v2669
      %v2826 = vpop.f32.mrb[0].mxu0
      %v2827 = vadd.f32 %v2162, %v2826
      %v2828 = vpop.f32.mrb[0].mxu0
      %2829 = vmatprep.mubr.f32.mxu0 0.0
      %2830 = vmatmul.mubr.f32.gmra.mrb[0].mxu0 %v2671
      %v2831 = vpop.f32.mrb[0].mxu0
      %v2832 = vadd.f32 %v2162, %v2831
      %v2833 = vpop.f32.mrb[0].mxu0
      %2834 = vmatprep.mubr.f32.mxu0 0.0
      %2835 = vmatmul.mubr.f32.gmra.mrb[0].mxu0 %v2673
      %v2836 = vpop.f32.mrb[0].mxu0
      %v2837 = vadd.f32 %v2162, %v2836
      %v2838 = vpop.f32.mrb[0].mxu0
      %2839 = vmatprep.mubr.f32.mxu0 0.0
      %2840 = vmatmul.mubr.f32.gmra.mrb[0].mxu0 %v2675
      %v2841 = vpop.f32.mrb[0].mxu0
      %v2842 = vadd.f32 %v2162, %v2841
      %v2843 = vpop.f32.mrb[0].mxu0
      %2844 = vmatprep.mubr.f32.mxu0 0.0
      %2845 = vmatmul.mubr.f32.gmra.mrb[0].mxu0 %v2677
      %v2846 = vpop.f32.mrb[0].mxu0
      %v2847 = vadd.f32 %v2162, %v2846
      %v2848 = vpop.f32.mrb[0].mxu0
      %2849 = vmatprep.mubr.f32.mxu0 0.0
      %2850 = vmatmul.mubr.f32.gmra.mrb[0].mxu0 %v2679
      %v2851 = vpop.f32.mrb[0].mxu0
      %v2852 = vadd.f32 %v2162, %v2851
      %v2853 = vpop.f32.mrb[0].mxu0
      %2854 = vmatprep.mubr.f32.mxu0 0.0
      %2855 = vmatmul.mubr.f32.gmra.mrb[0].mxu0 %v2681
      %v2856 = vpop.f32.mrb[0].mxu0
      %v2857 = vadd.f32 %v2162, %v2856
      %v2858 = vpop.f32.mrb[0].mxu0
      %2859 = vmatprep.mubr.f32.mxu0 0.0
      %2860 = vmatmul.mubr.f32.gmra.mrb[0].mxu0 %v2683
      %v2861 = vpop.f32.mrb[0].mxu0
      %v2862 = vadd.f32 %v2162, %v2861
      %v2863 = vpop.f32.mrb[0].mxu0
      %2864 = vmatprep.mubr.f32.mxu0 0.0
      %2865 = vmatmul.mubr.f32.gmra.mrb[0].mxu0 %v2685
      %v2866 = vpop.f32.mrb[0].mxu0
      %v2867 = vadd.f32 %v2162, %v2866
      %v2868 = vpop.f32.mrb[0].mxu0
      %2869 = vmatprep.mubr.f32.mxu0 0.0
      %2870 = vmatmul.mubr.f32.gmra.mrb[0].mxu0 %v2687
      %v2871 = vpop.f32.mrb[0].mxu0
      %v2872 = vadd.f32 %v2162, %v2871
      %v2873 = vpop.f32.mrb[0].mxu0
      %2874 = vmatprep.mubr.f32.mxu0 0.0
      %2875 = vmatmul.mubr.f32.gmra.mrb[0].mxu0 %v2689
      %v2876 = vpop.f32.mrb[0].mxu0
      %v2877 = vadd.f32 %v2162, %v2876
      %v2878 = vpop.f32.mrb[0].mxu0
      %2879 = vmatprep.mubr.f32.mxu0 0.0
      %2880 = vmatmul.mubr.f32.gmra.mrb[0].mxu0 %v2691
      %v2881 = vpop.f32.mrb[0].mxu0
      %v2882 = vadd.f32 %v2162, %v2881
      %v2883 = vpop.f32.mrb[0].mxu0
      %2884 = vmatprep.mubr.f32.mxu0 0.0
      %2885 = vmatmul.mubr.f32.gmra.mrb[0].mxu0 %v2693
      %v2886 = vpop.f32.mrb[0].mxu0
      %v2887 = vadd.f32 %v2162, %v2886
      %v2888 = vpop.f32.mrb[0].mxu0
      %2889 = vmatprep.mubr.f32.mxu0 0.0
      %2890 = vmatmul.mubr.f32.gmra.mrb[0].mxu0 %v2695
      %v2891 = vpop.f32.mrb[0].mxu0
      %v2892 = vadd.f32 %v2162, %v2891
      %v2893 = vpop.f32.mrb[0].mxu0
      %2894 = vmatprep.mubr.f32.mxu0 0.0
      %2895 = vmatmul.mubr.f32.gmra.mrb[0].mxu0 %v2697
      %v2896 = vpop.f32.mrb[0].mxu0
      %v2897 = vadd.f32 %v2162, %v2896
      %v2898 = vpop.f32.mrb[0].mxu0
      %2899 = vmatprep.mubr.f32.mxu0 0.0
      %2900 = vmatmul.mubr.f32.gmra.mrb[0].mxu0 %v2699
      %v2901 = vpop.f32.mrb[0].mxu0
      %v2902 = vadd.f32 %v2162, %v2901
      %v2903 = vpop.f32.mrb[0].mxu0
      %2904 = vmatprep.mubr.f32.mxu0 0.0
      %2905 = vmatmul.mubr.f32.gmra.mrb[0].mxu0 %v2701
      %v2906 = vpop.f32.mrb[0].mxu0
      %v2907 = vadd.f32 %v2162, %v2906
      %v2908 = vpop.f32.mrb[0].mxu0
      %2909 = vmatprep.mubr.f32.mxu0 0.0
      %2910 = vmatmul.mubr.f32.gmra.mrb[0].mxu0 %v2703
      %v2911 = vpop.f32.mrb[0].mxu0
      %v2912 = vadd.f32 %v2162, %v2911
      %v2913 = vpop.f32.mrb[0].mxu0
      %2914 = vmatprep.mubr.f32.mxu0 0.0
      %2915 = vmatmul.mubr.f32.gmra.mrb[0].mxu0 %v2705
      %v2916 = vpop.f32.mrb[0].mxu0
      %v2917 = vadd.f32 %v2162, %v2916
      %v2918 = vpop.f32.mrb[0].mxu0
      %2919 = vmatprep.mubr.f32.mxu0 0.0
      %2920 = vmatmul.mubr.f32.gmra.mrb[0].mxu0 %v2707
      %v2921 = vpop.f32.mrb[0].mxu0
      %v2922 = vadd.f32 %v2162, %v2921
      %v2923 = vpop.f32.mrb[0].mxu0
      %2924 = vmatprep.mubr.f32.mxu0 0.0
      %2925 = vmatmul.mubr.f32.gmra.mrb[0].mxu0 %v2709
      %v2926 = vpop.f32.mrb[0].mxu0
      %v2927 = vadd.f32 %v2162, %v2926
      %v2928 = vpop.f32.mrb[0].mxu0
      %2929 = vmatprep.mubr.f32.mxu0 0.0
      %2930 = vmatmul.mubr.f32.gmra.mrb[0].mxu0 %v2711
      %v2931 = vpop.f32.mrb[0].mxu0
      %v2932 = vadd.f32 %v2162, %v2931
      %v2933 = vpop.f32.mrb[0].mxu0
      %2934 = vmatprep.mubr.f32.mxu0 0.0
      %2935 = vmatmul.mubr.f32.gmra.mrb[0].mxu0 %v2713
      %v2936 = vpop.f32.mrb[0].mxu0
      %v2937 = vadd.f32 %v2162, %v2936
      %v2938 = vpop.f32.mrb[0].mxu0
      %2939 = vdwg.mxu0
      %s2940 = scalar_lea.vmem %s391, 16
      %2941 = vst.msk [vmem:[%s2940] sm:$0xff] %vm2486, %v2782
      %2942 = vst.msk [vmem:[%s2940 + $0x8] sm:$0xff] %vm2486, %v2787
      %2943 = vst.msk [vmem:[%s2940 + $0x20] sm:$0xff] %vm2486, %v2792
      %2944 = vst.msk [vmem:[%s2940 + $0x28] sm:$0xff] %vm2486, %v2797
      %2945 = vst.msk [vmem:[%s2940 + $0x40] sm:$0xff] %vm2486, %v2802
      %2946 = vst.msk [vmem:[%s2940 + $0x48] sm:$0xff] %vm2486, %v2807
      %2947 = vst.msk [vmem:[%s2940 + $0x60] sm:$0xff] %vm2486, %v2812
      %2948 = vst.msk [vmem:[%s2940 + $0x68] sm:$0xff] %vm2486, %v2817
      %2949 = vst.msk [vmem:[%s2940 + $0x80] sm:$0xff] %vm2486, %v2822
      %2950 = vst.msk [vmem:[%s2940 + $0x88] sm:$0xff] %vm2486, %v2827
      %2951 = vst.msk [vmem:[%s2940 + $0xa0] sm:$0xff] %vm2486, %v2832
      %2952 = vst.msk [vmem:[%s2940 + $0xa8] sm:$0xff] %vm2486, %v2837
      %2953 = vst.msk [vmem:[%s2940 + $0xc0] sm:$0xff] %vm2486, %v2842
      %2954 = vst.msk [vmem:[%s2940 + $0xc8] sm:$0xff] %vm2486, %v2847
      %2955 = vst.msk [vmem:[%s2940 + $0xe0] sm:$0xff] %vm2486, %v2852
      %2956 = vst.msk [vmem:[%s2940 + $0xe8] sm:$0xff] %vm2486, %v2857
      %2957 = vst.msk [vmem:[%s2940 + $0x100] sm:$0xff] %vm2486, %v2862
      %2958 = vst.msk [vmem:[%s2940 + $0x108] sm:$0xff] %vm2486, %v2867
      %2959 = vst.msk [vmem:[%s2940 + $0x120] sm:$0xff] %vm2486, %v2872
      %2960 = vst.msk [vmem:[%s2940 + $0x128] sm:$0xff] %vm2486, %v2877
      %2961 = vst.msk [vmem:[%s2940 + $0x140] sm:$0xff] %vm2486, %v2882
      %2962 = vst.msk [vmem:[%s2940 + $0x148] sm:$0xff] %vm2486, %v2887
      %2963 = vst.msk [vmem:[%s2940 + $0x160] sm:$0xff] %vm2486, %v2892
      %2964 = vst.msk [vmem:[%s2940 + $0x168] sm:$0xff] %vm2486, %v2897
      %2965 = vst.msk [vmem:[%s2940 + $0x180] sm:$0xff] %vm2486, %v2902
      %2966 = vst.msk [vmem:[%s2940 + $0x188] sm:$0xff] %vm2486, %v2907
      %2967 = vst.msk [vmem:[%s2940 + $0x1a0] sm:$0xff] %vm2486, %v2912
      %2968 = vst.msk [vmem:[%s2940 + $0x1a8] sm:$0xff] %vm2486, %v2917
      %2969 = vst.msk [vmem:[%s2940 + $0x1c0] sm:$0xff] %vm2486, %v2922
      %2970 = vst.msk [vmem:[%s2940 + $0x1c8] sm:$0xff] %vm2486, %v2927
      %2971 = vst.msk [vmem:[%s2940 + $0x1e0] sm:$0xff] %vm2486, %v2932
      %2972 = vst.msk [vmem:[%s2940 + $0x1e8] sm:$0xff] %vm2486, %v2937
      %s2973 = smul.u32 16, %s21
      %p2974 = scmp.lt.s32.totalorder %s20, 1
      %s2975 = scalar_select %p2974, %s20, 1
      %p2976 = scmp.lt.s32.totalorder %s2973, 15
      %s2977 = scalar_select %p2976, %s2973, 15
      %s2978 = smul.addr %s2977, 4
      %s2979 = smul.addr %s2975, 64
      %s2980 = sadd.s32 %s2978, %s2979
      %s2981 = smul.addr %s2980, 8
      %s2982 = scalar_lea.vmem %s5, %s2981
      // Predicated region
      $region41: #{tpu_custom_call.1} parent=39 // pred_check
        %p2983 = pneg %p190
      $region42: #{tpu_custom_call.1} parent=39 // pred_check_branch
        %2985 = sbr.rel (%p2983) target = $region44
      $region43: #{tpu_custom_call.1} parent=39 // pred_region
        %s2986 = smul.u32 16, %s21
      $region44: #{tpu_custom_call.1} parent=39 // pred_fallthru
        _
    $region40: #{tpu_custom_call.1} parent=5 // pred_fallthru
      _
    %p2987 = scmp.le.s32.totalorder 2, %s11
    // Predicated region
    $region45: #{tpu_custom_call.1} parent=5 // pred_check
      %p2988 = pneg %p2987
    $region46: #{tpu_custom_call.1} parent=5 // pred_check_branch
      %2990 = sbr.rel (%p2988) target = $region48
    $region47: #{tpu_custom_call.1} parent=5 // pred_region
      %s2991 = ssub.s32 %s11, 2
      // Predicated region
      $region49: #{tpu_custom_call.1} parent=47 // pred_check
        %p2992 = pneg %p196
      $region50: #{tpu_custom_call.1} parent=47 // pred_check_branch
        %2994 = sbr.rel (%p2992) target = $region52
      $region51: #{tpu_custom_call.1} parent=47 // pred_region
        %s2995 = smul.u32 16, %s23
        %p2996 = scmp.lt.s32.totalorder %s22, 1
        %s2997 = scalar_select %p2996, %s22, 1
        %p2998 = scmp.lt.s32.totalorder %s2995, 15
        %s2999 = scalar_select %p2998, %s2995, 15
        %s3000 = smul.addr %s2999, 4
        %s3001 = smul.addr %s2997, 64
        %s3002 = sadd.s32 %s3000, %s3001
        %s3003 = smul.addr %s3002, 8
        %s3004 = scalar_lea.vmem %s5, %s3003
      $region52: #{tpu_custom_call.1} parent=47 // pred_fallthru
        _
    $region48: #{tpu_custom_call.1} parent=5 // pred_fallthru
      _
  $region6: #{tpu_custom_call.1} parent=0 // loop_footer
    %s15 = sadd.s32 1, %s11
  $region7: #{tpu_custom_call.1} parent=0 // loop_footer_branch
    %10 = sbr.rel target = $region3
  $region8: #{tpu_custom_call.1} parent=0 // loop_exit
    _

</llo_original>
